<compile_context>
chip_gen: v6e
topology: v6e:2x2x1
jax: 0.10.0
libtpu: 0.0.40
codegen_flags: <defaults>
</compile_context>

<pallas_src>
import functools

import jax
import jax.numpy as jnp
from jax.experimental import pallas as pl
from jax.experimental.pallas import tpu as pltpu

# ----------------------------- config (synthetic) -----------------------------
B = 2          # batch
T = 8          # sequence length (X.shape[1])
D_X = 24       # per-step feature dim of X
D_FLAT = 8     # feature dim of flat
D_IN = D_X + D_FLAT
D_MODEL = 32
N_HEADS = 4
D_HEAD = D_MODEL // N_HEADS
D_FF = 64
N_LAYERS = 2
LN_EPS = 1e-5
NEG_INF = -1e30


def _layer_norm(x, gamma, beta):
    # two-pass statistics (matches PyTorch LayerNorm numerics)
    mu = jnp.mean(x, axis=-1, keepdims=True)
    xc = x - mu
    var = jnp.mean(xc * xc, axis=-1, keepdims=True)
    return xc * jax.lax.rsqrt(var + LN_EPS) * gamma + beta


def _bmm_nt(a, b):
    # (g, m, k) x (g, n, k) -> (g, m, n)   ['bqd,bkd->bqk' pattern]
    return jax.lax.dot_general(a, b, (((2,), (2,)), ((0,), (0,))),
                               preferred_element_type=jnp.float32)


def _bmm_nn(a, b):
    # (g, m, k) x (g, k, n) -> (g, m, n)   ['bqk,bkd->bqd' pattern]
    return jax.lax.dot_general(a, b, (((2,), (1,)), ((0,), (0,))),
                               preferred_element_type=jnp.float32)


# ------------------------------- Pallas kernel --------------------------------
def transformer_kernel(x_ref, flat_ref, w_ref, out_ref, *, layout,
                       n_batch, seq_len, n_layers, n_heads, d_head, d_model):
    Bc, Tc, H, Dh, D = n_batch, seq_len, n_heads, d_head, d_model
    BT = Bc * Tc

    def W(name):
        # static, 8-row-aligned slice of the packed weight slab (zero-cost view)
        off, rows, cols = layout[name]
        return w_ref[off:off + rows, 0:cols]

    x2 = x_ref[...]          # (B*T, D_X)
    flat2 = flat_ref[...]    # (B, D_FLAT)

    # --- input projection with the flat-broadcast + concat folded in ---
    hx = jnp.dot(x2, W("wpx"), preferred_element_type=jnp.float32)      # (BT, D)
    hf = jnp.dot(flat2, W("wpf"), preferred_element_type=jnp.float32)   # (B, D)
    hf_rep = jnp.broadcast_to(hf[:, None, :], (Bc, Tc, D)).reshape(BT, D)
    h = hx + hf_rep + W("bp")                                           # (BT, D)

    mask = W("mask")                 # (BT, BT): 0 within a batch row, -1e30 across
    scale = 1.0 / float(Dh) ** 0.5

    for l in range(n_layers):
        # ---- fused head-major QKV over the whole (B*T) token block ----
        wqkvT = W(f"wqkvT{l}").reshape(3 * H, Dh, D)   # aligned leading split
        bqkv = W(f"bqkv{l}").reshape(3 * H, BT, Dh)    # pre-broadcast bias
        h_rep = jnp.broadcast_to(h[None], (3 * H, BT, D))
        qkv = _bmm_nt(h_rep, wqkvT) + bqkv             # (3H, BT, Dh)
        qh = qkv[0:H]                                  # (H, BT, Dh)
        kh = qkv[H:2 * H]
        vh = qkv[2 * H:3 * H]

        # ---- attention on all tokens at once; block-diag mask splits batches ----
        s = _bmm_nt(qh, kh) * scale + mask             # (H, BT, BT)
        s = s - jnp.max(s, axis=-1, keepdims=True)
        p = jnp.exp(s)
        p = p / jnp.sum(p, axis=-1, keepdims=True)     # exact softmax (parity)

        oh = _bmm_nn(p, vh)                            # (H, BT, Dh)
        wo_h = W(f"wo{l}").reshape(H, Dh, D)           # aligned leading split
        proj = _bmm_nn(oh, wo_h)                       # (H, BT, D)
        attn = jnp.sum(proj, axis=0) + W(f"bo{l}")     # (BT, D)
        h = _layer_norm(h + attn, W(f"ln1g{l}"), W(f"ln1b{l}"))

        # ---- position-wise FFN ----
        ff = jnp.dot(h, W(f"w1{l}"), preferred_element_type=jnp.float32) + W(f"b1{l}")
        ff = jnp.maximum(ff, 0.0)
        ff = jnp.dot(ff, W(f"w2{l}"), preferred_element_type=jnp.float32) + W(f"b2{l}")
        h = _layer_norm(h + ff, W(f"ln2g{l}"), W(f"ln2b{l}"))

    out_ref[...] = h                                   # (BT, D)


# ------------------------------ slab packing ----------------------------------
def pack_slab(entries):
    """Pack named 2D f32 arrays into one slab; each entry starts on an 8-row
    boundary.  Returns (slab, layout) with layout[name] = (row_off, rows, cols)
    as plain Python ints (usable for static in-kernel slicing)."""
    lane_w = max(int(a.shape[1]) for _, a in entries)
    layout, pieces, off = {}, [], 0
    for name, a in entries:
        a = jnp.asarray(a, jnp.float32)
        r, c = int(a.shape[0]), int(a.shape[1])
        a = jnp.pad(a, ((0, (-r) % 8), (0, lane_w - c)))
        layout[name] = (off, r, c)
        pieces.append(a)
        off += int(a.shape[0])
    return jnp.concatenate(pieces, axis=0), layout


# --------------------------------- wrapper -------------------------------------
def make_params(key):
    """Deterministic synthetic transformer parameters (standard layout)."""
    ks = jax.random.split(key, 18)
    n = lambda k, shape, scale: jax.random.normal(k, shape, jnp.float32) * scale
    L, D, F = N_LAYERS, D_MODEL, D_FF
    inv = lambda f: 1.0 / float(f) ** 0.5
    return dict(
        wp=n(ks[0], (D_IN, D), inv(D_IN)),        bp=n(ks[1], (1, D), 0.1),
        wq=n(ks[2], (L, D, D), inv(D)),           bq=n(ks[3], (L, 1, D), 0.1),
        wk=n(ks[4], (L, D, D), inv(D)),           bk=n(ks[5], (L, 1, D), 0.1),
        wv=n(ks[6], (L, D, D), inv(D)),           bv=n(ks[7], (L, 1, D), 0.1),
        wo=n(ks[8], (L, D, D), inv(D)),           bo=n(ks[9], (L, 1, D), 0.1),
        ln1g=1.0 + n(ks[10], (L, 1, D), 0.1),     ln1b=n(ks[11], (L, 1, D), 0.1),
        w1=n(ks[12], (L, D, F), inv(D)),          b1=n(ks[13], (L, 1, F), 0.1),
        w2=n(ks[14], (L, F, D), inv(F)),          b2=n(ks[15], (L, 1, D), 0.1),
        ln2g=1.0 + n(ks[16], (L, 1, D), 0.1),     ln2b=n(ks[17], (L, 1, D), 0.1),
    )


@jax.jit
def transformer_encoder(X, flat, params):
    Bc, Tc, d_x = X.shape
    d_flat = flat.shape[-1]
    L, D, H, Dh = N_LAYERS, D_MODEL, N_HEADS, D_HEAD
    BT = Bc * Tc

    # ---- host-side layout plumbing (mathematically identity) ----
    wp = params["wp"].astype(jnp.float32)
    # block-diagonal attention mask: tokens only attend within their own batch row
    bid = jnp.repeat(jnp.arange(Bc), Tc)
    mask = jnp.where(bid[:, None] == bid[None, :], 0.0, NEG_INF).astype(jnp.float32)

    entries = [
        ("mask", mask),
        ("wpf", wp[:d_flat]),          # rows multiplying flat (concat = [flat_rep, X])
        ("wpx", wp[d_flat:]),          # rows multiplying X
        ("bp", params["bp"]),
    ]
    for l in range(L):
        # transposed + head-major fused QKV weights: row (g*Dh + dh) -> W[:, g*Dh+dh]
        wqkvT = jnp.concatenate([params["wq"][l].T,
                                 params["wk"][l].T,
                                 params["wv"][l].T], axis=0)             # (3H*Dh, D)
        bqkv_hm = jnp.concatenate([params["bq"][l].reshape(H, 1, Dh),
                                   params["bk"][l].reshape(H, 1, Dh),
                                   params["bv"][l].reshape(H, 1, Dh)], axis=0)
        bqkv_bt = jnp.broadcast_to(bqkv_hm, (3 * H, BT, Dh)).reshape(3 * H * BT, Dh)
        entries += [
            (f"wqkvT{l}", wqkvT),
            (f"bqkv{l}", bqkv_bt),
            (f"wo{l}", params["wo"][l]),
            (f"bo{l}", params["bo"][l]),
            (f"ln1g{l}", params["ln1g"][l]), (f"ln1b{l}", params["ln1b"][l]),
            (f"w1{l}", params["w1"][l]),     (f"b1{l}", params["b1"][l]),
            (f"w2{l}", params["w2"][l]),     (f"b2{l}", params["b2"][l]),
            (f"ln2g{l}", params["ln2g"][l]), (f"ln2b{l}", params["ln2b"][l]),
        ]
    wslab, layout = pack_slab(entries)

    x2 = X.astype(jnp.float32).reshape(BT, d_x)          # (B*T, D_X)
    flat2 = flat.astype(jnp.float32).reshape(Bc, d_flat)  # (B, D_FLAT)

    kernel = functools.partial(
        transformer_kernel, layout=layout, n_batch=Bc, seq_len=Tc,
        n_layers=L, n_heads=H, d_head=Dh, d_model=D)

    out = pl.pallas_call(
        kernel,
        out_shape=jax.ShapeDtypeStruct((BT, D), jnp.float32),
        in_specs=[pl.BlockSpec(memory_space=pltpu.MemorySpace.VMEM)] * 3,
        out_specs=pl.BlockSpec(memory_space=pltpu.MemorySpace.VMEM),
    )(x2, flat2, wslab)
    return out.reshape(Bc, Tc, D)


# ------------------------- pure-JAX reference (for check) ----------------------
def transformer_reference(X, flat, params):
    Bc, Tc, _ = X.shape
    L, D, H, Dh = N_LAYERS, D_MODEL, N_HEADS, D_HEAD
    flat_rep = jnp.broadcast_to(flat, (Bc, Tc, flat.shape[-1]))
    xin = jnp.concatenate([flat_rep, X], axis=-1)
    h = xin @ params["wp"] + params["bp"]
    scale = 1.0 / float(Dh) ** 0.5

    def ln(x, g, b):
        mu = jnp.mean(x, -1, keepdims=True)
        var = jnp.mean((x - mu) ** 2, -1, keepdims=True)
        return (x - mu) / jnp.sqrt(var + LN_EPS) * g + b

    for l in range(L):
        q = h @ params["wq"][l] + params["bq"][l]
        k = h @ params["wk"][l] + params["bk"][l]
        v = h @ params["wv"][l] + params["bv"][l]
        qh = q.reshape(Bc, Tc, H, Dh).transpose(0, 2, 1, 3)
        kh = k.reshape(Bc, Tc, H, Dh).transpose(0, 2, 1, 3)
        vh = v.reshape(Bc, Tc, H, Dh).transpose(0, 2, 1, 3)
        s = jnp.einsum("bhqd,bhkd->bhqk", qh, kh) * scale
        p = jax.nn.softmax(s, axis=-1)
        o = jnp.einsum("bhqk,bhkd->bhqd", p, vh)
        o = o.transpose(0, 2, 1, 3).reshape(Bc, Tc, D)
        attn = o @ params["wo"][l] + params["bo"][l]
        h = ln(h + attn, params["ln1g"][l], params["ln1b"][l])
        ff = jnp.maximum(h @ params["w1"][l] + params["b1"][l], 0.0)
        ff = ff @ params["w2"][l] + params["b2"][l]
        h = ln(h + ff, params["ln2g"][l], params["ln2b"][l])
    return h


# ----------------------------------- main ---------------------------------------
if __name__ == "__main__":
    key = jax.random.PRNGKey(0)
    kx, kf = jax.random.split(key)
    X = jax.random.normal(kx, (B, T, D_X), jnp.float32)        # (2, 8, 24)
    flat = jax.random.normal(kf, (B, 1, D_FLAT), jnp.float32)  # (2, 1, 8)

    params = make_params(jax.random.PRNGKey(42))

    encoding = transformer_encoder(X, flat, params)
    jax.block_until_ready(encoding)
    assert encoding.shape == (B, T, D_MODEL)
    assert bool(jnp.all(jnp.isfinite(encoding)))

    ref = transformer_reference(X, flat, params)
    assert bool(jnp.allclose(encoding, ref, rtol=2e-2, atol=2e-2)), \
        float(jnp.max(jnp.abs(encoding - ref)))
    print("KERNEL_OK")
</pallas_src>

<mosaic_0001>
module attributes {stable_mosaic.version = 11 : i64} {
  func.func @transformer_kernel(%arg0: memref<16x24xf32, #tpu.memory_space<vmem>>, %arg1: memref<2x8xf32, #tpu.memory_space<vmem>>, %arg2: memref<1000x64xf32, #tpu.memory_space<vmem>>, %arg3: memref<16x32xf32, #tpu.memory_space<vmem>>) attributes {dimension_semantics = [], scalar_prefetch = 0 : i64, scratch_operands = 0 : i64, tpu.core_type = #tpu.core_type<tc>} {
    %c0 = arith.constant 0 : index
    %c0_0 = arith.constant 0 : index
    %0 = vector.load %arg0[%c0, %c0_0] : memref<16x24xf32, #tpu.memory_space<vmem>>, vector<16x24xf32>
    %c0_1 = arith.constant 0 : index
    %c0_2 = arith.constant 0 : index
    %1 = vector.load %arg1[%c0_1, %c0_2] : memref<2x8xf32, #tpu.memory_space<vmem>>, vector<2x8xf32>
    %c24 = arith.constant 24 : index
    %c0_3 = arith.constant 0 : index
    %2 = vector.load %arg2[%c24, %c0_3] : memref<1000x64xf32, #tpu.memory_space<vmem>>, vector<24x32xf32>
    %cst = arith.constant dense<0.000000e+00> : vector<16x32xf32>
    %3 = tpu.matmul %0, %2, %cst {dimension_numbers = #tpu.dot_dimension_numbers<[1], [0], [0], [1], [0, 0, 1, 1], [], []>} : vector<16x24xf32>, vector<24x32xf32>, vector<16x32xf32> -> vector<16x32xf32>
    %c16 = arith.constant 16 : index
    %c0_4 = arith.constant 0 : index
    %4 = vector.load %arg2[%c16, %c0_4] : memref<1000x64xf32, #tpu.memory_space<vmem>>, vector<8x32xf32>
    %cst_5 = arith.constant dense<0.000000e+00> : vector<2x32xf32>
    %5 = tpu.matmul %1, %4, %cst_5 {dimension_numbers = #tpu.dot_dimension_numbers<[1], [0], [0], [1], [0, 0, 1, 1], [], []>} : vector<2x8xf32>, vector<8x32xf32>, vector<2x32xf32> -> vector<2x32xf32>
    %6 = vector.shape_cast %5 : vector<2x32xf32> to vector<2x1x32xf32>
    %7 = vector.shape_cast %6 : vector<2x1x32xf32> to vector<2x1x32xf32>
    %8 = vector.broadcast %7 : vector<2x1x32xf32> to vector<2x8x32xf32>
    %9 = vector.shape_cast %8 : vector<2x8x32xf32> to vector<16x32xf32>
    %10 = arith.addf %3, %9 : vector<16x32xf32>
    %c48 = arith.constant 48 : index
    %c0_6 = arith.constant 0 : index
    %11 = vector.load %arg2[%c48, %c0_6] : memref<1000x64xf32, #tpu.memory_space<vmem>>, vector<1x32xf32>
    %12 = vector.broadcast %11 : vector<1x32xf32> to vector<16x32xf32>
    %13 = arith.addf %10, %12 : vector<16x32xf32>
    %c0_7 = arith.constant 0 : index
    %c0_8 = arith.constant 0 : index
    %14 = vector.load %arg2[%c0_7, %c0_8] : memref<1000x64xf32, #tpu.memory_space<vmem>>, vector<16x16xf32>
    %c56 = arith.constant 56 : index
    %c0_9 = arith.constant 0 : index
    %15 = vector.load %arg2[%c56, %c0_9] : memref<1000x64xf32, #tpu.memory_space<vmem>>, vector<96x32xf32>
    %16 = vector.shape_cast %15 : vector<96x32xf32> to vector<12x8x32xf32>
    %c152 = arith.constant 152 : index
    %c0_10 = arith.constant 0 : index
    %17 = vector.load %arg2[%c152, %c0_10] : memref<1000x64xf32, #tpu.memory_space<vmem>>, vector<192x8xf32>
    %18 = vector.shape_cast %17 : vector<192x8xf32> to vector<12x16x8xf32>
    %19 = vector.shape_cast %13 : vector<16x32xf32> to vector<1x16x32xf32>
    %20 = vector.shape_cast %19 : vector<1x16x32xf32> to vector<1x16x32xf32>
    %21 = vector.broadcast %20 : vector<1x16x32xf32> to vector<12x16x32xf32>
    %cst_11 = arith.constant dense<0.000000e+00> : vector<12x16x8xf32>
    %22 = tpu.matmul %21, %16, %cst_11 {dimension_numbers = #tpu.dot_dimension_numbers<[2], [2], [1], [1], [0, 0, 0, 1, 1, 1], [0], [0]>} : vector<12x16x32xf32>, vector<12x8x32xf32>, vector<12x16x8xf32> -> vector<12x16x8xf32>
    %23 = arith.addf %22, %18 : vector<12x16x8xf32>
    %24 = vector.extract_strided_slice %23 {offsets = [0, 0, 0], sizes = [4, 16, 8], strides = [1, 1, 1]} : vector<12x16x8xf32> to vector<4x16x8xf32>
    %25 = vector.extract_strided_slice %23 {offsets = [4, 0, 0], sizes = [4, 16, 8], strides = [1, 1, 1]} : vector<12x16x8xf32> to vector<4x16x8xf32>
    %26 = vector.extract_strided_slice %23 {offsets = [8, 0, 0], sizes = [4, 16, 8], strides = [1, 1, 1]} : vector<12x16x8xf32> to vector<4x16x8xf32>
    %cst_12 = arith.constant dense<0.000000e+00> : vector<4x16x16xf32>
    %27 = tpu.matmul %24, %25, %cst_12 {dimension_numbers = #tpu.dot_dimension_numbers<[2], [2], [1], [1], [0, 0, 0, 1, 1, 1], [0], [0]>} : vector<4x16x8xf32>, vector<4x16x8xf32>, vector<4x16x16xf32> -> vector<4x16x16xf32>
    %cst_13 = arith.constant 0.353553385 : f32
    %28 = vector.broadcast %cst_13 : f32 to vector<4x16x16xf32>
    %29 = arith.mulf %27, %28 : vector<4x16x16xf32>
    %30 = vector.shape_cast %14 : vector<16x16xf32> to vector<1x16x16xf32>
    %31 = vector.broadcast %30 : vector<1x16x16xf32> to vector<4x16x16xf32>
    %32 = arith.addf %29, %31 : vector<4x16x16xf32>
    %cst_14 = arith.constant dense<0xFF800000> : vector<4x16xf32>
    %33 = vector.multi_reduction <maximumf>, %32, %cst_14 [2] : vector<4x16x16xf32> to vector<4x16xf32>
    %34 = vector.shape_cast %33 : vector<4x16xf32> to vector<4x16x1xf32>
    %35 = vector.broadcast %34 : vector<4x16x1xf32> to vector<4x16x16xf32>
    %36 = arith.subf %32, %35 : vector<4x16x16xf32>
    %37 = math.exp %36 : vector<4x16x16xf32>
    %cst_15 = arith.constant dense<0.000000e+00> : vector<4x16xf32>
    %38 = vector.multi_reduction <add>, %37, %cst_15 [2] : vector<4x16x16xf32> to vector<4x16xf32>
    %39 = vector.shape_cast %38 : vector<4x16xf32> to vector<4x16x1xf32>
    %40 = vector.broadcast %39 : vector<4x16x1xf32> to vector<4x16x16xf32>
    %41 = arith.divf %37, %40 : vector<4x16x16xf32>
    %cst_16 = arith.constant dense<0.000000e+00> : vector<4x16x8xf32>
    %42 = tpu.matmul %41, %26, %cst_16 {dimension_numbers = #tpu.dot_dimension_numbers<[2], [1], [1], [2], [0, 0, 0, 1, 1, 2], [0], [0]>} : vector<4x16x16xf32>, vector<4x16x8xf32>, vector<4x16x8xf32> -> vector<4x16x8xf32>
    %c344 = arith.constant 344 : index
    %c0_17 = arith.constant 0 : index
    %43 = vector.load %arg2[%c344, %c0_17] : memref<1000x64xf32, #tpu.memory_space<vmem>>, vector<32x32xf32>
    %44 = vector.shape_cast %43 : vector<32x32xf32> to vector<4x8x32xf32>
    %cst_18 = arith.constant dense<0.000000e+00> : vector<4x16x32xf32>
    %45 = tpu.matmul %42, %44, %cst_18 {dimension_numbers = #tpu.dot_dimension_numbers<[2], [1], [1], [2], [0, 0, 0, 1, 1, 2], [0], [0]>} : vector<4x16x8xf32>, vector<4x8x32xf32>, vector<4x16x32xf32> -> vector<4x16x32xf32>
    %cst_19 = arith.constant dense<0.000000e+00> : vector<16x32xf32>
    %46 = vector.multi_reduction <add>, %45, %cst_19 [0] : vector<4x16x32xf32> to vector<16x32xf32>
    %c376 = arith.constant 376 : index
    %c0_20 = arith.constant 0 : index
    %47 = vector.load %arg2[%c376, %c0_20] : memref<1000x64xf32, #tpu.memory_space<vmem>>, vector<1x32xf32>
    %48 = vector.broadcast %47 : vector<1x32xf32> to vector<16x32xf32>
    %49 = arith.addf %46, %48 : vector<16x32xf32>
    %50 = arith.addf %13, %49 : vector<16x32xf32>
    %c384 = arith.constant 384 : index
    %c0_21 = arith.constant 0 : index
    %51 = vector.load %arg2[%c384, %c0_21] : memref<1000x64xf32, #tpu.memory_space<vmem>>, vector<1x32xf32>
    %c392 = arith.constant 392 : index
    %c0_22 = arith.constant 0 : index
    %52 = vector.load %arg2[%c392, %c0_22] : memref<1000x64xf32, #tpu.memory_space<vmem>>, vector<1x32xf32>
    %cst_23 = arith.constant dense<0.000000e+00> : vector<16xf32>
    %53 = vector.multi_reduction <add>, %50, %cst_23 [1] : vector<16x32xf32> to vector<16xf32>
    %54 = vector.shape_cast %53 : vector<16xf32> to vector<16x1xf32>
    %cst_24 = arith.constant 3.200000e+01 : f32
    %55 = vector.broadcast %cst_24 : f32 to vector<16x1xf32>
    %56 = arith.divf %54, %55 : vector<16x1xf32>
    %57 = vector.broadcast %56 : vector<16x1xf32> to vector<16x32xf32>
    %58 = arith.subf %50, %57 : vector<16x32xf32>
    %59 = arith.mulf %58, %58 : vector<16x32xf32>
    %cst_25 = arith.constant dense<0.000000e+00> : vector<16xf32>
    %60 = vector.multi_reduction <add>, %59, %cst_25 [1] : vector<16x32xf32> to vector<16xf32>
    %61 = vector.shape_cast %60 : vector<16xf32> to vector<16x1xf32>
    %cst_26 = arith.constant 3.200000e+01 : f32
    %62 = vector.broadcast %cst_26 : f32 to vector<16x1xf32>
    %63 = arith.divf %61, %62 : vector<16x1xf32>
    %cst_27 = arith.constant 9.99999974E-6 : f32
    %64 = vector.broadcast %cst_27 : f32 to vector<16x1xf32>
    %65 = arith.addf %63, %64 : vector<16x1xf32>
    %66 = math.rsqrt %65 : vector<16x1xf32>
    %67 = vector.broadcast %66 : vector<16x1xf32> to vector<16x32xf32>
    %68 = arith.mulf %58, %67 : vector<16x32xf32>
    %69 = vector.broadcast %51 : vector<1x32xf32> to vector<16x32xf32>
    %70 = arith.mulf %68, %69 : vector<16x32xf32>
    %71 = vector.broadcast %52 : vector<1x32xf32> to vector<16x32xf32>
    %72 = arith.addf %70, %71 : vector<16x32xf32>
    %c400 = arith.constant 400 : index
    %c0_28 = arith.constant 0 : index
    %73 = vector.load %arg2[%c400, %c0_28] : memref<1000x64xf32, #tpu.memory_space<vmem>>, vector<32x64xf32>
    %cst_29 = arith.constant dense<0.000000e+00> : vector<16x64xf32>
    %74 = tpu.matmul %72, %73, %cst_29 {dimension_numbers = #tpu.dot_dimension_numbers<[1], [0], [0], [1], [0, 0, 1, 1], [], []>} : vector<16x32xf32>, vector<32x64xf32>, vector<16x64xf32> -> vector<16x64xf32>
    %c432 = arith.constant 432 : index
    %c0_30 = arith.constant 0 : index
    %75 = vector.load %arg2[%c432, %c0_30] : memref<1000x64xf32, #tpu.memory_space<vmem>>, vector<1x64xf32>
    %76 = vector.broadcast %75 : vector<1x64xf32> to vector<16x64xf32>
    %77 = arith.addf %74, %76 : vector<16x64xf32>
    %cst_31 = arith.constant 0.000000e+00 : f32
    %78 = vector.broadcast %cst_31 : f32 to vector<16x64xf32>
    %79 = arith.maximumf %77, %78 : vector<16x64xf32>
    %c440 = arith.constant 440 : index
    %c0_32 = arith.constant 0 : index
    %80 = vector.load %arg2[%c440, %c0_32] : memref<1000x64xf32, #tpu.memory_space<vmem>>, vector<64x32xf32>
    %cst_33 = arith.constant dense<0.000000e+00> : vector<16x32xf32>
    %81 = tpu.matmul %79, %80, %cst_33 {dimension_numbers = #tpu.dot_dimension_numbers<[1], [0], [0], [1], [0, 0, 1, 1], [], []>} : vector<16x64xf32>, vector<64x32xf32>, vector<16x32xf32> -> vector<16x32xf32>
    %c504 = arith.constant 504 : index
    %c0_34 = arith.constant 0 : index
    %82 = vector.load %arg2[%c504, %c0_34] : memref<1000x64xf32, #tpu.memory_space<vmem>>, vector<1x32xf32>
    %83 = vector.broadcast %82 : vector<1x32xf32> to vector<16x32xf32>
    %84 = arith.addf %81, %83 : vector<16x32xf32>
    %85 = arith.addf %72, %84 : vector<16x32xf32>
    %c512 = arith.constant 512 : index
    %c0_35 = arith.constant 0 : index
    %86 = vector.load %arg2[%c512, %c0_35] : memref<1000x64xf32, #tpu.memory_space<vmem>>, vector<1x32xf32>
    %c520 = arith.constant 520 : index
    %c0_36 = arith.constant 0 : index
    %87 = vector.load %arg2[%c520, %c0_36] : memref<1000x64xf32, #tpu.memory_space<vmem>>, vector<1x32xf32>
    %cst_37 = arith.constant dense<0.000000e+00> : vector<16xf32>
    %88 = vector.multi_reduction <add>, %85, %cst_37 [1] : vector<16x32xf32> to vector<16xf32>
    %89 = vector.shape_cast %88 : vector<16xf32> to vector<16x1xf32>
    %cst_38 = arith.constant 3.200000e+01 : f32
    %90 = vector.broadcast %cst_38 : f32 to vector<16x1xf32>
    %91 = arith.divf %89, %90 : vector<16x1xf32>
    %92 = vector.broadcast %91 : vector<16x1xf32> to vector<16x32xf32>
    %93 = arith.subf %85, %92 : vector<16x32xf32>
    %94 = arith.mulf %93, %93 : vector<16x32xf32>
    %cst_39 = arith.constant dense<0.000000e+00> : vector<16xf32>
    %95 = vector.multi_reduction <add>, %94, %cst_39 [1] : vector<16x32xf32> to vector<16xf32>
    %96 = vector.shape_cast %95 : vector<16xf32> to vector<16x1xf32>
    %cst_40 = arith.constant 3.200000e+01 : f32
    %97 = vector.broadcast %cst_40 : f32 to vector<16x1xf32>
    %98 = arith.divf %96, %97 : vector<16x1xf32>
    %cst_41 = arith.constant 9.99999974E-6 : f32
    %99 = vector.broadcast %cst_41 : f32 to vector<16x1xf32>
    %100 = arith.addf %98, %99 : vector<16x1xf32>
    %101 = math.rsqrt %100 : vector<16x1xf32>
    %102 = vector.broadcast %101 : vector<16x1xf32> to vector<16x32xf32>
    %103 = arith.mulf %93, %102 : vector<16x32xf32>
    %104 = vector.broadcast %86 : vector<1x32xf32> to vector<16x32xf32>
    %105 = arith.mulf %103, %104 : vector<16x32xf32>
    %106 = vector.broadcast %87 : vector<1x32xf32> to vector<16x32xf32>
    %107 = arith.addf %105, %106 : vector<16x32xf32>
    %c528 = arith.constant 528 : index
    %c0_42 = arith.constant 0 : index
    %108 = vector.load %arg2[%c528, %c0_42] : memref<1000x64xf32, #tpu.memory_space<vmem>>, vector<96x32xf32>
    %109 = vector.shape_cast %108 : vector<96x32xf32> to vector<12x8x32xf32>
    %c624 = arith.constant 624 : index
    %c0_43 = arith.constant 0 : index
    %110 = vector.load %arg2[%c624, %c0_43] : memref<1000x64xf32, #tpu.memory_space<vmem>>, vector<192x8xf32>
    %111 = vector.shape_cast %110 : vector<192x8xf32> to vector<12x16x8xf32>
    %112 = vector.shape_cast %107 : vector<16x32xf32> to vector<1x16x32xf32>
    %113 = vector.shape_cast %112 : vector<1x16x32xf32> to vector<1x16x32xf32>
    %114 = vector.broadcast %113 : vector<1x16x32xf32> to vector<12x16x32xf32>
    %cst_44 = arith.constant dense<0.000000e+00> : vector<12x16x8xf32>
    %115 = tpu.matmul %114, %109, %cst_44 {dimension_numbers = #tpu.dot_dimension_numbers<[2], [2], [1], [1], [0, 0, 0, 1, 1, 1], [0], [0]>} : vector<12x16x32xf32>, vector<12x8x32xf32>, vector<12x16x8xf32> -> vector<12x16x8xf32>
    %116 = arith.addf %115, %111 : vector<12x16x8xf32>
    %117 = vector.extract_strided_slice %116 {offsets = [0, 0, 0], sizes = [4, 16, 8], strides = [1, 1, 1]} : vector<12x16x8xf32> to vector<4x16x8xf32>
    %118 = vector.extract_strided_slice %116 {offsets = [4, 0, 0], sizes = [4, 16, 8], strides = [1, 1, 1]} : vector<12x16x8xf32> to vector<4x16x8xf32>
    %119 = vector.extract_strided_slice %116 {offsets = [8, 0, 0], sizes = [4, 16, 8], strides = [1, 1, 1]} : vector<12x16x8xf32> to vector<4x16x8xf32>
    %cst_45 = arith.constant dense<0.000000e+00> : vector<4x16x16xf32>
    %120 = tpu.matmul %117, %118, %cst_45 {dimension_numbers = #tpu.dot_dimension_numbers<[2], [2], [1], [1], [0, 0, 0, 1, 1, 1], [0], [0]>} : vector<4x16x8xf32>, vector<4x16x8xf32>, vector<4x16x16xf32> -> vector<4x16x16xf32>
    %cst_46 = arith.constant 0.353553385 : f32
    %121 = vector.broadcast %cst_46 : f32 to vector<4x16x16xf32>
    %122 = arith.mulf %120, %121 : vector<4x16x16xf32>
    %123 = vector.shape_cast %14 : vector<16x16xf32> to vector<1x16x16xf32>
    %124 = vector.broadcast %123 : vector<1x16x16xf32> to vector<4x16x16xf32>
    %125 = arith.addf %122, %124 : vector<4x16x16xf32>
    %cst_47 = arith.constant dense<0xFF800000> : vector<4x16xf32>
    %126 = vector.multi_reduction <maximumf>, %125, %cst_47 [2] : vector<4x16x16xf32> to vector<4x16xf32>
    %127 = vector.shape_cast %126 : vector<4x16xf32> to vector<4x16x1xf32>
    %128 = vector.broadcast %127 : vector<4x16x1xf32> to vector<4x16x16xf32>
    %129 = arith.subf %125, %128 : vector<4x16x16xf32>
    %130 = math.exp %129 : vector<4x16x16xf32>
    %cst_48 = arith.constant dense<0.000000e+00> : vector<4x16xf32>
    %131 = vector.multi_reduction <add>, %130, %cst_48 [2] : vector<4x16x16xf32> to vector<4x16xf32>
    %132 = vector.shape_cast %131 : vector<4x16xf32> to vector<4x16x1xf32>
    %133 = vector.broadcast %132 : vector<4x16x1xf32> to vector<4x16x16xf32>
    %134 = arith.divf %130, %133 : vector<4x16x16xf32>
    %cst_49 = arith.constant dense<0.000000e+00> : vector<4x16x8xf32>
    %135 = tpu.matmul %134, %119, %cst_49 {dimension_numbers = #tpu.dot_dimension_numbers<[2], [1], [1], [2], [0, 0, 0, 1, 1, 2], [0], [0]>} : vector<4x16x16xf32>, vector<4x16x8xf32>, vector<4x16x8xf32> -> vector<4x16x8xf32>
    %c816 = arith.constant 816 : index
    %c0_50 = arith.constant 0 : index
    %136 = vector.load %arg2[%c816, %c0_50] : memref<1000x64xf32, #tpu.memory_space<vmem>>, vector<32x32xf32>
    %137 = vector.shape_cast %136 : vector<32x32xf32> to vector<4x8x32xf32>
    %cst_51 = arith.constant dense<0.000000e+00> : vector<4x16x32xf32>
    %138 = tpu.matmul %135, %137, %cst_51 {dimension_numbers = #tpu.dot_dimension_numbers<[2], [1], [1], [2], [0, 0, 0, 1, 1, 2], [0], [0]>} : vector<4x16x8xf32>, vector<4x8x32xf32>, vector<4x16x32xf32> -> vector<4x16x32xf32>
    %cst_52 = arith.constant dense<0.000000e+00> : vector<16x32xf32>
    %139 = vector.multi_reduction <add>, %138, %cst_52 [0] : vector<4x16x32xf32> to vector<16x32xf32>
    %c848 = arith.constant 848 : index
    %c0_53 = arith.constant 0 : index
    %140 = vector.load %arg2[%c848, %c0_53] : memref<1000x64xf32, #tpu.memory_space<vmem>>, vector<1x32xf32>
    %141 = vector.broadcast %140 : vector<1x32xf32> to vector<16x32xf32>
    %142 = arith.addf %139, %141 : vector<16x32xf32>
    %143 = arith.addf %107, %142 : vector<16x32xf32>
    %c856 = arith.constant 856 : index
    %c0_54 = arith.constant 0 : index
    %144 = vector.load %arg2[%c856, %c0_54] : memref<1000x64xf32, #tpu.memory_space<vmem>>, vector<1x32xf32>
    %c864 = arith.constant 864 : index
    %c0_55 = arith.constant 0 : index
    %145 = vector.load %arg2[%c864, %c0_55] : memref<1000x64xf32, #tpu.memory_space<vmem>>, vector<1x32xf32>
    %cst_56 = arith.constant dense<0.000000e+00> : vector<16xf32>
    %146 = vector.multi_reduction <add>, %143, %cst_56 [1] : vector<16x32xf32> to vector<16xf32>
    %147 = vector.shape_cast %146 : vector<16xf32> to vector<16x1xf32>
    %cst_57 = arith.constant 3.200000e+01 : f32
    %148 = vector.broadcast %cst_57 : f32 to vector<16x1xf32>
    %149 = arith.divf %147, %148 : vector<16x1xf32>
    %150 = vector.broadcast %149 : vector<16x1xf32> to vector<16x32xf32>
    %151 = arith.subf %143, %150 : vector<16x32xf32>
    %152 = arith.mulf %151, %151 : vector<16x32xf32>
    %cst_58 = arith.constant dense<0.000000e+00> : vector<16xf32>
    %153 = vector.multi_reduction <add>, %152, %cst_58 [1] : vector<16x32xf32> to vector<16xf32>
    %154 = vector.shape_cast %153 : vector<16xf32> to vector<16x1xf32>
    %cst_59 = arith.constant 3.200000e+01 : f32
    %155 = vector.broadcast %cst_59 : f32 to vector<16x1xf32>
    %156 = arith.divf %154, %155 : vector<16x1xf32>
    %cst_60 = arith.constant 9.99999974E-6 : f32
    %157 = vector.broadcast %cst_60 : f32 to vector<16x1xf32>
    %158 = arith.addf %156, %157 : vector<16x1xf32>
    %159 = math.rsqrt %158 : vector<16x1xf32>
    %160 = vector.broadcast %159 : vector<16x1xf32> to vector<16x32xf32>
    %161 = arith.mulf %151, %160 : vector<16x32xf32>
    %162 = vector.broadcast %144 : vector<1x32xf32> to vector<16x32xf32>
    %163 = arith.mulf %161, %162 : vector<16x32xf32>
    %164 = vector.broadcast %145 : vector<1x32xf32> to vector<16x32xf32>
    %165 = arith.addf %163, %164 : vector<16x32xf32>
    %c872 = arith.constant 872 : index
    %c0_61 = arith.constant 0 : index
    %166 = vector.load %arg2[%c872, %c0_61] : memref<1000x64xf32, #tpu.memory_space<vmem>>, vector<32x64xf32>
    %cst_62 = arith.constant dense<0.000000e+00> : vector<16x64xf32>
    %167 = tpu.matmul %165, %166, %cst_62 {dimension_numbers = #tpu.dot_dimension_numbers<[1], [0], [0], [1], [0, 0, 1, 1], [], []>} : vector<16x32xf32>, vector<32x64xf32>, vector<16x64xf32> -> vector<16x64xf32>
    %c904 = arith.constant 904 : index
    %c0_63 = arith.constant 0 : index
    %168 = vector.load %arg2[%c904, %c0_63] : memref<1000x64xf32, #tpu.memory_space<vmem>>, vector<1x64xf32>
    %169 = vector.broadcast %168 : vector<1x64xf32> to vector<16x64xf32>
    %170 = arith.addf %167, %169 : vector<16x64xf32>
    %cst_64 = arith.constant 0.000000e+00 : f32
    %171 = vector.broadcast %cst_64 : f32 to vector<16x64xf32>
    %172 = arith.maximumf %170, %171 : vector<16x64xf32>
    %c912 = arith.constant 912 : index
    %c0_65 = arith.constant 0 : index
    %173 = vector.load %arg2[%c912, %c0_65] : memref<1000x64xf32, #tpu.memory_space<vmem>>, vector<64x32xf32>
    %cst_66 = arith.constant dense<0.000000e+00> : vector<16x32xf32>
    %174 = tpu.matmul %172, %173, %cst_66 {dimension_numbers = #tpu.dot_dimension_numbers<[1], [0], [0], [1], [0, 0, 1, 1], [], []>} : vector<16x64xf32>, vector<64x32xf32>, vector<16x32xf32> -> vector<16x32xf32>
    %c976 = arith.constant 976 : index
    %c0_67 = arith.constant 0 : index
    %175 = vector.load %arg2[%c976, %c0_67] : memref<1000x64xf32, #tpu.memory_space<vmem>>, vector<1x32xf32>
    %176 = vector.broadcast %175 : vector<1x32xf32> to vector<16x32xf32>
    %177 = arith.addf %174, %176 : vector<16x32xf32>
    %178 = arith.addf %165, %177 : vector<16x32xf32>
    %c984 = arith.constant 984 : index
    %c0_68 = arith.constant 0 : index
    %179 = vector.load %arg2[%c984, %c0_68] : memref<1000x64xf32, #tpu.memory_space<vmem>>, vector<1x32xf32>
    %c992 = arith.constant 992 : index
    %c0_69 = arith.constant 0 : index
    %180 = vector.load %arg2[%c992, %c0_69] : memref<1000x64xf32, #tpu.memory_space<vmem>>, vector<1x32xf32>
    %cst_70 = arith.constant dense<0.000000e+00> : vector<16xf32>
    %181 = vector.multi_reduction <add>, %178, %cst_70 [1] : vector<16x32xf32> to vector<16xf32>
    %182 = vector.shape_cast %181 : vector<16xf32> to vector<16x1xf32>
    %cst_71 = arith.constant 3.200000e+01 : f32
    %183 = vector.broadcast %cst_71 : f32 to vector<16x1xf32>
    %184 = arith.divf %182, %183 : vector<16x1xf32>
    %185 = vector.broadcast %184 : vector<16x1xf32> to vector<16x32xf32>
    %186 = arith.subf %178, %185 : vector<16x32xf32>
    %187 = arith.mulf %186, %186 : vector<16x32xf32>
    %cst_72 = arith.constant dense<0.000000e+00> : vector<16xf32>
    %188 = vector.multi_reduction <add>, %187, %cst_72 [1] : vector<16x32xf32> to vector<16xf32>
    %189 = vector.shape_cast %188 : vector<16xf32> to vector<16x1xf32>
    %cst_73 = arith.constant 3.200000e+01 : f32
    %190 = vector.broadcast %cst_73 : f32 to vector<16x1xf32>
    %191 = arith.divf %189, %190 : vector<16x1xf32>
    %cst_74 = arith.constant 9.99999974E-6 : f32
    %192 = vector.broadcast %cst_74 : f32 to vector<16x1xf32>
    %193 = arith.addf %191, %192 : vector<16x1xf32>
    %194 = math.rsqrt %193 : vector<16x1xf32>
    %195 = vector.broadcast %194 : vector<16x1xf32> to vector<16x32xf32>
    %196 = arith.mulf %186, %195 : vector<16x32xf32>
    %197 = vector.broadcast %179 : vector<1x32xf32> to vector<16x32xf32>
    %198 = arith.mulf %196, %197 : vector<16x32xf32>
    %199 = vector.broadcast %180 : vector<1x32xf32> to vector<16x32xf32>
    %200 = arith.addf %198, %199 : vector<16x32xf32>
    %c0_75 = arith.constant 0 : index
    %c0_76 = arith.constant 0 : index
    %201 = vector.load %arg3[%c0_75, %c0_76] : memref<16x32xf32, #tpu.memory_space<vmem>>, vector<16x32xf32>
    tpu.vector_store %arg3[%c0_75, %c0_76], %200 {strides = array<i32>} : memref<16x32xf32, #tpu.memory_space<vmem>>, vector<16x32xf32>,
    return
  }
}

</mosaic_0001>

<llo_original>
// kernel: eq.8
$region0: #{eq.8}
  %s0 = inlined_call_operand.vmem [shape: s32[2,8], index: 0, kind: input, shape index: {}]
  %s1 = inlined_call_operand.vmem [shape: s32[16], index: 1, kind: output, shape index: {}]
  $region1: #{eq.8} parent=0
    #allocation0 [shape = 'u8[4096]{0}', space=vmem, size = 0x1000, scoped, tag = 'scoped mem for output reshape']
    #allocation1 [shape = 'u8[4096]{0}', space=vmem, size = 0x1000, scoped, tag = 'scoped mem for input reshape']
    %s3 = sshll.u32 1, 2
    %s4 = ssub.s32 %s3, 1
    %v5 = vld [vmem:[%s0] sm:%s4]
    %6 = vst [vmem:[#allocation1] sm:%s4] %v5
    %v7 = vld [vmem:[#allocation1] sm:$0x1]
    %vm8 = vcmask 64512
    %9 = vst.msk [vmem:[#allocation0] sm:$0x1] %vm8, %v7
    %s10 = scalar_lea.vmem [#allocation1], 1
    %v11 = vld [vmem:[%s10] sm:$0x1]
    %12 = vrot.lane.b32.xlu0 %v11, 8
    %v13 = vpop.permute.xlu0 %12
    %vm14 = vcmask 130112
    %15 = vst.msk [vmem:[#allocation0] sm:$0x1] %vm14, %v13
    %s17 = sshll.u32 1, 1
    %s18 = ssub.s32 %s17, 1
    %v20 = vld [vmem:[#allocation0] sm:%s18]
    %s21 = sshll.u32 1, 1
    %s22 = ssub.s32 %s21, 1
    %23 = vst [vmem:[%s1] sm:%s22] %v20

// kernel: squeeze.36
$region0: #{squeeze.36}
  %s0 = inlined_call_operand.vmem [shape: f32[32], index: 0, kind: input, shape index: {}]
  %s1 = inlined_call_operand.vmem [shape: f32[4,1,8], index: 1, kind: output, shape index: {}]
  $region1: #{squeeze.36} parent=0
    #allocation0 [shape = 'u8[4096]{0}', space=vmem, size = 0x1000, scoped, tag = 'scoped mem for output reshape']
    #allocation1 [shape = 'u8[4096]{0}', space=vmem, size = 0x1000, scoped, tag = 'scoped mem for input reshape']
    %s3 = sshll.u32 1, 1
    %s4 = ssub.s32 %s3, 1
    %v5 = vld [vmem:[%s0] sm:%s4]
    %6 = vst [vmem:[#allocation1] sm:%s4] %v5
    %v7 = vld [vmem:[#allocation1] sm:$0x1]
    %vm8 = vcmask 64512
    %9 = vst.msk [vmem:[#allocation0] sm:$0x1] %vm8, %v7
    %v10 = vld [vmem:[#allocation1] sm:$0x1]
    %11 = vrot.lane.b32.xlu0 %v10, 120
    %v12 = vpop.permute.xlu0 %11
    %vm13 = vcmask 64512
    %s14 = scalar_lea.vmem [#allocation0], 1
    %15 = vst.msk [vmem:[%s14] sm:$0x1] %vm13, %v12
    %v16 = vld [vmem:[#allocation1] sm:$0x1]
    %17 = vrot.lane.b32.xlu0 %v16, 112
    %v18 = vpop.permute.xlu0 %17
    %vm19 = vcmask 64512
    %s20 = scalar_lea.vmem [#allocation0], 2
    %21 = vst.msk [vmem:[%s20] sm:$0x1] %vm19, %v18
    %v22 = vld [vmem:[#allocation1] sm:$0x1]
    %23 = vrot.lane.b32.xlu0 %v22, 104
    %v24 = vpop.permute.xlu0 %23
    %vm25 = vcmask 64512
    %s26 = scalar_lea.vmem [#allocation0], 3
    %27 = vst.msk [vmem:[%s26] sm:$0x1] %vm25, %v24
    %s29 = sshll.u32 1, 4
    %s30 = ssub.s32 %s29, 1
    %v32 = vld [vmem:[#allocation0] sm:%s30]
    %s33 = sshll.u32 1, 4
    %s34 = ssub.s32 %s33, 1
    %35 = vst [vmem:[%s1] sm:%s34] %v32

// kernel: transformer_encoder.1
$region0: #{transformer_encoder.1}
  #allocation0 [shape = 'u32[]', space=smem, size = 0x4, offset = 0x4, fixed_abs, tag = 'smem constant byte address 0x4 - core index']
  #allocation1 [shape = 'u32[144,128]{1,0:T(1,128)}', space=vmem, size = 0x12000, scoped, tag = 'internal scratch']
  %s0 = inlined_call_operand.vmem [shape: f32[16,24], index: 0, kind: input, shape index: {}]
  %s1 = inlined_call_operand.vmem [shape: f32[2,8], index: 1, kind: input, shape index: {}]
  %s2 = inlined_call_operand.vmem [shape: f32[1000,64], index: 2, kind: input, shape index: {}]
  %s3 = inlined_call_operand.hbm [shape: f32[16,32], index: 3, kind: output, shape index: {}]
  %s4 = sld [smem:[#allocation0]]
  $region22: #{transformer_encoder.1} parent=0
    _
  %s6 = ssub.s32 1, %s4
  %s7 = scalar_select 0, %s6, %s4
  $region1: #{transformer_encoder.1} parent=0
    #allocation2 [shape = 'u8[8192]{0}', space=vmem, size = 0x2000, scoped, tag = 'output window, operand 0, single buffered']
    #allocation3 [shape = 's32[1]{0}', space=sflag, size = 0x4, scoped, tag = 'scoped memory for transformer_encoder.1']
    %8 = vsyncpa [#allocation3], 0
    // Predicated region
    $region2: #{transformer_encoder.1} parent=1 // pred_check
      _
    $region3: #{transformer_encoder.1} parent=1 // pred_check_branch
      %10 = sbr.rel (0) target = $region5
    $region4: #{transformer_encoder.1} parent=1 // pred_region
      _
    $region5: #{transformer_encoder.1} parent=1 // pred_fallthru
      _
    // Predicated region
    $region6: #{transformer_encoder.1} parent=1 // pred_check
      _
    $region7: #{transformer_encoder.1} parent=1 // pred_check_branch
      %12 = sbr.rel (0) target = $region9
    $region8: #{transformer_encoder.1} parent=1 // pred_region
      _
    $region9: #{transformer_encoder.1} parent=1 // pred_fallthru
      _
    // Predicated region
    $region10: #{transformer_encoder.1} parent=1 // pred_check
      _
    $region11: #{transformer_encoder.1} parent=1 // pred_check_branch
      %14 = sbr.rel (0) target = $region13
    $region12: #{transformer_encoder.1} parent=1 // pred_region
      _
    $region13: #{transformer_encoder.1} parent=1 // pred_fallthru
      _
    %v15 = vld [vmem:[%s0] sm:$0xff]
    %v16 = vld [vmem:[%s0 + $0x8] sm:$0xff]
    %v17 = vld [vmem:[%s1] sm:$0x3]
    %v18 = vld [vmem:[%s2 + $0x18] sm:$0xff]
    %v19 = vld [vmem:[%s2 + $0x20] sm:$0xff]
    %v20 = vld [vmem:[%s2 + $0x28] sm:$0xff]
    %v21 = vld [vmem:[%s2 + $0x10] sm:$0xff]
    %vm22 = vcmask 64512
    %v24 = vsel %vm22, %v17, 0
    %26 = vmatprep.subr.mxu0 0.0
    %27 = vmatpush1.msra.mxu0 0.0
    %28 = vmatprep.subr.mxu0 0.0
    %29 = vmatpush1.msra.mxu0 0.0
    %30 = vmatprep.subr.mxu0 0.0
    %31 = vmatpush1.msra.mxu0 0.0
    %32 = vmatprep.subr.mxu0 0.0
    %33 = vmatpush1.msra.mxu0 0.0
    %34 = vmatprep.subr.mxu0 0.0
    %35 = vmatpush1.msra.mxu0 0.0
    %36 = vmatprep.subr.mxu0 0.0
    %37 = vmatpush1.msra.mxu0 0.0
    %38 = vmatprep.subr.mxu0 0.0
    %39 = vmatpush1.msra.mxu0 0.0
    %40 = vmatprep.subr.mxu0 0.0
    %41 = vmatpush1.msra.mxu0 0.0
    %42 = vmatprep.subr.mxu0 0.0
    %43 = vmatpush1.msra.mxu0 0.0
    %44 = vmatprep.subr.mxu0 0.0
    %45 = vmatpush1.msra.mxu0 0.0
    %46 = vmatprep.subr.mxu0 0.0
    %47 = vmatpush1.msra.mxu0 0.0
    %48 = vmatprep.subr.mxu0 0.0
    %49 = vmatpush1.msra.mxu0 0.0
    %50 = vmatprep.subr.mxu0 0.0
    %51 = vmatpush1.msra.mxu0 0.0
    %52 = vmatprep.subr.mxu0 0.0
    %53 = vmatpush1.msra.mxu0 0.0
    %54 = vmatprep.subr.mxu0 0.0
    %55 = vmatpush1.msra.mxu0 0.0
    %56 = vmatprep.subr.mxu0 0.0
    %57 = vmatpush1.msra.mxu0 %v21
    %58 = vmatprep.subr.mxu0 0.0
    %59 = vmatpush2.msra.mxu0 0.0
    %60 = vmatprep.subr.mxu0 0.0
    %61 = vmatpush2.msra.mxu0 0.0
    %62 = vmatprep.subr.mxu0 0.0
    %63 = vmatpush2.msra.mxu0 0.0
    %64 = vmatprep.subr.mxu0 0.0
    %65 = vmatpush2.msra.mxu0 0.0
    %66 = vmatprep.subr.mxu0 0.0
    %67 = vmatpush2.msra.mxu0 0.0
    %68 = vmatprep.subr.mxu0 0.0
    %69 = vmatpush2.msra.mxu0 0.0
    %70 = vmatprep.subr.mxu0 0.0
    %71 = vmatpush2.msra.mxu0 0.0
    %72 = vmatprep.subr.mxu0 0.0
    %73 = vmatpush2.msra.mxu0 0.0
    %74 = vmatprep.subr.mxu0 0.0
    %75 = vmatpush2.msra.mxu0 0.0
    %76 = vmatprep.subr.mxu0 0.0
    %77 = vmatpush2.msra.mxu0 0.0
    %78 = vmatprep.subr.mxu0 0.0
    %79 = vmatpush2.msra.mxu0 0.0
    %80 = vmatprep.subr.mxu0 0.0
    %81 = vmatpush2.msra.mxu0 0.0
    %82 = vmatprep.subr.mxu0 0.0
    %83 = vmatpush2.msra.mxu0 0.0
    %84 = vmatprep.subr.mxu0 0.0
    %85 = vmatpush2.msra.mxu0 0.0
    %86 = vmatprep.subr.mxu0 0.0
    %87 = vmatpush2.msra.mxu0 0.0
    %88 = vmatprep.subr.mxu0 0.0
    %89 = vmatpush2.msra.mxu0 0.0
    %90 = vmatprep.mubr.f32.mxu0 0.0
    %91 = vmatmul.mubr.f32.gmra.mxu0 %v24
    %v92 = vpop.f32.mrf.mxu0
    %v93 = vadd.f32 0.0, %v92
    %v94 = vpop.f32.mrf.mxu0
    %95 = vdwg.mxu0
    %v98 = vunpack.c.l.s4 1966171168
    %v99 = vunpack.c.0.s8 %v98
    %v100 = vlaneseq
    %v101 = vshrl.u32 %v100, 7
    %v102 = vsub.s32 %v99, %v101
    %v103 = vrot.slane %v93, %v102
    %v104 = vcombine.high %v103, %v103
    %v106 = vunpack.c.l.s4 1966171168
    %v107 = vunpack.c.0.s8 %v106
    %v108 = vlaneseq
    %v109 = vshrl.u32 %v108, 7
    %v110 = vsub.s32 %v107, %v109
    %v111 = vrot.slane %v103, %v110
    %v113 = vunpack.c.l.s4 1966171168
    %v114 = vunpack.c.0.s8 %v113
    %v115 = vlaneseq
    %v116 = vshrl.u32 %v115, 7
    %v117 = vsub.s32 %v114, %v116
    %v118 = vrot.slane %v104, %v117
    %v119 = vlaneseq
    %v120 = vshrl.u32 %v119, 7
    %v121 = vsub.s32 0, %v120
    %v122 = vrot.slane %v111, %v121
    %v123 = vlaneseq
    %v124 = vshrl.u32 %v123, 7
    %v125 = vsub.s32 0, %v124
    %v126 = vrot.slane %v118, %v125
    %vm129 = vcmask 195584
    %v131 = vsel %vm129, %v15, 0
    %v134 = vsel %vm129, %v16, 0
    %136 = vmatprep.subr.mxu0 0.0
    %137 = vmatpush1.msra.mxu0 0.0
    %138 = vmatprep.subr.mxu0 0.0
    %139 = vmatpush1.msra.mxu0 0.0
    %140 = vmatprep.subr.mxu0 0.0
    %141 = vmatpush1.msra.mxu0 0.0
    %142 = vmatprep.subr.mxu0 0.0
    %143 = vmatpush1.msra.mxu0 0.0
    %144 = vmatprep.subr.mxu0 0.0
    %145 = vmatpush1.msra.mxu0 0.0
    %146 = vmatprep.subr.mxu0 0.0
    %147 = vmatpush1.msra.mxu0 0.0
    %148 = vmatprep.subr.mxu0 0.0
    %149 = vmatpush1.msra.mxu0 0.0
    %150 = vmatprep.subr.mxu0 0.0
    %151 = vmatpush1.msra.mxu0 0.0
    %152 = vmatprep.subr.mxu0 0.0
    %153 = vmatpush1.msra.mxu0 0.0
    %154 = vmatprep.subr.mxu0 0.0
    %155 = vmatpush1.msra.mxu0 0.0
    %156 = vmatprep.subr.mxu0 0.0
    %157 = vmatpush1.msra.mxu0 0.0
    %158 = vmatprep.subr.mxu0 0.0
    %159 = vmatpush1.msra.mxu0 0.0
    %160 = vmatprep.subr.mxu0 0.0
    %161 = vmatpush1.msra.mxu0 0.0
    %162 = vmatprep.subr.mxu0 0.0
    %163 = vmatpush1.msra.mxu0 %v20
    %164 = vmatprep.subr.mxu0 0.0
    %165 = vmatpush1.msra.mxu0 %v19
    %166 = vmatprep.subr.mxu0 0.0
    %167 = vmatpush1.msra.mxu0 %v18
    %168 = vmatprep.subr.mxu0 0.0
    %169 = vmatpush2.msra.mxu0 0.0
    %170 = vmatprep.subr.mxu0 0.0
    %171 = vmatpush2.msra.mxu0 0.0
    %172 = vmatprep.subr.mxu0 0.0
    %173 = vmatpush2.msra.mxu0 0.0
    %174 = vmatprep.subr.mxu0 0.0
    %175 = vmatpush2.msra.mxu0 0.0
    %176 = vmatprep.subr.mxu0 0.0
    %177 = vmatpush2.msra.mxu0 0.0
    %178 = vmatprep.subr.mxu0 0.0
    %179 = vmatpush2.msra.mxu0 0.0
    %180 = vmatprep.subr.mxu0 0.0
    %181 = vmatpush2.msra.mxu0 0.0
    %182 = vmatprep.subr.mxu0 0.0
    %183 = vmatpush2.msra.mxu0 0.0
    %184 = vmatprep.subr.mxu0 0.0
    %185 = vmatpush2.msra.mxu0 0.0
    %186 = vmatprep.subr.mxu0 0.0
    %187 = vmatpush2.msra.mxu0 0.0
    %188 = vmatprep.subr.mxu0 0.0
    %189 = vmatpush2.msra.mxu0 0.0
    %190 = vmatprep.subr.mxu0 0.0
    %191 = vmatpush2.msra.mxu0 0.0
    %192 = vmatprep.subr.mxu0 0.0
    %193 = vmatpush2.msra.mxu0 0.0
    %194 = vmatprep.subr.mxu0 0.0
    %195 = vmatpush2.msra.mxu0 0.0
    %196 = vmatprep.subr.mxu0 0.0
    %197 = vmatpush2.msra.mxu0 0.0
    %198 = vmatprep.subr.mxu0 0.0
    %199 = vmatpush2.msra.mxu0 0.0
    %200 = vmatprep.mubr.f32.mxu0 0.0
    %201 = vmatmul.mubr.f32.gmra.mxu0 %v131
    %v202 = vpop.f32.mrf.mxu0
    %v203 = vadd.f32 %v122, %v202
    %v204 = vpop.f32.mrf.mxu0
    %205 = vmatprep.mubr.f32.mxu0 0.0
    %206 = vmatmul.mubr.f32.gmra.mxu0 %v134
    %v207 = vpop.f32.mrf.mxu0
    %v208 = vadd.f32 %v126, %v207
    %v209 = vpop.f32.mrf.mxu0
    %210 = vdwg.mxu0
    %v211 = vld [vmem:[%s2 + $0x30] sm:$0x1]
    %v212 = vlaneseq
    %v213 = vshrl.u32 %v212, 7
    %v214 = vsub.s32 0, %v213
    %v215 = vrot.slane %v211, %v214
    %v216 = vadd.f32 %v203, %v215
    %v217 = vadd.f32 %v208, %v215
    %v218 = vld [vmem:[%s2] sm:$0xff]
    %v219 = vld [vmem:[%s2 + $0x8] sm:$0xff]
    %v220 = vld [vmem:[%s2 + $0x38] sm:$0xff]
    %v221 = vld [vmem:[%s2 + $0x40] sm:$0xff]
    %v222 = vld [vmem:[%s2 + $0x48] sm:$0xff]
    %v223 = vld [vmem:[%s2 + $0x50] sm:$0xff]
    %v224 = vld [vmem:[%s2 + $0x58] sm:$0xff]
    %v225 = vld [vmem:[%s2 + $0x60] sm:$0xff]
    %v226 = vld [vmem:[%s2 + $0x68] sm:$0xff]
    %v227 = vld [vmem:[%s2 + $0x70] sm:$0xff]
    %v228 = vld [vmem:[%s2 + $0x78] sm:$0xff]
    %v229 = vld [vmem:[%s2 + $0x80] sm:$0xff]
    %v230 = vld [vmem:[%s2 + $0x88] sm:$0xff]
    %v231 = vld [vmem:[%s2 + $0x90] sm:$0xff]
    %v232 = vld [vmem:[%s2 + $0x98] sm:$0xff]
    %v233 = vld [vmem:[%s2 + $0xa0] sm:$0xff]
    %v234 = vld [vmem:[%s2 + $0xa8] sm:$0xff]
    %v235 = vld [vmem:[%s2 + $0xb0] sm:$0xff]
    %v236 = vld [vmem:[%s2 + $0xb8] sm:$0xff]
    %v237 = vld [vmem:[%s2 + $0xc0] sm:$0xff]
    %v238 = vld [vmem:[%s2 + $0xc8] sm:$0xff]
    %v239 = vld [vmem:[%s2 + $0xd0] sm:$0xff]
    %v240 = vld [vmem:[%s2 + $0xd8] sm:$0xff]
    %v241 = vld [vmem:[%s2 + $0xe0] sm:$0xff]
    %v242 = vld [vmem:[%s2 + $0xe8] sm:$0xff]
    %v243 = vld [vmem:[%s2 + $0xf0] sm:$0xff]
    %v244 = vld [vmem:[%s2 + $0xf8] sm:$0xff]
    %v245 = vld [vmem:[%s2 + $0x100] sm:$0xff]
    %v246 = vld [vmem:[%s2 + $0x108] sm:$0xff]
    %v247 = vld [vmem:[%s2 + $0x110] sm:$0xff]
    %v248 = vld [vmem:[%s2 + $0x118] sm:$0xff]
    %v249 = vld [vmem:[%s2 + $0x120] sm:$0xff]
    %v250 = vld [vmem:[%s2 + $0x128] sm:$0xff]
    %v251 = vld [vmem:[%s2 + $0x130] sm:$0xff]
    %v252 = vld [vmem:[%s2 + $0x138] sm:$0xff]
    %v253 = vld [vmem:[%s2 + $0x140] sm:$0xff]
    %v254 = vld [vmem:[%s2 + $0x148] sm:$0xff]
    %v255 = vld [vmem:[%s2 + $0x150] sm:$0xff]
    %vm256 = vcmask 261120
    %v258 = vsel %vm256, %v216, 0
    %v261 = vsel %vm256, %v217, 0
    %v264 = vsel %vm256, %v220, 0
    %266 = vmatprep.subr.mxu0 0.0
    %267 = vmatpush1.xpose.msra.mxu0 0.0
    %268 = vmatprep.subr.mxu0 0.0
    %269 = vmatpush1.xpose.msra.mxu0 0.0
    %270 = vmatprep.subr.mxu0 0.0
    %271 = vmatpush1.xpose.msra.mxu0 0.0
    %272 = vmatprep.subr.mxu0 0.0
    %273 = vmatpush1.xpose.msra.mxu0 0.0
    %274 = vmatprep.subr.mxu0 0.0
    %275 = vmatpush1.xpose.msra.mxu0 0.0
    %276 = vmatprep.subr.mxu0 0.0
    %277 = vmatpush1.xpose.msra.mxu0 0.0
    %278 = vmatprep.subr.mxu0 0.0
    %279 = vmatpush1.xpose.msra.mxu0 0.0
    %280 = vmatprep.subr.mxu0 0.0
    %281 = vmatpush1.xpose.msra.mxu0 0.0
    %282 = vmatprep.subr.mxu0 0.0
    %283 = vmatpush1.xpose.msra.mxu0 0.0
    %284 = vmatprep.subr.mxu0 0.0
    %285 = vmatpush1.xpose.msra.mxu0 0.0
    %286 = vmatprep.subr.mxu0 0.0
    %287 = vmatpush1.xpose.msra.mxu0 0.0
    %288 = vmatprep.subr.mxu0 0.0
    %289 = vmatpush1.xpose.msra.mxu0 0.0
    %290 = vmatprep.subr.mxu0 0.0
    %291 = vmatpush1.xpose.msra.mxu0 0.0
    %292 = vmatprep.subr.mxu0 0.0
    %293 = vmatpush1.xpose.msra.mxu0 0.0
    %294 = vmatprep.subr.mxu0 0.0
    %295 = vmatpush1.xpose.msra.mxu0 0.0
    %296 = vmatprep.subr.mxu0 0.0
    %297 = vmatpush1.xpose.msra.mxu0 %v264
    %298 = vmatprep.subr.mxu0 0.0
    %299 = vmatpush2.xpose.msra.mxu0 0.0
    %300 = vmatprep.subr.mxu0 0.0
    %301 = vmatpush2.xpose.msra.mxu0 0.0
    %302 = vmatprep.subr.mxu0 0.0
    %303 = vmatpush2.xpose.msra.mxu0 0.0
    %304 = vmatprep.subr.mxu0 0.0
    %305 = vmatpush2.xpose.msra.mxu0 0.0
    %306 = vmatprep.subr.mxu0 0.0
    %307 = vmatpush2.xpose.msra.mxu0 0.0
    %308 = vmatprep.subr.mxu0 0.0
    %309 = vmatpush2.xpose.msra.mxu0 0.0
    %310 = vmatprep.subr.mxu0 0.0
    %311 = vmatpush2.xpose.msra.mxu0 0.0
    %312 = vmatprep.subr.mxu0 0.0
    %313 = vmatpush2.xpose.msra.mxu0 0.0
    %314 = vmatprep.subr.mxu0 0.0
    %315 = vmatpush2.xpose.msra.mxu0 0.0
    %316 = vmatprep.subr.mxu0 0.0
    %317 = vmatpush2.xpose.msra.mxu0 0.0
    %318 = vmatprep.subr.mxu0 0.0
    %319 = vmatpush2.xpose.msra.mxu0 0.0
    %320 = vmatprep.subr.mxu0 0.0
    %321 = vmatpush2.xpose.msra.mxu0 0.0
    %322 = vmatprep.subr.mxu0 0.0
    %323 = vmatpush2.xpose.msra.mxu0 0.0
    %324 = vmatprep.subr.mxu0 0.0
    %325 = vmatpush2.xpose.msra.mxu0 0.0
    %326 = vmatprep.subr.mxu0 0.0
    %327 = vmatpush2.xpose.msra.mxu0 0.0
    %328 = vmatprep.subr.mxu0 0.0
    %329 = vmatpush2.xpose.msra.mxu0 0.0
    %330 = vmatprep.mubr.f32.mxu0 0.0
    %331 = vmatmul.mubr.f32.gmra.mxu0 %v258
    %v332 = vpop.f32.mrf.mxu0
    %v333 = vadd.f32 %v232, %v332
    %v334 = vpop.f32.mrf.mxu0
    %335 = vmatprep.mubr.f32.mxu0 0.0
    %336 = vmatmul.mubr.f32.gmra.mxu0 %v261
    %v337 = vpop.f32.mrf.mxu0
    %v338 = vadd.f32 %v233, %v337
    %v339 = vpop.f32.mrf.mxu0
    %340 = vdwg.mxu0
    %v342 = vsel %vm256, %v221, 0
    %344 = vmatprep.subr.mxu0 0.0
    %345 = vmatpush1.xpose.msra.mxu0 0.0
    %346 = vmatprep.subr.mxu0 0.0
    %347 = vmatpush1.xpose.msra.mxu0 0.0
    %348 = vmatprep.subr.mxu0 0.0
    %349 = vmatpush1.xpose.msra.mxu0 0.0
    %350 = vmatprep.subr.mxu0 0.0
    %351 = vmatpush1.xpose.msra.mxu0 0.0
    %352 = vmatprep.subr.mxu0 0.0
    %353 = vmatpush1.xpose.msra.mxu0 0.0
    %354 = vmatprep.subr.mxu0 0.0
    %355 = vmatpush1.xpose.msra.mxu0 0.0
    %356 = vmatprep.subr.mxu0 0.0
    %357 = vmatpush1.xpose.msra.mxu0 0.0
    %358 = vmatprep.subr.mxu0 0.0
    %359 = vmatpush1.xpose.msra.mxu0 0.0
    %360 = vmatprep.subr.mxu0 0.0
    %361 = vmatpush1.xpose.msra.mxu0 0.0
    %362 = vmatprep.subr.mxu0 0.0
    %363 = vmatpush1.xpose.msra.mxu0 0.0
    %364 = vmatprep.subr.mxu0 0.0
    %365 = vmatpush1.xpose.msra.mxu0 0.0
    %366 = vmatprep.subr.mxu0 0.0
    %367 = vmatpush1.xpose.msra.mxu0 0.0
    %368 = vmatprep.subr.mxu0 0.0
    %369 = vmatpush1.xpose.msra.mxu0 0.0
    %370 = vmatprep.subr.mxu0 0.0
    %371 = vmatpush1.xpose.msra.mxu0 0.0
    %372 = vmatprep.subr.mxu0 0.0
    %373 = vmatpush1.xpose.msra.mxu0 0.0
    %374 = vmatprep.subr.mxu0 0.0
    %375 = vmatpush1.xpose.msra.mxu0 %v342
    %376 = vmatprep.subr.mxu0 0.0
    %377 = vmatpush2.xpose.msra.mxu0 0.0
    %378 = vmatprep.subr.mxu0 0.0
    %379 = vmatpush2.xpose.msra.mxu0 0.0
    %380 = vmatprep.subr.mxu0 0.0
    %381 = vmatpush2.xpose.msra.mxu0 0.0
    %382 = vmatprep.subr.mxu0 0.0
    %383 = vmatpush2.xpose.msra.mxu0 0.0
    %384 = vmatprep.subr.mxu0 0.0
    %385 = vmatpush2.xpose.msra.mxu0 0.0
    %386 = vmatprep.subr.mxu0 0.0
    %387 = vmatpush2.xpose.msra.mxu0 0.0
    %388 = vmatprep.subr.mxu0 0.0
    %389 = vmatpush2.xpose.msra.mxu0 0.0
    %390 = vmatprep.subr.mxu0 0.0
    %391 = vmatpush2.xpose.msra.mxu0 0.0
    %392 = vmatprep.subr.mxu0 0.0
    %393 = vmatpush2.xpose.msra.mxu0 0.0
    %394 = vmatprep.subr.mxu0 0.0
    %395 = vmatpush2.xpose.msra.mxu0 0.0
    %396 = vmatprep.subr.mxu0 0.0
    %397 = vmatpush2.xpose.msra.mxu0 0.0
    %398 = vmatprep.subr.mxu0 0.0
    %399 = vmatpush2.xpose.msra.mxu0 0.0
    %400 = vmatprep.subr.mxu0 0.0
    %401 = vmatpush2.xpose.msra.mxu0 0.0
    %402 = vmatprep.subr.mxu0 0.0
    %403 = vmatpush2.xpose.msra.mxu0 0.0
    %404 = vmatprep.subr.mxu0 0.0
    %405 = vmatpush2.xpose.msra.mxu0 0.0
    %406 = vmatprep.subr.mxu0 0.0
    %407 = vmatpush2.xpose.msra.mxu0 0.0
    %408 = vmatprep.mubr.f32.mxu0 0.0
    %409 = vmatmul.mubr.f32.gmra.mxu0 %v258
    %v410 = vpop.f32.mrf.mxu0
    %v411 = vadd.f32 %v234, %v410
    %v412 = vpop.f32.mrf.mxu0
    %413 = vmatprep.mubr.f32.mxu0 0.0
    %414 = vmatmul.mubr.f32.gmra.mxu0 %v261
    %v415 = vpop.f32.mrf.mxu0
    %v416 = vadd.f32 %v235, %v415
    %v417 = vpop.f32.mrf.mxu0
    %418 = vdwg.mxu0
    %v420 = vsel %vm256, %v222, 0
    %422 = vmatprep.subr.mxu0 0.0
    %423 = vmatpush1.xpose.msra.mxu0 0.0
    %424 = vmatprep.subr.mxu0 0.0
    %425 = vmatpush1.xpose.msra.mxu0 0.0
    %426 = vmatprep.subr.mxu0 0.0
    %427 = vmatpush1.xpose.msra.mxu0 0.0
    %428 = vmatprep.subr.mxu0 0.0
    %429 = vmatpush1.xpose.msra.mxu0 0.0
    %430 = vmatprep.subr.mxu0 0.0
    %431 = vmatpush1.xpose.msra.mxu0 0.0
    %432 = vmatprep.subr.mxu0 0.0
    %433 = vmatpush1.xpose.msra.mxu0 0.0
    %434 = vmatprep.subr.mxu0 0.0
    %435 = vmatpush1.xpose.msra.mxu0 0.0
    %436 = vmatprep.subr.mxu0 0.0
    %437 = vmatpush1.xpose.msra.mxu0 0.0
    %438 = vmatprep.subr.mxu0 0.0
    %439 = vmatpush1.xpose.msra.mxu0 0.0
    %440 = vmatprep.subr.mxu0 0.0
    %441 = vmatpush1.xpose.msra.mxu0 0.0
    %442 = vmatprep.subr.mxu0 0.0
    %443 = vmatpush1.xpose.msra.mxu0 0.0
    %444 = vmatprep.subr.mxu0 0.0
    %445 = vmatpush1.xpose.msra.mxu0 0.0
    %446 = vmatprep.subr.mxu0 0.0
    %447 = vmatpush1.xpose.msra.mxu0 0.0
    %448 = vmatprep.subr.mxu0 0.0
    %449 = vmatpush1.xpose.msra.mxu0 0.0
    %450 = vmatprep.subr.mxu0 0.0
    %451 = vmatpush1.xpose.msra.mxu0 0.0
    %452 = vmatprep.subr.mxu0 0.0
    %453 = vmatpush1.xpose.msra.mxu0 %v420
    %454 = vmatprep.subr.mxu0 0.0
    %455 = vmatpush2.xpose.msra.mxu0 0.0
    %456 = vmatprep.subr.mxu0 0.0
    %457 = vmatpush2.xpose.msra.mxu0 0.0
    %458 = vmatprep.subr.mxu0 0.0
    %459 = vmatpush2.xpose.msra.mxu0 0.0
    %460 = vmatprep.subr.mxu0 0.0
    %461 = vmatpush2.xpose.msra.mxu0 0.0
    %462 = vmatprep.subr.mxu0 0.0
    %463 = vmatpush2.xpose.msra.mxu0 0.0
    %464 = vmatprep.subr.mxu0 0.0
    %465 = vmatpush2.xpose.msra.mxu0 0.0
    %466 = vmatprep.subr.mxu0 0.0
    %467 = vmatpush2.xpose.msra.mxu0 0.0
    %468 = vmatprep.subr.mxu0 0.0
    %469 = vmatpush2.xpose.msra.mxu0 0.0
    %470 = vmatprep.subr.mxu0 0.0
    %471 = vmatpush2.xpose.msra.mxu0 0.0
    %472 = vmatprep.subr.mxu0 0.0
    %473 = vmatpush2.xpose.msra.mxu0 0.0
    %474 = vmatprep.subr.mxu0 0.0
    %475 = vmatpush2.xpose.msra.mxu0 0.0
    %476 = vmatprep.subr.mxu0 0.0
    %477 = vmatpush2.xpose.msra.mxu0 0.0
    %478 = vmatprep.subr.mxu0 0.0
    %479 = vmatpush2.xpose.msra.mxu0 0.0
    %480 = vmatprep.subr.mxu0 0.0
    %481 = vmatpush2.xpose.msra.mxu0 0.0
    %482 = vmatprep.subr.mxu0 0.0
    %483 = vmatpush2.xpose.msra.mxu0 0.0
    %484 = vmatprep.subr.mxu0 0.0
    %485 = vmatpush2.xpose.msra.mxu0 0.0
    %486 = vmatprep.mubr.f32.mxu0 0.0
    %487 = vmatmul.mubr.f32.gmra.mxu0 %v258
    %v488 = vpop.f32.mrf.mxu0
    %v489 = vadd.f32 %v236, %v488
    %v490 = vpop.f32.mrf.mxu0
    %491 = vmatprep.mubr.f32.mxu0 0.0
    %492 = vmatmul.mubr.f32.gmra.mxu0 %v261
    %v493 = vpop.f32.mrf.mxu0
    %v494 = vadd.f32 %v237, %v493
    %v495 = vpop.f32.mrf.mxu0
    %496 = vdwg.mxu0
    %v498 = vsel %vm256, %v223, 0
    %500 = vmatprep.subr.mxu0 0.0
    %501 = vmatpush1.xpose.msra.mxu0 0.0
    %502 = vmatprep.subr.mxu0 0.0
    %503 = vmatpush1.xpose.msra.mxu0 0.0
    %504 = vmatprep.subr.mxu0 0.0
    %505 = vmatpush1.xpose.msra.mxu0 0.0
    %506 = vmatprep.subr.mxu0 0.0
    %507 = vmatpush1.xpose.msra.mxu0 0.0
    %508 = vmatprep.subr.mxu0 0.0
    %509 = vmatpush1.xpose.msra.mxu0 0.0
    %510 = vmatprep.subr.mxu0 0.0
    %511 = vmatpush1.xpose.msra.mxu0 0.0
    %512 = vmatprep.subr.mxu0 0.0
    %513 = vmatpush1.xpose.msra.mxu0 0.0
    %514 = vmatprep.subr.mxu0 0.0
    %515 = vmatpush1.xpose.msra.mxu0 0.0
    %516 = vmatprep.subr.mxu0 0.0
    %517 = vmatpush1.xpose.msra.mxu0 0.0
    %518 = vmatprep.subr.mxu0 0.0
    %519 = vmatpush1.xpose.msra.mxu0 0.0
    %520 = vmatprep.subr.mxu0 0.0
    %521 = vmatpush1.xpose.msra.mxu0 0.0
    %522 = vmatprep.subr.mxu0 0.0
    %523 = vmatpush1.xpose.msra.mxu0 0.0
    %524 = vmatprep.subr.mxu0 0.0
    %525 = vmatpush1.xpose.msra.mxu0 0.0
    %526 = vmatprep.subr.mxu0 0.0
    %527 = vmatpush1.xpose.msra.mxu0 0.0
    %528 = vmatprep.subr.mxu0 0.0
    %529 = vmatpush1.xpose.msra.mxu0 0.0
    %530 = vmatprep.subr.mxu0 0.0
    %531 = vmatpush1.xpose.msra.mxu0 %v498
    %532 = vmatprep.subr.mxu0 0.0
    %533 = vmatpush2.xpose.msra.mxu0 0.0
    %534 = vmatprep.subr.mxu0 0.0
    %535 = vmatpush2.xpose.msra.mxu0 0.0
    %536 = vmatprep.subr.mxu0 0.0
    %537 = vmatpush2.xpose.msra.mxu0 0.0
    %538 = vmatprep.subr.mxu0 0.0
    %539 = vmatpush2.xpose.msra.mxu0 0.0
    %540 = vmatprep.subr.mxu0 0.0
    %541 = vmatpush2.xpose.msra.mxu0 0.0
    %542 = vmatprep.subr.mxu0 0.0
    %543 = vmatpush2.xpose.msra.mxu0 0.0
    %544 = vmatprep.subr.mxu0 0.0
    %545 = vmatpush2.xpose.msra.mxu0 0.0
    %546 = vmatprep.subr.mxu0 0.0
    %547 = vmatpush2.xpose.msra.mxu0 0.0
    %548 = vmatprep.subr.mxu0 0.0
    %549 = vmatpush2.xpose.msra.mxu0 0.0
    %550 = vmatprep.subr.mxu0 0.0
    %551 = vmatpush2.xpose.msra.mxu0 0.0
    %552 = vmatprep.subr.mxu0 0.0
    %553 = vmatpush2.xpose.msra.mxu0 0.0
    %554 = vmatprep.subr.mxu0 0.0
    %555 = vmatpush2.xpose.msra.mxu0 0.0
    %556 = vmatprep.subr.mxu0 0.0
    %557 = vmatpush2.xpose.msra.mxu0 0.0
    %558 = vmatprep.subr.mxu0 0.0
    %559 = vmatpush2.xpose.msra.mxu0 0.0
    %560 = vmatprep.subr.mxu0 0.0
    %561 = vmatpush2.xpose.msra.mxu0 0.0
    %562 = vmatprep.subr.mxu0 0.0
    %563 = vmatpush2.xpose.msra.mxu0 0.0
    %564 = vmatprep.mubr.f32.mxu0 0.0
    %565 = vmatmul.mubr.f32.gmra.mxu0 %v258
    %v566 = vpop.f32.mrf.mxu0
    %v567 = vadd.f32 %v238, %v566
    %v568 = vpop.f32.mrf.mxu0
    %569 = vmatprep.mubr.f32.mxu0 0.0
    %570 = vmatmul.mubr.f32.gmra.mxu0 %v261
    %v571 = vpop.f32.mrf.mxu0
    %v572 = vadd.f32 %v239, %v571
    %v573 = vpop.f32.mrf.mxu0
    %574 = vdwg.mxu0
    %v576 = vsel %vm256, %v224, 0
    %578 = vmatprep.subr.mxu0 0.0
    %579 = vmatpush1.xpose.msra.mxu0 0.0
    %580 = vmatprep.subr.mxu0 0.0
    %581 = vmatpush1.xpose.msra.mxu0 0.0
    %582 = vmatprep.subr.mxu0 0.0
    %583 = vmatpush1.xpose.msra.mxu0 0.0
    %584 = vmatprep.subr.mxu0 0.0
    %585 = vmatpush1.xpose.msra.mxu0 0.0
    %586 = vmatprep.subr.mxu0 0.0
    %587 = vmatpush1.xpose.msra.mxu0 0.0
    %588 = vmatprep.subr.mxu0 0.0
    %589 = vmatpush1.xpose.msra.mxu0 0.0
    %590 = vmatprep.subr.mxu0 0.0
    %591 = vmatpush1.xpose.msra.mxu0 0.0
    %592 = vmatprep.subr.mxu0 0.0
    %593 = vmatpush1.xpose.msra.mxu0 0.0
    %594 = vmatprep.subr.mxu0 0.0
    %595 = vmatpush1.xpose.msra.mxu0 0.0
    %596 = vmatprep.subr.mxu0 0.0
    %597 = vmatpush1.xpose.msra.mxu0 0.0
    %598 = vmatprep.subr.mxu0 0.0
    %599 = vmatpush1.xpose.msra.mxu0 0.0
    %600 = vmatprep.subr.mxu0 0.0
    %601 = vmatpush1.xpose.msra.mxu0 0.0
    %602 = vmatprep.subr.mxu0 0.0
    %603 = vmatpush1.xpose.msra.mxu0 0.0
    %604 = vmatprep.subr.mxu0 0.0
    %605 = vmatpush1.xpose.msra.mxu0 0.0
    %606 = vmatprep.subr.mxu0 0.0
    %607 = vmatpush1.xpose.msra.mxu0 0.0
    %608 = vmatprep.subr.mxu0 0.0
    %609 = vmatpush1.xpose.msra.mxu0 %v576
    %610 = vmatprep.subr.mxu0 0.0
    %611 = vmatpush2.xpose.msra.mxu0 0.0
    %612 = vmatprep.subr.mxu0 0.0
    %613 = vmatpush2.xpose.msra.mxu0 0.0
    %614 = vmatprep.subr.mxu0 0.0
    %615 = vmatpush2.xpose.msra.mxu0 0.0
    %616 = vmatprep.subr.mxu0 0.0
    %617 = vmatpush2.xpose.msra.mxu0 0.0
    %618 = vmatprep.subr.mxu0 0.0
    %619 = vmatpush2.xpose.msra.mxu0 0.0
    %620 = vmatprep.subr.mxu0 0.0
    %621 = vmatpush2.xpose.msra.mxu0 0.0
    %622 = vmatprep.subr.mxu0 0.0
    %623 = vmatpush2.xpose.msra.mxu0 0.0
    %624 = vmatprep.subr.mxu0 0.0
    %625 = vmatpush2.xpose.msra.mxu0 0.0
    %626 = vmatprep.subr.mxu0 0.0
    %627 = vmatpush2.xpose.msra.mxu0 0.0
    %628 = vmatprep.subr.mxu0 0.0
    %629 = vmatpush2.xpose.msra.mxu0 0.0
    %630 = vmatprep.subr.mxu0 0.0
    %631 = vmatpush2.xpose.msra.mxu0 0.0
    %632 = vmatprep.subr.mxu0 0.0
    %633 = vmatpush2.xpose.msra.mxu0 0.0
    %634 = vmatprep.subr.mxu0 0.0
    %635 = vmatpush2.xpose.msra.mxu0 0.0
    %636 = vmatprep.subr.mxu0 0.0
    %637 = vmatpush2.xpose.msra.mxu0 0.0
    %638 = vmatprep.subr.mxu0 0.0
    %639 = vmatpush2.xpose.msra.mxu0 0.0
    %640 = vmatprep.subr.mxu0 0.0
    %641 = vmatpush2.xpose.msra.mxu0 0.0
    %642 = vmatprep.mubr.f32.mxu0 0.0
    %643 = vmatmul.mubr.f32.gmra.mxu0 %v258
    %v644 = vpop.f32.mrf.mxu0
    %v645 = vadd.f32 %v240, %v644
    %v646 = vpop.f32.mrf.mxu0
    %647 = vmatprep.mubr.f32.mxu0 0.0
    %648 = vmatmul.mubr.f32.gmra.mxu0 %v261
    %v649 = vpop.f32.mrf.mxu0
    %v650 = vadd.f32 %v241, %v649
    %v651 = vpop.f32.mrf.mxu0
    %652 = vdwg.mxu0
    %v654 = vsel %vm256, %v225, 0
    %656 = vmatprep.subr.mxu0 0.0
    %657 = vmatpush1.xpose.msra.mxu0 0.0
    %658 = vmatprep.subr.mxu0 0.0
    %659 = vmatpush1.xpose.msra.mxu0 0.0
    %660 = vmatprep.subr.mxu0 0.0
    %661 = vmatpush1.xpose.msra.mxu0 0.0
    %662 = vmatprep.subr.mxu0 0.0
    %663 = vmatpush1.xpose.msra.mxu0 0.0
    %664 = vmatprep.subr.mxu0 0.0
    %665 = vmatpush1.xpose.msra.mxu0 0.0
    %666 = vmatprep.subr.mxu0 0.0
    %667 = vmatpush1.xpose.msra.mxu0 0.0
    %668 = vmatprep.subr.mxu0 0.0
    %669 = vmatpush1.xpose.msra.mxu0 0.0
    %670 = vmatprep.subr.mxu0 0.0
    %671 = vmatpush1.xpose.msra.mxu0 0.0
    %672 = vmatprep.subr.mxu0 0.0
    %673 = vmatpush1.xpose.msra.mxu0 0.0
    %674 = vmatprep.subr.mxu0 0.0
    %675 = vmatpush1.xpose.msra.mxu0 0.0
    %676 = vmatprep.subr.mxu0 0.0
    %677 = vmatpush1.xpose.msra.mxu0 0.0
    %678 = vmatprep.subr.mxu0 0.0
    %679 = vmatpush1.xpose.msra.mxu0 0.0
    %680 = vmatprep.subr.mxu0 0.0
    %681 = vmatpush1.xpose.msra.mxu0 0.0
    %682 = vmatprep.subr.mxu0 0.0
    %683 = vmatpush1.xpose.msra.mxu0 0.0
    %684 = vmatprep.subr.mxu0 0.0
    %685 = vmatpush1.xpose.msra.mxu0 0.0
    %686 = vmatprep.subr.mxu0 0.0
    %687 = vmatpush1.xpose.msra.mxu0 %v654
    %688 = vmatprep.subr.mxu0 0.0
    %689 = vmatpush2.xpose.msra.mxu0 0.0
    %690 = vmatprep.subr.mxu0 0.0
    %691 = vmatpush2.xpose.msra.mxu0 0.0
    %692 = vmatprep.subr.mxu0 0.0
    %693 = vmatpush2.xpose.msra.mxu0 0.0
    %694 = vmatprep.subr.mxu0 0.0
    %695 = vmatpush2.xpose.msra.mxu0 0.0
    %696 = vmatprep.subr.mxu0 0.0
    %697 = vmatpush2.xpose.msra.mxu0 0.0
    %698 = vmatprep.subr.mxu0 0.0
    %699 = vmatpush2.xpose.msra.mxu0 0.0
    %700 = vmatprep.subr.mxu0 0.0
    %701 = vmatpush2.xpose.msra.mxu0 0.0
    %702 = vmatprep.subr.mxu0 0.0
    %703 = vmatpush2.xpose.msra.mxu0 0.0
    %704 = vmatprep.subr.mxu0 0.0
    %705 = vmatpush2.xpose.msra.mxu0 0.0
    %706 = vmatprep.subr.mxu0 0.0
    %707 = vmatpush2.xpose.msra.mxu0 0.0
    %708 = vmatprep.subr.mxu0 0.0
    %709 = vmatpush2.xpose.msra.mxu0 0.0
    %710 = vmatprep.subr.mxu0 0.0
    %711 = vmatpush2.xpose.msra.mxu0 0.0
    %712 = vmatprep.subr.mxu0 0.0
    %713 = vmatpush2.xpose.msra.mxu0 0.0
    %714 = vmatprep.subr.mxu0 0.0
    %715 = vmatpush2.xpose.msra.mxu0 0.0
    %716 = vmatprep.subr.mxu0 0.0
    %717 = vmatpush2.xpose.msra.mxu0 0.0
    %718 = vmatprep.subr.mxu0 0.0
    %719 = vmatpush2.xpose.msra.mxu0 0.0
    %720 = vmatprep.mubr.f32.mxu0 0.0
    %721 = vmatmul.mubr.f32.gmra.mxu0 %v258
    %v722 = vpop.f32.mrf.mxu0
    %v723 = vadd.f32 %v242, %v722
    %v724 = vpop.f32.mrf.mxu0
    %725 = vmatprep.mubr.f32.mxu0 0.0
    %726 = vmatmul.mubr.f32.gmra.mxu0 %v261
    %v727 = vpop.f32.mrf.mxu0
    %v728 = vadd.f32 %v243, %v727
    %v729 = vpop.f32.mrf.mxu0
    %730 = vdwg.mxu0
    %v732 = vsel %vm256, %v226, 0
    %734 = vmatprep.subr.mxu0 0.0
    %735 = vmatpush1.xpose.msra.mxu0 0.0
    %736 = vmatprep.subr.mxu0 0.0
    %737 = vmatpush1.xpose.msra.mxu0 0.0
    %738 = vmatprep.subr.mxu0 0.0
    %739 = vmatpush1.xpose.msra.mxu0 0.0
    %740 = vmatprep.subr.mxu0 0.0
    %741 = vmatpush1.xpose.msra.mxu0 0.0
    %742 = vmatprep.subr.mxu0 0.0
    %743 = vmatpush1.xpose.msra.mxu0 0.0
    %744 = vmatprep.subr.mxu0 0.0
    %745 = vmatpush1.xpose.msra.mxu0 0.0
    %746 = vmatprep.subr.mxu0 0.0
    %747 = vmatpush1.xpose.msra.mxu0 0.0
    %748 = vmatprep.subr.mxu0 0.0
    %749 = vmatpush1.xpose.msra.mxu0 0.0
    %750 = vmatprep.subr.mxu0 0.0
    %751 = vmatpush1.xpose.msra.mxu0 0.0
    %752 = vmatprep.subr.mxu0 0.0
    %753 = vmatpush1.xpose.msra.mxu0 0.0
    %754 = vmatprep.subr.mxu0 0.0
    %755 = vmatpush1.xpose.msra.mxu0 0.0
    %756 = vmatprep.subr.mxu0 0.0
    %757 = vmatpush1.xpose.msra.mxu0 0.0
    %758 = vmatprep.subr.mxu0 0.0
    %759 = vmatpush1.xpose.msra.mxu0 0.0
    %760 = vmatprep.subr.mxu0 0.0
    %761 = vmatpush1.xpose.msra.mxu0 0.0
    %762 = vmatprep.subr.mxu0 0.0
    %763 = vmatpush1.xpose.msra.mxu0 0.0
    %764 = vmatprep.subr.mxu0 0.0
    %765 = vmatpush1.xpose.msra.mxu0 %v732
    %766 = vmatprep.subr.mxu0 0.0
    %767 = vmatpush2.xpose.msra.mxu0 0.0
    %768 = vmatprep.subr.mxu0 0.0
    %769 = vmatpush2.xpose.msra.mxu0 0.0
    %770 = vmatprep.subr.mxu0 0.0
    %771 = vmatpush2.xpose.msra.mxu0 0.0
    %772 = vmatprep.subr.mxu0 0.0
    %773 = vmatpush2.xpose.msra.mxu0 0.0
    %774 = vmatprep.subr.mxu0 0.0
    %775 = vmatpush2.xpose.msra.mxu0 0.0
    %776 = vmatprep.subr.mxu0 0.0
    %777 = vmatpush2.xpose.msra.mxu0 0.0
    %778 = vmatprep.subr.mxu0 0.0
    %779 = vmatpush2.xpose.msra.mxu0 0.0
    %780 = vmatprep.subr.mxu0 0.0
    %781 = vmatpush2.xpose.msra.mxu0 0.0
    %782 = vmatprep.subr.mxu0 0.0
    %783 = vmatpush2.xpose.msra.mxu0 0.0
    %784 = vmatprep.subr.mxu0 0.0
    %785 = vmatpush2.xpose.msra.mxu0 0.0
    %786 = vmatprep.subr.mxu0 0.0
    %787 = vmatpush2.xpose.msra.mxu0 0.0
    %788 = vmatprep.subr.mxu0 0.0
    %789 = vmatpush2.xpose.msra.mxu0 0.0
    %790 = vmatprep.subr.mxu0 0.0
    %791 = vmatpush2.xpose.msra.mxu0 0.0
    %792 = vmatprep.subr.mxu0 0.0
    %793 = vmatpush2.xpose.msra.mxu0 0.0
    %794 = vmatprep.subr.mxu0 0.0
    %795 = vmatpush2.xpose.msra.mxu0 0.0
    %796 = vmatprep.subr.mxu0 0.0
    %797 = vmatpush2.xpose.msra.mxu0 0.0
    %798 = vmatprep.mubr.f32.mxu0 0.0
    %799 = vmatmul.mubr.f32.gmra.mxu0 %v258
    %v800 = vpop.f32.mrf.mxu0
    %v801 = vadd.f32 %v244, %v800
    %v802 = vpop.f32.mrf.mxu0
    %803 = vmatprep.mubr.f32.mxu0 0.0
    %804 = vmatmul.mubr.f32.gmra.mxu0 %v261
    %v805 = vpop.f32.mrf.mxu0
    %v806 = vadd.f32 %v245, %v805
    %v807 = vpop.f32.mrf.mxu0
    %808 = vdwg.mxu0
    %v810 = vsel %vm256, %v227, 0
    %812 = vmatprep.subr.mxu0 0.0
    %813 = vmatpush1.xpose.msra.mxu0 0.0
    %814 = vmatprep.subr.mxu0 0.0
    %815 = vmatpush1.xpose.msra.mxu0 0.0
    %816 = vmatprep.subr.mxu0 0.0
    %817 = vmatpush1.xpose.msra.mxu0 0.0
    %818 = vmatprep.subr.mxu0 0.0
    %819 = vmatpush1.xpose.msra.mxu0 0.0
    %820 = vmatprep.subr.mxu0 0.0
    %821 = vmatpush1.xpose.msra.mxu0 0.0
    %822 = vmatprep.subr.mxu0 0.0
    %823 = vmatpush1.xpose.msra.mxu0 0.0
    %824 = vmatprep.subr.mxu0 0.0
    %825 = vmatpush1.xpose.msra.mxu0 0.0
    %826 = vmatprep.subr.mxu0 0.0
    %827 = vmatpush1.xpose.msra.mxu0 0.0
    %828 = vmatprep.subr.mxu0 0.0
    %829 = vmatpush1.xpose.msra.mxu0 0.0
    %830 = vmatprep.subr.mxu0 0.0
    %831 = vmatpush1.xpose.msra.mxu0 0.0
    %832 = vmatprep.subr.mxu0 0.0
    %833 = vmatpush1.xpose.msra.mxu0 0.0
    %834 = vmatprep.subr.mxu0 0.0
    %835 = vmatpush1.xpose.msra.mxu0 0.0
    %836 = vmatprep.subr.mxu0 0.0
    %837 = vmatpush1.xpose.msra.mxu0 0.0
    %838 = vmatprep.subr.mxu0 0.0
    %839 = vmatpush1.xpose.msra.mxu0 0.0
    %840 = vmatprep.subr.mxu0 0.0
    %841 = vmatpush1.xpose.msra.mxu0 0.0
    %842 = vmatprep.subr.mxu0 0.0
    %843 = vmatpush1.xpose.msra.mxu0 %v810
    %844 = vmatprep.subr.mxu0 0.0
    %845 = vmatpush2.xpose.msra.mxu0 0.0
    %846 = vmatprep.subr.mxu0 0.0
    %847 = vmatpush2.xpose.msra.mxu0 0.0
    %848 = vmatprep.subr.mxu0 0.0
    %849 = vmatpush2.xpose.msra.mxu0 0.0
    %850 = vmatprep.subr.mxu0 0.0
    %851 = vmatpush2.xpose.msra.mxu0 0.0
    %852 = vmatprep.subr.mxu0 0.0
    %853 = vmatpush2.xpose.msra.mxu0 0.0
    %854 = vmatprep.subr.mxu0 0.0
    %855 = vmatpush2.xpose.msra.mxu0 0.0
    %856 = vmatprep.subr.mxu0 0.0
    %857 = vmatpush2.xpose.msra.mxu0 0.0
    %858 = vmatprep.subr.mxu0 0.0
    %859 = vmatpush2.xpose.msra.mxu0 0.0
    %860 = vmatprep.subr.mxu0 0.0
    %861 = vmatpush2.xpose.msra.mxu0 0.0
    %862 = vmatprep.subr.mxu0 0.0
    %863 = vmatpush2.xpose.msra.mxu0 0.0
    %864 = vmatprep.subr.mxu0 0.0
    %865 = vmatpush2.xpose.msra.mxu0 0.0
    %866 = vmatprep.subr.mxu0 0.0
    %867 = vmatpush2.xpose.msra.mxu0 0.0
    %868 = vmatprep.subr.mxu0 0.0
    %869 = vmatpush2.xpose.msra.mxu0 0.0
    %870 = vmatprep.subr.mxu0 0.0
    %871 = vmatpush2.xpose.msra.mxu0 0.0
    %872 = vmatprep.subr.mxu0 0.0
    %873 = vmatpush2.xpose.msra.mxu0 0.0
    %874 = vmatprep.subr.mxu0 0.0
    %875 = vmatpush2.xpose.msra.mxu0 0.0
    %876 = vmatprep.mubr.f32.mxu0 0.0
    %877 = vmatmul.mubr.f32.gmra.mxu0 %v258
    %v878 = vpop.f32.mrf.mxu0
    %v879 = vadd.f32 %v246, %v878
    %v880 = vpop.f32.mrf.mxu0
    %881 = vmatprep.mubr.f32.mxu0 0.0
    %882 = vmatmul.mubr.f32.gmra.mxu0 %v261
    %v883 = vpop.f32.mrf.mxu0
    %v884 = vadd.f32 %v247, %v883
    %v885 = vpop.f32.mrf.mxu0
    %886 = vdwg.mxu0
    %v888 = vsel %vm256, %v228, 0
    %890 = vmatprep.subr.mxu0 0.0
    %891 = vmatpush1.xpose.msra.mxu0 0.0
    %892 = vmatprep.subr.mxu0 0.0
    %893 = vmatpush1.xpose.msra.mxu0 0.0
    %894 = vmatprep.subr.mxu0 0.0
    %895 = vmatpush1.xpose.msra.mxu0 0.0
    %896 = vmatprep.subr.mxu0 0.0
    %897 = vmatpush1.xpose.msra.mxu0 0.0
    %898 = vmatprep.subr.mxu0 0.0
    %899 = vmatpush1.xpose.msra.mxu0 0.0
    %900 = vmatprep.subr.mxu0 0.0
    %901 = vmatpush1.xpose.msra.mxu0 0.0
    %902 = vmatprep.subr.mxu0 0.0
    %903 = vmatpush1.xpose.msra.mxu0 0.0
    %904 = vmatprep.subr.mxu0 0.0
    %905 = vmatpush1.xpose.msra.mxu0 0.0
    %906 = vmatprep.subr.mxu0 0.0
    %907 = vmatpush1.xpose.msra.mxu0 0.0
    %908 = vmatprep.subr.mxu0 0.0
    %909 = vmatpush1.xpose.msra.mxu0 0.0
    %910 = vmatprep.subr.mxu0 0.0
    %911 = vmatpush1.xpose.msra.mxu0 0.0
    %912 = vmatprep.subr.mxu0 0.0
    %913 = vmatpush1.xpose.msra.mxu0 0.0
    %914 = vmatprep.subr.mxu0 0.0
    %915 = vmatpush1.xpose.msra.mxu0 0.0
    %916 = vmatprep.subr.mxu0 0.0
    %917 = vmatpush1.xpose.msra.mxu0 0.0
    %918 = vmatprep.subr.mxu0 0.0
    %919 = vmatpush1.xpose.msra.mxu0 0.0
    %920 = vmatprep.subr.mxu0 0.0
    %921 = vmatpush1.xpose.msra.mxu0 %v888
    %922 = vmatprep.subr.mxu0 0.0
    %923 = vmatpush2.xpose.msra.mxu0 0.0
    %924 = vmatprep.subr.mxu0 0.0
    %925 = vmatpush2.xpose.msra.mxu0 0.0
    %926 = vmatprep.subr.mxu0 0.0
    %927 = vmatpush2.xpose.msra.mxu0 0.0
    %928 = vmatprep.subr.mxu0 0.0
    %929 = vmatpush2.xpose.msra.mxu0 0.0
    %930 = vmatprep.subr.mxu0 0.0
    %931 = vmatpush2.xpose.msra.mxu0 0.0
    %932 = vmatprep.subr.mxu0 0.0
    %933 = vmatpush2.xpose.msra.mxu0 0.0
    %934 = vmatprep.subr.mxu0 0.0
    %935 = vmatpush2.xpose.msra.mxu0 0.0
    %936 = vmatprep.subr.mxu0 0.0
    %937 = vmatpush2.xpose.msra.mxu0 0.0
    %938 = vmatprep.subr.mxu0 0.0
    %939 = vmatpush2.xpose.msra.mxu0 0.0
    %940 = vmatprep.subr.mxu0 0.0
    %941 = vmatpush2.xpose.msra.mxu0 0.0
    %942 = vmatprep.subr.mxu0 0.0
    %943 = vmatpush2.xpose.msra.mxu0 0.0
    %944 = vmatprep.subr.mxu0 0.0
    %945 = vmatpush2.xpose.msra.mxu0 0.0
    %946 = vmatprep.subr.mxu0 0.0
    %947 = vmatpush2.xpose.msra.mxu0 0.0
    %948 = vmatprep.subr.mxu0 0.0
    %949 = vmatpush2.xpose.msra.mxu0 0.0
    %950 = vmatprep.subr.mxu0 0.0
    %951 = vmatpush2.xpose.msra.mxu0 0.0
    %952 = vmatprep.subr.mxu0 0.0
    %953 = vmatpush2.xpose.msra.mxu0 0.0
    %954 = vmatprep.mubr.f32.mxu0 0.0
    %955 = vmatmul.mubr.f32.gmra.mxu0 %v258
    %v956 = vpop.f32.mrf.mxu0
    %v957 = vadd.f32 %v248, %v956
    %v958 = vpop.f32.mrf.mxu0
    %959 = vmatprep.mubr.f32.mxu0 0.0
    %960 = vmatmul.mubr.f32.gmra.mxu0 %v261
    %v961 = vpop.f32.mrf.mxu0
    %v962 = vadd.f32 %v249, %v961
    %v963 = vpop.f32.mrf.mxu0
    %964 = vdwg.mxu0
    %v966 = vsel %vm256, %v229, 0
    %968 = vmatprep.subr.mxu0 0.0
    %969 = vmatpush1.xpose.msra.mxu0 0.0
    %970 = vmatprep.subr.mxu0 0.0
    %971 = vmatpush1.xpose.msra.mxu0 0.0
    %972 = vmatprep.subr.mxu0 0.0
    %973 = vmatpush1.xpose.msra.mxu0 0.0
    %974 = vmatprep.subr.mxu0 0.0
    %975 = vmatpush1.xpose.msra.mxu0 0.0
    %976 = vmatprep.subr.mxu0 0.0
    %977 = vmatpush1.xpose.msra.mxu0 0.0
    %978 = vmatprep.subr.mxu0 0.0
    %979 = vmatpush1.xpose.msra.mxu0 0.0
    %980 = vmatprep.subr.mxu0 0.0
    %981 = vmatpush1.xpose.msra.mxu0 0.0
    %982 = vmatprep.subr.mxu0 0.0
    %983 = vmatpush1.xpose.msra.mxu0 0.0
    %984 = vmatprep.subr.mxu0 0.0
    %985 = vmatpush1.xpose.msra.mxu0 0.0
    %986 = vmatprep.subr.mxu0 0.0
    %987 = vmatpush1.xpose.msra.mxu0 0.0
    %988 = vmatprep.subr.mxu0 0.0
    %989 = vmatpush1.xpose.msra.mxu0 0.0
    %990 = vmatprep.subr.mxu0 0.0
    %991 = vmatpush1.xpose.msra.mxu0 0.0
    %992 = vmatprep.subr.mxu0 0.0
    %993 = vmatpush1.xpose.msra.mxu0 0.0
    %994 = vmatprep.subr.mxu0 0.0
    %995 = vmatpush1.xpose.msra.mxu0 0.0
    %996 = vmatprep.subr.mxu0 0.0
    %997 = vmatpush1.xpose.msra.mxu0 0.0
    %998 = vmatprep.subr.mxu0 0.0
    %999 = vmatpush1.xpose.msra.mxu0 %v966
    %1000 = vmatprep.subr.mxu0 0.0
    %1001 = vmatpush2.xpose.msra.mxu0 0.0
    %1002 = vmatprep.subr.mxu0 0.0
    %1003 = vmatpush2.xpose.msra.mxu0 0.0
    %1004 = vmatprep.subr.mxu0 0.0
    %1005 = vmatpush2.xpose.msra.mxu0 0.0
    %1006 = vmatprep.subr.mxu0 0.0
    %1007 = vmatpush2.xpose.msra.mxu0 0.0
    %1008 = vmatprep.subr.mxu0 0.0
    %1009 = vmatpush2.xpose.msra.mxu0 0.0
    %1010 = vmatprep.subr.mxu0 0.0
    %1011 = vmatpush2.xpose.msra.mxu0 0.0
    %1012 = vmatprep.subr.mxu0 0.0
    %1013 = vmatpush2.xpose.msra.mxu0 0.0
    %1014 = vmatprep.subr.mxu0 0.0
    %1015 = vmatpush2.xpose.msra.mxu0 0.0
    %1016 = vmatprep.subr.mxu0 0.0
    %1017 = vmatpush2.xpose.msra.mxu0 0.0
    %1018 = vmatprep.subr.mxu0 0.0
    %1019 = vmatpush2.xpose.msra.mxu0 0.0
    %1020 = vmatprep.subr.mxu0 0.0
    %1021 = vmatpush2.xpose.msra.mxu0 0.0
    %1022 = vmatprep.subr.mxu0 0.0
    %1023 = vmatpush2.xpose.msra.mxu0 0.0
    %1024 = vmatprep.subr.mxu0 0.0
    %1025 = vmatpush2.xpose.msra.mxu0 0.0
    %1026 = vmatprep.subr.mxu0 0.0
    %1027 = vmatpush2.xpose.msra.mxu0 0.0
    %1028 = vmatprep.subr.mxu0 0.0
    %1029 = vmatpush2.xpose.msra.mxu0 0.0
    %1030 = vmatprep.subr.mxu0 0.0
    %1031 = vmatpush2.xpose.msra.mxu0 0.0
    %1032 = vmatprep.mubr.f32.mxu0 0.0
    %1033 = vmatmul.mubr.f32.gmra.mxu0 %v258
    %v1034 = vpop.f32.mrf.mxu0
    %v1035 = vadd.f32 %v250, %v1034
    %v1036 = vpop.f32.mrf.mxu0
    %1037 = vmatprep.mubr.f32.mxu0 0.0
    %1038 = vmatmul.mubr.f32.gmra.mxu0 %v261
    %v1039 = vpop.f32.mrf.mxu0
    %v1040 = vadd.f32 %v251, %v1039
    %v1041 = vpop.f32.mrf.mxu0
    %1042 = vdwg.mxu0
    %v1044 = vsel %vm256, %v230, 0
    %1046 = vmatprep.subr.mxu0 0.0
    %1047 = vmatpush1.xpose.msra.mxu0 0.0
    %1048 = vmatprep.subr.mxu0 0.0
    %1049 = vmatpush1.xpose.msra.mxu0 0.0
    %1050 = vmatprep.subr.mxu0 0.0
    %1051 = vmatpush1.xpose.msra.mxu0 0.0
    %1052 = vmatprep.subr.mxu0 0.0
    %1053 = vmatpush1.xpose.msra.mxu0 0.0
    %1054 = vmatprep.subr.mxu0 0.0
    %1055 = vmatpush1.xpose.msra.mxu0 0.0
    %1056 = vmatprep.subr.mxu0 0.0
    %1057 = vmatpush1.xpose.msra.mxu0 0.0
    %1058 = vmatprep.subr.mxu0 0.0
    %1059 = vmatpush1.xpose.msra.mxu0 0.0
    %1060 = vmatprep.subr.mxu0 0.0
    %1061 = vmatpush1.xpose.msra.mxu0 0.0
    %1062 = vmatprep.subr.mxu0 0.0
    %1063 = vmatpush1.xpose.msra.mxu0 0.0
    %1064 = vmatprep.subr.mxu0 0.0
    %1065 = vmatpush1.xpose.msra.mxu0 0.0
    %1066 = vmatprep.subr.mxu0 0.0
    %1067 = vmatpush1.xpose.msra.mxu0 0.0
    %1068 = vmatprep.subr.mxu0 0.0
    %1069 = vmatpush1.xpose.msra.mxu0 0.0
    %1070 = vmatprep.subr.mxu0 0.0
    %1071 = vmatpush1.xpose.msra.mxu0 0.0
    %1072 = vmatprep.subr.mxu0 0.0
    %1073 = vmatpush1.xpose.msra.mxu0 0.0
    %1074 = vmatprep.subr.mxu0 0.0
    %1075 = vmatpush1.xpose.msra.mxu0 0.0
    %1076 = vmatprep.subr.mxu0 0.0
    %1077 = vmatpush1.xpose.msra.mxu0 %v1044
    %1078 = vmatprep.subr.mxu0 0.0
    %1079 = vmatpush2.xpose.msra.mxu0 0.0
    %1080 = vmatprep.subr.mxu0 0.0
    %1081 = vmatpush2.xpose.msra.mxu0 0.0
    %1082 = vmatprep.subr.mxu0 0.0
    %1083 = vmatpush2.xpose.msra.mxu0 0.0
    %1084 = vmatprep.subr.mxu0 0.0
    %1085 = vmatpush2.xpose.msra.mxu0 0.0
    %1086 = vmatprep.subr.mxu0 0.0
    %1087 = vmatpush2.xpose.msra.mxu0 0.0
    %1088 = vmatprep.subr.mxu0 0.0
    %1089 = vmatpush2.xpose.msra.mxu0 0.0
    %1090 = vmatprep.subr.mxu0 0.0
    %1091 = vmatpush2.xpose.msra.mxu0 0.0
    %1092 = vmatprep.subr.mxu0 0.0
    %1093 = vmatpush2.xpose.msra.mxu0 0.0
    %1094 = vmatprep.subr.mxu0 0.0
    %1095 = vmatpush2.xpose.msra.mxu0 0.0
    %1096 = vmatprep.subr.mxu0 0.0
    %1097 = vmatpush2.xpose.msra.mxu0 0.0
    %1098 = vmatprep.subr.mxu0 0.0
    %1099 = vmatpush2.xpose.msra.mxu0 0.0
    %1100 = vmatprep.subr.mxu0 0.0
    %1101 = vmatpush2.xpose.msra.mxu0 0.0
    %1102 = vmatprep.subr.mxu0 0.0
    %1103 = vmatpush2.xpose.msra.mxu0 0.0
    %1104 = vmatprep.subr.mxu0 0.0
    %1105 = vmatpush2.xpose.msra.mxu0 0.0
    %1106 = vmatprep.subr.mxu0 0.0
    %1107 = vmatpush2.xpose.msra.mxu0 0.0
    %1108 = vmatprep.subr.mxu0 0.0
    %1109 = vmatpush2.xpose.msra.mxu0 0.0
    %1110 = vmatprep.mubr.f32.mxu0 0.0
    %1111 = vmatmul.mubr.f32.gmra.mxu0 %v258
    %v1112 = vpop.f32.mrf.mxu0
    %v1113 = vadd.f32 %v252, %v1112
    %v1114 = vpop.f32.mrf.mxu0
    %1115 = vmatprep.mubr.f32.mxu0 0.0
    %1116 = vmatmul.mubr.f32.gmra.mxu0 %v261
    %v1117 = vpop.f32.mrf.mxu0
    %v1118 = vadd.f32 %v253, %v1117
    %v1119 = vpop.f32.mrf.mxu0
    %1120 = vdwg.mxu0
    %v1122 = vsel %vm256, %v231, 0
    %1124 = vmatprep.subr.mxu0 0.0
    %1125 = vmatpush1.xpose.msra.mxu0 0.0
    %1126 = vmatprep.subr.mxu0 0.0
    %1127 = vmatpush1.xpose.msra.mxu0 0.0
    %1128 = vmatprep.subr.mxu0 0.0
    %1129 = vmatpush1.xpose.msra.mxu0 0.0
    %1130 = vmatprep.subr.mxu0 0.0
    %1131 = vmatpush1.xpose.msra.mxu0 0.0
    %1132 = vmatprep.subr.mxu0 0.0
    %1133 = vmatpush1.xpose.msra.mxu0 0.0
    %1134 = vmatprep.subr.mxu0 0.0
    %1135 = vmatpush1.xpose.msra.mxu0 0.0
    %1136 = vmatprep.subr.mxu0 0.0
    %1137 = vmatpush1.xpose.msra.mxu0 0.0
    %1138 = vmatprep.subr.mxu0 0.0
    %1139 = vmatpush1.xpose.msra.mxu0 0.0
    %1140 = vmatprep.subr.mxu0 0.0
    %1141 = vmatpush1.xpose.msra.mxu0 0.0
    %1142 = vmatprep.subr.mxu0 0.0
    %1143 = vmatpush1.xpose.msra.mxu0 0.0
    %1144 = vmatprep.subr.mxu0 0.0
    %1145 = vmatpush1.xpose.msra.mxu0 0.0
    %1146 = vmatprep.subr.mxu0 0.0
    %1147 = vmatpush1.xpose.msra.mxu0 0.0
    %1148 = vmatprep.subr.mxu0 0.0
    %1149 = vmatpush1.xpose.msra.mxu0 0.0
    %1150 = vmatprep.subr.mxu0 0.0
    %1151 = vmatpush1.xpose.msra.mxu0 0.0
    %1152 = vmatprep.subr.mxu0 0.0
    %1153 = vmatpush1.xpose.msra.mxu0 0.0
    %1154 = vmatprep.subr.mxu0 0.0
    %1155 = vmatpush1.xpose.msra.mxu0 %v1122
    %1156 = vmatprep.subr.mxu0 0.0
    %1157 = vmatpush2.xpose.msra.mxu0 0.0
    %1158 = vmatprep.subr.mxu0 0.0
    %1159 = vmatpush2.xpose.msra.mxu0 0.0
    %1160 = vmatprep.subr.mxu0 0.0
    %1161 = vmatpush2.xpose.msra.mxu0 0.0
    %1162 = vmatprep.subr.mxu0 0.0
    %1163 = vmatpush2.xpose.msra.mxu0 0.0
    %1164 = vmatprep.subr.mxu0 0.0
    %1165 = vmatpush2.xpose.msra.mxu0 0.0
    %1166 = vmatprep.subr.mxu0 0.0
    %1167 = vmatpush2.xpose.msra.mxu0 0.0
    %1168 = vmatprep.subr.mxu0 0.0
    %1169 = vmatpush2.xpose.msra.mxu0 0.0
    %1170 = vmatprep.subr.mxu0 0.0
    %1171 = vmatpush2.xpose.msra.mxu0 0.0
    %1172 = vmatprep.subr.mxu0 0.0
    %1173 = vmatpush2.xpose.msra.mxu0 0.0
    %1174 = vmatprep.subr.mxu0 0.0
    %1175 = vmatpush2.xpose.msra.mxu0 0.0
    %1176 = vmatprep.subr.mxu0 0.0
    %1177 = vmatpush2.xpose.msra.mxu0 0.0
    %1178 = vmatprep.subr.mxu0 0.0
    %1179 = vmatpush2.xpose.msra.mxu0 0.0
    %1180 = vmatprep.subr.mxu0 0.0
    %1181 = vmatpush2.xpose.msra.mxu0 0.0
    %1182 = vmatprep.subr.mxu0 0.0
    %1183 = vmatpush2.xpose.msra.mxu0 0.0
    %1184 = vmatprep.subr.mxu0 0.0
    %1185 = vmatpush2.xpose.msra.mxu0 0.0
    %1186 = vmatprep.subr.mxu0 0.0
    %1187 = vmatpush2.xpose.msra.mxu0 0.0
    %1188 = vmatprep.mubr.f32.mxu0 0.0
    %1189 = vmatmul.mubr.f32.gmra.mxu0 %v258
    %v1190 = vpop.f32.mrf.mxu0
    %v1191 = vadd.f32 %v254, %v1190
    %v1192 = vpop.f32.mrf.mxu0
    %1193 = vmatprep.mubr.f32.mxu0 0.0
    %1194 = vmatmul.mubr.f32.gmra.mxu0 %v261
    %v1195 = vpop.f32.mrf.mxu0
    %v1196 = vadd.f32 %v255, %v1195
    %v1197 = vpop.f32.mrf.mxu0
    %1198 = vdwg.mxu0
    %v1200 = vsel %vm22, %v333, 0
    %v1203 = vsel %vm22, %v338, 0
    %v1206 = vsel %vm22, %v645, 0
    %v1209 = vsel %vm22, %v650, 0
    %1211 = vmatprep.subr.mxu0 0.0
    %1212 = vmatpush1.xpose.msra.mxu0 0.0
    %1213 = vmatprep.subr.mxu0 0.0
    %1214 = vmatpush1.xpose.msra.mxu0 0.0
    %1215 = vmatprep.subr.mxu0 0.0
    %1216 = vmatpush1.xpose.msra.mxu0 0.0
    %1217 = vmatprep.subr.mxu0 0.0
    %1218 = vmatpush1.xpose.msra.mxu0 0.0
    %1219 = vmatprep.subr.mxu0 0.0
    %1220 = vmatpush1.xpose.msra.mxu0 0.0
    %1221 = vmatprep.subr.mxu0 0.0
    %1222 = vmatpush1.xpose.msra.mxu0 0.0
    %1223 = vmatprep.subr.mxu0 0.0
    %1224 = vmatpush1.xpose.msra.mxu0 0.0
    %1225 = vmatprep.subr.mxu0 0.0
    %1226 = vmatpush1.xpose.msra.mxu0 0.0
    %1227 = vmatprep.subr.mxu0 0.0
    %1228 = vmatpush1.xpose.msra.mxu0 0.0
    %1229 = vmatprep.subr.mxu0 0.0
    %1230 = vmatpush1.xpose.msra.mxu0 0.0
    %1231 = vmatprep.subr.mxu0 0.0
    %1232 = vmatpush1.xpose.msra.mxu0 0.0
    %1233 = vmatprep.subr.mxu0 0.0
    %1234 = vmatpush1.xpose.msra.mxu0 0.0
    %1235 = vmatprep.subr.mxu0 0.0
    %1236 = vmatpush1.xpose.msra.mxu0 0.0
    %1237 = vmatprep.subr.mxu0 0.0
    %1238 = vmatpush1.xpose.msra.mxu0 0.0
    %1239 = vmatprep.subr.mxu0 0.0
    %1240 = vmatpush1.xpose.msra.mxu0 %v1209
    %1241 = vmatprep.subr.mxu0 0.0
    %1242 = vmatpush1.xpose.msra.mxu0 %v1206
    %1243 = vmatprep.subr.mxu0 0.0
    %1244 = vmatpush2.xpose.msra.mxu0 0.0
    %1245 = vmatprep.subr.mxu0 0.0
    %1246 = vmatpush2.xpose.msra.mxu0 0.0
    %1247 = vmatprep.subr.mxu0 0.0
    %1248 = vmatpush2.xpose.msra.mxu0 0.0
    %1249 = vmatprep.subr.mxu0 0.0
    %1250 = vmatpush2.xpose.msra.mxu0 0.0
    %1251 = vmatprep.subr.mxu0 0.0
    %1252 = vmatpush2.xpose.msra.mxu0 0.0
    %1253 = vmatprep.subr.mxu0 0.0
    %1254 = vmatpush2.xpose.msra.mxu0 0.0
    %1255 = vmatprep.subr.mxu0 0.0
    %1256 = vmatpush2.xpose.msra.mxu0 0.0
    %1257 = vmatprep.subr.mxu0 0.0
    %1258 = vmatpush2.xpose.msra.mxu0 0.0
    %1259 = vmatprep.subr.mxu0 0.0
    %1260 = vmatpush2.xpose.msra.mxu0 0.0
    %1261 = vmatprep.subr.mxu0 0.0
    %1262 = vmatpush2.xpose.msra.mxu0 0.0
    %1263 = vmatprep.subr.mxu0 0.0
    %1264 = vmatpush2.xpose.msra.mxu0 0.0
    %1265 = vmatprep.subr.mxu0 0.0
    %1266 = vmatpush2.xpose.msra.mxu0 0.0
    %1267 = vmatprep.subr.mxu0 0.0
    %1268 = vmatpush2.xpose.msra.mxu0 0.0
    %1269 = vmatprep.subr.mxu0 0.0
    %1270 = vmatpush2.xpose.msra.mxu0 0.0
    %1271 = vmatprep.subr.mxu0 0.0
    %1272 = vmatpush2.xpose.msra.mxu0 0.0
    %1273 = vmatprep.subr.mxu0 0.0
    %1274 = vmatpush2.xpose.msra.mxu0 0.0
    %1275 = vmatprep.mubr.f32.mxu0 0.0
    %1276 = vmatmul.mubr.f32.gmra.mxu0 %v1200
    %v1277 = vpop.f32.mrf.mxu0
    %v1278 = vadd.f32 0.0, %v1277
    %v1279 = vpop.f32.mrf.mxu0
    %1280 = vmatprep.mubr.f32.mxu0 0.0
    %1281 = vmatmul.mubr.f32.gmra.mxu0 %v1203
    %v1282 = vpop.f32.mrf.mxu0
    %v1283 = vadd.f32 0.0, %v1282
    %v1284 = vpop.f32.mrf.mxu0
    %1285 = vdwg.mxu0
    %v1287 = vsel %vm22, %v411, 0
    %v1290 = vsel %vm22, %v416, 0
    %v1293 = vsel %vm22, %v723, 0
    %v1296 = vsel %vm22, %v728, 0
    %1298 = vmatprep.subr.mxu0 0.0
    %1299 = vmatpush1.xpose.msra.mxu0 0.0
    %1300 = vmatprep.subr.mxu0 0.0
    %1301 = vmatpush1.xpose.msra.mxu0 0.0
    %1302 = vmatprep.subr.mxu0 0.0
    %1303 = vmatpush1.xpose.msra.mxu0 0.0
    %1304 = vmatprep.subr.mxu0 0.0
    %1305 = vmatpush1.xpose.msra.mxu0 0.0
    %1306 = vmatprep.subr.mxu0 0.0
    %1307 = vmatpush1.xpose.msra.mxu0 0.0
    %1308 = vmatprep.subr.mxu0 0.0
    %1309 = vmatpush1.xpose.msra.mxu0 0.0
    %1310 = vmatprep.subr.mxu0 0.0
    %1311 = vmatpush1.xpose.msra.mxu0 0.0
    %1312 = vmatprep.subr.mxu0 0.0
    %1313 = vmatpush1.xpose.msra.mxu0 0.0
    %1314 = vmatprep.subr.mxu0 0.0
    %1315 = vmatpush1.xpose.msra.mxu0 0.0
    %1316 = vmatprep.subr.mxu0 0.0
    %1317 = vmatpush1.xpose.msra.mxu0 0.0
    %1318 = vmatprep.subr.mxu0 0.0
    %1319 = vmatpush1.xpose.msra.mxu0 0.0
    %1320 = vmatprep.subr.mxu0 0.0
    %1321 = vmatpush1.xpose.msra.mxu0 0.0
    %1322 = vmatprep.subr.mxu0 0.0
    %1323 = vmatpush1.xpose.msra.mxu0 0.0
    %1324 = vmatprep.subr.mxu0 0.0
    %1325 = vmatpush1.xpose.msra.mxu0 0.0
    %1326 = vmatprep.subr.mxu0 0.0
    %1327 = vmatpush1.xpose.msra.mxu0 %v1296
    %1328 = vmatprep.subr.mxu0 0.0
    %1329 = vmatpush1.xpose.msra.mxu0 %v1293
    %1330 = vmatprep.subr.mxu0 0.0
    %1331 = vmatpush2.xpose.msra.mxu0 0.0
    %1332 = vmatprep.subr.mxu0 0.0
    %1333 = vmatpush2.xpose.msra.mxu0 0.0
    %1334 = vmatprep.subr.mxu0 0.0
    %1335 = vmatpush2.xpose.msra.mxu0 0.0
    %1336 = vmatprep.subr.mxu0 0.0
    %1337 = vmatpush2.xpose.msra.mxu0 0.0
    %1338 = vmatprep.subr.mxu0 0.0
    %1339 = vmatpush2.xpose.msra.mxu0 0.0
    %1340 = vmatprep.subr.mxu0 0.0
    %1341 = vmatpush2.xpose.msra.mxu0 0.0
    %1342 = vmatprep.subr.mxu0 0.0
    %1343 = vmatpush2.xpose.msra.mxu0 0.0
    %1344 = vmatprep.subr.mxu0 0.0
    %1345 = vmatpush2.xpose.msra.mxu0 0.0
    %1346 = vmatprep.subr.mxu0 0.0
    %1347 = vmatpush2.xpose.msra.mxu0 0.0
    %1348 = vmatprep.subr.mxu0 0.0
    %1349 = vmatpush2.xpose.msra.mxu0 0.0
    %1350 = vmatprep.subr.mxu0 0.0
    %1351 = vmatpush2.xpose.msra.mxu0 0.0
    %1352 = vmatprep.subr.mxu0 0.0
    %1353 = vmatpush2.xpose.msra.mxu0 0.0
    %1354 = vmatprep.subr.mxu0 0.0
    %1355 = vmatpush2.xpose.msra.mxu0 0.0
    %1356 = vmatprep.subr.mxu0 0.0
    %1357 = vmatpush2.xpose.msra.mxu0 0.0
    %1358 = vmatprep.subr.mxu0 0.0
    %1359 = vmatpush2.xpose.msra.mxu0 0.0
    %1360 = vmatprep.subr.mxu0 0.0
    %1361 = vmatpush2.xpose.msra.mxu0 0.0
    %1362 = vmatprep.mubr.f32.mxu0 0.0
    %1363 = vmatmul.mubr.f32.gmra.mxu0 %v1287
    %v1364 = vpop.f32.mrf.mxu0
    %v1365 = vadd.f32 0.0, %v1364
    %v1366 = vpop.f32.mrf.mxu0
    %1367 = vmatprep.mubr.f32.mxu0 0.0
    %1368 = vmatmul.mubr.f32.gmra.mxu0 %v1290
    %v1369 = vpop.f32.mrf.mxu0
    %v1370 = vadd.f32 0.0, %v1369
    %v1371 = vpop.f32.mrf.mxu0
    %1372 = vdwg.mxu0
    %v1374 = vsel %vm22, %v489, 0
    %v1377 = vsel %vm22, %v494, 0
    %v1380 = vsel %vm22, %v801, 0
    %v1383 = vsel %vm22, %v806, 0
    %1385 = vmatprep.subr.mxu0 0.0
    %1386 = vmatpush1.xpose.msra.mxu0 0.0
    %1387 = vmatprep.subr.mxu0 0.0
    %1388 = vmatpush1.xpose.msra.mxu0 0.0
    %1389 = vmatprep.subr.mxu0 0.0
    %1390 = vmatpush1.xpose.msra.mxu0 0.0
    %1391 = vmatprep.subr.mxu0 0.0
    %1392 = vmatpush1.xpose.msra.mxu0 0.0
    %1393 = vmatprep.subr.mxu0 0.0
    %1394 = vmatpush1.xpose.msra.mxu0 0.0
    %1395 = vmatprep.subr.mxu0 0.0
    %1396 = vmatpush1.xpose.msra.mxu0 0.0
    %1397 = vmatprep.subr.mxu0 0.0
    %1398 = vmatpush1.xpose.msra.mxu0 0.0
    %1399 = vmatprep.subr.mxu0 0.0
    %1400 = vmatpush1.xpose.msra.mxu0 0.0
    %1401 = vmatprep.subr.mxu0 0.0
    %1402 = vmatpush1.xpose.msra.mxu0 0.0
    %1403 = vmatprep.subr.mxu0 0.0
    %1404 = vmatpush1.xpose.msra.mxu0 0.0
    %1405 = vmatprep.subr.mxu0 0.0
    %1406 = vmatpush1.xpose.msra.mxu0 0.0
    %1407 = vmatprep.subr.mxu0 0.0
    %1408 = vmatpush1.xpose.msra.mxu0 0.0
    %1409 = vmatprep.subr.mxu0 0.0
    %1410 = vmatpush1.xpose.msra.mxu0 0.0
    %1411 = vmatprep.subr.mxu0 0.0
    %1412 = vmatpush1.xpose.msra.mxu0 0.0
    %1413 = vmatprep.subr.mxu0 0.0
    %1414 = vmatpush1.xpose.msra.mxu0 %v1383
    %1415 = vmatprep.subr.mxu0 0.0
    %1416 = vmatpush1.xpose.msra.mxu0 %v1380
    %1417 = vmatprep.subr.mxu0 0.0
    %1418 = vmatpush2.xpose.msra.mxu0 0.0
    %1419 = vmatprep.subr.mxu0 0.0
    %1420 = vmatpush2.xpose.msra.mxu0 0.0
    %1421 = vmatprep.subr.mxu0 0.0
    %1422 = vmatpush2.xpose.msra.mxu0 0.0
    %1423 = vmatprep.subr.mxu0 0.0
    %1424 = vmatpush2.xpose.msra.mxu0 0.0
    %1425 = vmatprep.subr.mxu0 0.0
    %1426 = vmatpush2.xpose.msra.mxu0 0.0
    %1427 = vmatprep.subr.mxu0 0.0
    %1428 = vmatpush2.xpose.msra.mxu0 0.0
    %1429 = vmatprep.subr.mxu0 0.0
    %1430 = vmatpush2.xpose.msra.mxu0 0.0
    %1431 = vmatprep.subr.mxu0 0.0
    %1432 = vmatpush2.xpose.msra.mxu0 0.0
    %1433 = vmatprep.subr.mxu0 0.0
    %1434 = vmatpush2.xpose.msra.mxu0 0.0
    %1435 = vmatprep.subr.mxu0 0.0
    %1436 = vmatpush2.xpose.msra.mxu0 0.0
    %1437 = vmatprep.subr.mxu0 0.0
    %1438 = vmatpush2.xpose.msra.mxu0 0.0
    %1439 = vmatprep.subr.mxu0 0.0
    %1440 = vmatpush2.xpose.msra.mxu0 0.0
    %1441 = vmatprep.subr.mxu0 0.0
    %1442 = vmatpush2.xpose.msra.mxu0 0.0
    %1443 = vmatprep.subr.mxu0 0.0
    %1444 = vmatpush2.xpose.msra.mxu0 0.0
    %1445 = vmatprep.subr.mxu0 0.0
    %1446 = vmatpush2.xpose.msra.mxu0 0.0
    %1447 = vmatprep.subr.mxu0 0.0
    %1448 = vmatpush2.xpose.msra.mxu0 0.0
    %1449 = vmatprep.mubr.f32.mxu0 0.0
    %1450 = vmatmul.mubr.f32.gmra.mxu0 %v1374
    %v1451 = vpop.f32.mrf.mxu0
    %v1452 = vadd.f32 0.0, %v1451
    %v1453 = vpop.f32.mrf.mxu0
    %1454 = vmatprep.mubr.f32.mxu0 0.0
    %1455 = vmatmul.mubr.f32.gmra.mxu0 %v1377
    %v1456 = vpop.f32.mrf.mxu0
    %v1457 = vadd.f32 0.0, %v1456
    %v1458 = vpop.f32.mrf.mxu0
    %1459 = vdwg.mxu0
    %v1461 = vsel %vm22, %v567, 0
    %v1464 = vsel %vm22, %v572, 0
    %v1467 = vsel %vm22, %v879, 0
    %v1470 = vsel %vm22, %v884, 0
    %1472 = vmatprep.subr.mxu0 0.0
    %1473 = vmatpush1.xpose.msra.mxu0 0.0
    %1474 = vmatprep.subr.mxu0 0.0
    %1475 = vmatpush1.xpose.msra.mxu0 0.0
    %1476 = vmatprep.subr.mxu0 0.0
    %1477 = vmatpush1.xpose.msra.mxu0 0.0
    %1478 = vmatprep.subr.mxu0 0.0
    %1479 = vmatpush1.xpose.msra.mxu0 0.0
    %1480 = vmatprep.subr.mxu0 0.0
    %1481 = vmatpush1.xpose.msra.mxu0 0.0
    %1482 = vmatprep.subr.mxu0 0.0
    %1483 = vmatpush1.xpose.msra.mxu0 0.0
    %1484 = vmatprep.subr.mxu0 0.0
    %1485 = vmatpush1.xpose.msra.mxu0 0.0
    %1486 = vmatprep.subr.mxu0 0.0
    %1487 = vmatpush1.xpose.msra.mxu0 0.0
    %1488 = vmatprep.subr.mxu0 0.0
    %1489 = vmatpush1.xpose.msra.mxu0 0.0
    %1490 = vmatprep.subr.mxu0 0.0
    %1491 = vmatpush1.xpose.msra.mxu0 0.0
    %1492 = vmatprep.subr.mxu0 0.0
    %1493 = vmatpush1.xpose.msra.mxu0 0.0
    %1494 = vmatprep.subr.mxu0 0.0
    %1495 = vmatpush1.xpose.msra.mxu0 0.0
    %1496 = vmatprep.subr.mxu0 0.0
    %1497 = vmatpush1.xpose.msra.mxu0 0.0
    %1498 = vmatprep.subr.mxu0 0.0
    %1499 = vmatpush1.xpose.msra.mxu0 0.0
    %1500 = vmatprep.subr.mxu0 0.0
    %1501 = vmatpush1.xpose.msra.mxu0 %v1470
    %1502 = vmatprep.subr.mxu0 0.0
    %1503 = vmatpush1.xpose.msra.mxu0 %v1467
    %1504 = vmatprep.subr.mxu0 0.0
    %1505 = vmatpush2.xpose.msra.mxu0 0.0
    %1506 = vmatprep.subr.mxu0 0.0
    %1507 = vmatpush2.xpose.msra.mxu0 0.0
    %1508 = vmatprep.subr.mxu0 0.0
    %1509 = vmatpush2.xpose.msra.mxu0 0.0
    %1510 = vmatprep.subr.mxu0 0.0
    %1511 = vmatpush2.xpose.msra.mxu0 0.0
    %1512 = vmatprep.subr.mxu0 0.0
    %1513 = vmatpush2.xpose.msra.mxu0 0.0
    %1514 = vmatprep.subr.mxu0 0.0
    %1515 = vmatpush2.xpose.msra.mxu0 0.0
    %1516 = vmatprep.subr.mxu0 0.0
    %1517 = vmatpush2.xpose.msra.mxu0 0.0
    %1518 = vmatprep.subr.mxu0 0.0
    %1519 = vmatpush2.xpose.msra.mxu0 0.0
    %1520 = vmatprep.subr.mxu0 0.0
    %1521 = vmatpush2.xpose.msra.mxu0 0.0
    %1522 = vmatprep.subr.mxu0 0.0
    %1523 = vmatpush2.xpose.msra.mxu0 0.0
    %1524 = vmatprep.subr.mxu0 0.0
    %1525 = vmatpush2.xpose.msra.mxu0 0.0
    %1526 = vmatprep.subr.mxu0 0.0
    %1527 = vmatpush2.xpose.msra.mxu0 0.0
    %1528 = vmatprep.subr.mxu0 0.0
    %1529 = vmatpush2.xpose.msra.mxu0 0.0
    %1530 = vmatprep.subr.mxu0 0.0
    %1531 = vmatpush2.xpose.msra.mxu0 0.0
    %1532 = vmatprep.subr.mxu0 0.0
    %1533 = vmatpush2.xpose.msra.mxu0 0.0
    %1534 = vmatprep.subr.mxu0 0.0
    %1535 = vmatpush2.xpose.msra.mxu0 0.0
    %1536 = vmatprep.mubr.f32.mxu0 0.0
    %1537 = vmatmul.mubr.f32.gmra.mxu0 %v1461
    %v1538 = vpop.f32.mrf.mxu0
    %v1539 = vadd.f32 0.0, %v1538
    %v1540 = vpop.f32.mrf.mxu0
    %1541 = vmatprep.mubr.f32.mxu0 0.0
    %1542 = vmatmul.mubr.f32.gmra.mxu0 %v1464
    %v1543 = vpop.f32.mrf.mxu0
    %v1544 = vadd.f32 0.0, %v1543
    %v1545 = vpop.f32.mrf.mxu0
    %1546 = vdwg.mxu0
    %v1547 = vmul.f32 %v1278, 0.35355338
    %v1548 = vmul.f32 %v1283, 0.35355338
    %v1549 = vmul.f32 %v1365, 0.35355338
    %v1550 = vmul.f32 %v1370, 0.35355338
    %v1551 = vmul.f32 %v1452, 0.35355338
    %v1552 = vmul.f32 %v1457, 0.35355338
    %v1553 = vmul.f32 %v1539, 0.35355338
    %v1554 = vmul.f32 %v1544, 0.35355338
    %v1555 = vadd.f32 %v1547, %v218
    %v1556 = vadd.f32 %v1548, %v219
    %v1557 = vadd.f32 %v1549, %v218
    %v1558 = vadd.f32 %v1550, %v219
    %v1559 = vadd.f32 %v1551, %v218
    %v1560 = vadd.f32 %v1552, %v219
    %v1561 = vadd.f32 %v1553, %v218
    %v1562 = vadd.f32 %v1554, %v219
    %vm1563 = vcmask 130048
    %v1564 = vsel %vm1563, %v1555, -inf
    %1565 = vmax.xlane.f32.xlu0 %v1564
    %v1566 = vpop.xlane.xlu0 %1565
    %v1567 = vsel %vm1563, %v1556, -inf
    %1568 = vmax.xlane.f32.xlu0 %v1567
    %v1569 = vpop.xlane.xlu0 %1568
    %v1570 = vsel %vm1563, %v1557, -inf
    %1571 = vmax.xlane.f32.xlu0 %v1570
    %v1572 = vpop.xlane.xlu0 %1571
    %v1573 = vsel %vm1563, %v1558, -inf
    %1574 = vmax.xlane.f32.xlu0 %v1573
    %v1575 = vpop.xlane.xlu0 %1574
    %v1576 = vsel %vm1563, %v1559, -inf
    %1577 = vmax.xlane.f32.xlu0 %v1576
    %v1578 = vpop.xlane.xlu0 %1577
    %v1579 = vsel %vm1563, %v1560, -inf
    %1580 = vmax.xlane.f32.xlu0 %v1579
    %v1581 = vpop.xlane.xlu0 %1580
    %v1582 = vsel %vm1563, %v1561, -inf
    %1583 = vmax.xlane.f32.xlu0 %v1582
    %v1584 = vpop.xlane.xlu0 %1583
    %v1585 = vsel %vm1563, %v1562, -inf
    %1586 = vmax.xlane.f32.xlu0 %v1585
    %v1587 = vpop.xlane.xlu0 %1586
    %v1588 = vsub.f32 %v1555, %v1566
    %v1589 = vsub.f32 %v1556, %v1569
    %v1590 = vsub.f32 %v1557, %v1572
    %v1591 = vsub.f32 %v1558, %v1575
    %v1592 = vsub.f32 %v1559, %v1578
    %v1593 = vsub.f32 %v1560, %v1581
    %v1594 = vsub.f32 %v1561, %v1584
    %v1595 = vsub.f32 %v1562, %v1587
    %v1596 = vmul.f32 %v1588, 1.442695
    %v1597 = vpow.pop %v1596
    %v1598 = vmul.f32 %v1589, 1.442695
    %v1599 = vpow.pop %v1598
    %v1600 = vmul.f32 %v1590, 1.442695
    %v1601 = vpow.pop %v1600
    %v1602 = vmul.f32 %v1591, 1.442695
    %v1603 = vpow.pop %v1602
    %v1604 = vmul.f32 %v1592, 1.442695
    %v1605 = vpow.pop %v1604
    %v1606 = vmul.f32 %v1593, 1.442695
    %v1607 = vpow.pop %v1606
    %v1608 = vmul.f32 %v1594, 1.442695
    %v1609 = vpow.pop %v1608
    %v1610 = vmul.f32 %v1595, 1.442695
    %v1611 = vpow.pop %v1610
    %v1612 = vsel %vm1563, %v1597, 0.0
    %1613 = vadd.xlane.f32.xlu0 %v1612
    %v1614 = vpop.xlane.xlu0 %1613
    %v1615 = vsel %vm1563, %v1599, 0.0
    %1616 = vadd.xlane.f32.xlu0 %v1615
    %v1617 = vpop.xlane.xlu0 %1616
    %v1618 = vsel %vm1563, %v1601, 0.0
    %1619 = vadd.xlane.f32.xlu0 %v1618
    %v1620 = vpop.xlane.xlu0 %1619
    %v1621 = vsel %vm1563, %v1603, 0.0
    %1622 = vadd.xlane.f32.xlu0 %v1621
    %v1623 = vpop.xlane.xlu0 %1622
    %v1624 = vsel %vm1563, %v1605, 0.0
    %1625 = vadd.xlane.f32.xlu0 %v1624
    %v1626 = vpop.xlane.xlu0 %1625
    %v1627 = vsel %vm1563, %v1607, 0.0
    %1628 = vadd.xlane.f32.xlu0 %v1627
    %v1629 = vpop.xlane.xlu0 %1628
    %v1630 = vsel %vm1563, %v1609, 0.0
    %1631 = vadd.xlane.f32.xlu0 %v1630
    %v1632 = vpop.xlane.xlu0 %1631
    %v1633 = vsel %vm1563, %v1611, 0.0
    %1634 = vadd.xlane.f32.xlu0 %v1633
    %v1635 = vpop.xlane.xlu0 %1634
    %v1636 = vrcp.pop %v1614
    %v1637 = vmul.f32 %v1597, %v1636
    %v1638 = vrcp.pop %v1617
    %v1639 = vmul.f32 %v1599, %v1638
    %v1640 = vrcp.pop %v1620
    %v1641 = vmul.f32 %v1601, %v1640
    %v1642 = vrcp.pop %v1623
    %v1643 = vmul.f32 %v1603, %v1642
    %v1644 = vrcp.pop %v1626
    %v1645 = vmul.f32 %v1605, %v1644
    %v1646 = vrcp.pop %v1629
    %v1647 = vmul.f32 %v1607, %v1646
    %v1648 = vrcp.pop %v1632
    %v1649 = vmul.f32 %v1609, %v1648
    %v1650 = vrcp.pop %v1635
    %v1651 = vmul.f32 %v1611, %v1650
    %v1653 = vsel %vm1563, %v1637, 0
    %v1656 = vsel %vm1563, %v1639, 0
    %1658 = vmatprep.subr.mxu0 0.0
    %1659 = vmatpush1.msra.mxu0 0.0
    %1660 = vmatprep.subr.mxu0 0.0
    %1661 = vmatpush1.msra.mxu0 0.0
    %1662 = vmatprep.subr.mxu0 0.0
    %1663 = vmatpush1.msra.mxu0 0.0
    %1664 = vmatprep.subr.mxu0 0.0
    %1665 = vmatpush1.msra.mxu0 0.0
    %1666 = vmatprep.subr.mxu0 0.0
    %1667 = vmatpush1.msra.mxu0 0.0
    %1668 = vmatprep.subr.mxu0 0.0
    %1669 = vmatpush1.msra.mxu0 0.0
    %1670 = vmatprep.subr.mxu0 0.0
    %1671 = vmatpush1.msra.mxu0 0.0
    %1672 = vmatprep.subr.mxu0 0.0
    %1673 = vmatpush1.msra.mxu0 0.0
    %1674 = vmatprep.subr.mxu0 0.0
    %1675 = vmatpush1.msra.mxu0 0.0
    %1676 = vmatprep.subr.mxu0 0.0
    %1677 = vmatpush1.msra.mxu0 0.0
    %1678 = vmatprep.subr.mxu0 0.0
    %1679 = vmatpush1.msra.mxu0 0.0
    %1680 = vmatprep.subr.mxu0 0.0
    %1681 = vmatpush1.msra.mxu0 0.0
    %1682 = vmatprep.subr.mxu0 0.0
    %1683 = vmatpush1.msra.mxu0 0.0
    %1684 = vmatprep.subr.mxu0 0.0
    %1685 = vmatpush1.msra.mxu0 0.0
    %1686 = vmatprep.subr.mxu0 0.0
    %1687 = vmatpush1.msra.mxu0 %v962
    %1688 = vmatprep.subr.mxu0 0.0
    %1689 = vmatpush1.msra.mxu0 %v957
    %1690 = vmatprep.subr.mxu0 0.0
    %1691 = vmatpush2.msra.mxu0 0.0
    %1692 = vmatprep.subr.mxu0 0.0
    %1693 = vmatpush2.msra.mxu0 0.0
    %1694 = vmatprep.subr.mxu0 0.0
    %1695 = vmatpush2.msra.mxu0 0.0
    %1696 = vmatprep.subr.mxu0 0.0
    %1697 = vmatpush2.msra.mxu0 0.0
    %1698 = vmatprep.subr.mxu0 0.0
    %1699 = vmatpush2.msra.mxu0 0.0
    %1700 = vmatprep.subr.mxu0 0.0
    %1701 = vmatpush2.msra.mxu0 0.0
    %1702 = vmatprep.subr.mxu0 0.0
    %1703 = vmatpush2.msra.mxu0 0.0
    %1704 = vmatprep.subr.mxu0 0.0
    %1705 = vmatpush2.msra.mxu0 0.0
    %1706 = vmatprep.subr.mxu0 0.0
    %1707 = vmatpush2.msra.mxu0 0.0
    %1708 = vmatprep.subr.mxu0 0.0
    %1709 = vmatpush2.msra.mxu0 0.0
    %1710 = vmatprep.subr.mxu0 0.0
    %1711 = vmatpush2.msra.mxu0 0.0
    %1712 = vmatprep.subr.mxu0 0.0
    %1713 = vmatpush2.msra.mxu0 0.0
    %1714 = vmatprep.subr.mxu0 0.0
    %1715 = vmatpush2.msra.mxu0 0.0
    %1716 = vmatprep.subr.mxu0 0.0
    %1717 = vmatpush2.msra.mxu0 0.0
    %1718 = vmatprep.subr.mxu0 0.0
    %1719 = vmatpush2.msra.mxu0 0.0
    %1720 = vmatprep.subr.mxu0 0.0
    %1721 = vmatpush2.msra.mxu0 0.0
    %1722 = vmatprep.mubr.f32.mxu0 0.0
    %1723 = vmatmul.mubr.f32.gmra.mxu0 %v1653
    %v1724 = vpop.f32.mrf.mxu0
    %v1725 = vadd.f32 0.0, %v1724
    %v1726 = vpop.f32.mrf.mxu0
    %1727 = vmatprep.mubr.f32.mxu0 0.0
    %1728 = vmatmul.mubr.f32.gmra.mxu0 %v1656
    %v1729 = vpop.f32.mrf.mxu0
    %v1730 = vadd.f32 0.0, %v1729
    %v1731 = vpop.f32.mrf.mxu0
    %1732 = vdwg.mxu0
    %v1734 = vsel %vm1563, %v1641, 0
    %v1737 = vsel %vm1563, %v1643, 0
    %1739 = vmatprep.subr.mxu0 0.0
    %1740 = vmatpush1.msra.mxu0 0.0
    %1741 = vmatprep.subr.mxu0 0.0
    %1742 = vmatpush1.msra.mxu0 0.0
    %1743 = vmatprep.subr.mxu0 0.0
    %1744 = vmatpush1.msra.mxu0 0.0
    %1745 = vmatprep.subr.mxu0 0.0
    %1746 = vmatpush1.msra.mxu0 0.0
    %1747 = vmatprep.subr.mxu0 0.0
    %1748 = vmatpush1.msra.mxu0 0.0
    %1749 = vmatprep.subr.mxu0 0.0
    %1750 = vmatpush1.msra.mxu0 0.0
    %1751 = vmatprep.subr.mxu0 0.0
    %1752 = vmatpush1.msra.mxu0 0.0
    %1753 = vmatprep.subr.mxu0 0.0
    %1754 = vmatpush1.msra.mxu0 0.0
    %1755 = vmatprep.subr.mxu0 0.0
    %1756 = vmatpush1.msra.mxu0 0.0
    %1757 = vmatprep.subr.mxu0 0.0
    %1758 = vmatpush1.msra.mxu0 0.0
    %1759 = vmatprep.subr.mxu0 0.0
    %1760 = vmatpush1.msra.mxu0 0.0
    %1761 = vmatprep.subr.mxu0 0.0
    %1762 = vmatpush1.msra.mxu0 0.0
    %1763 = vmatprep.subr.mxu0 0.0
    %1764 = vmatpush1.msra.mxu0 0.0
    %1765 = vmatprep.subr.mxu0 0.0
    %1766 = vmatpush1.msra.mxu0 0.0
    %1767 = vmatprep.subr.mxu0 0.0
    %1768 = vmatpush1.msra.mxu0 %v1040
    %1769 = vmatprep.subr.mxu0 0.0
    %1770 = vmatpush1.msra.mxu0 %v1035
    %1771 = vmatprep.subr.mxu0 0.0
    %1772 = vmatpush2.msra.mxu0 0.0
    %1773 = vmatprep.subr.mxu0 0.0
    %1774 = vmatpush2.msra.mxu0 0.0
    %1775 = vmatprep.subr.mxu0 0.0
    %1776 = vmatpush2.msra.mxu0 0.0
    %1777 = vmatprep.subr.mxu0 0.0
    %1778 = vmatpush2.msra.mxu0 0.0
    %1779 = vmatprep.subr.mxu0 0.0
    %1780 = vmatpush2.msra.mxu0 0.0
    %1781 = vmatprep.subr.mxu0 0.0
    %1782 = vmatpush2.msra.mxu0 0.0
    %1783 = vmatprep.subr.mxu0 0.0
    %1784 = vmatpush2.msra.mxu0 0.0
    %1785 = vmatprep.subr.mxu0 0.0
    %1786 = vmatpush2.msra.mxu0 0.0
    %1787 = vmatprep.subr.mxu0 0.0
    %1788 = vmatpush2.msra.mxu0 0.0
    %1789 = vmatprep.subr.mxu0 0.0
    %1790 = vmatpush2.msra.mxu0 0.0
    %1791 = vmatprep.subr.mxu0 0.0
    %1792 = vmatpush2.msra.mxu0 0.0
    %1793 = vmatprep.subr.mxu0 0.0
    %1794 = vmatpush2.msra.mxu0 0.0
    %1795 = vmatprep.subr.mxu0 0.0
    %1796 = vmatpush2.msra.mxu0 0.0
    %1797 = vmatprep.subr.mxu0 0.0
    %1798 = vmatpush2.msra.mxu0 0.0
    %1799 = vmatprep.subr.mxu0 0.0
    %1800 = vmatpush2.msra.mxu0 0.0
    %1801 = vmatprep.subr.mxu0 0.0
    %1802 = vmatpush2.msra.mxu0 0.0
    %1803 = vmatprep.mubr.f32.mxu0 0.0
    %1804 = vmatmul.mubr.f32.gmra.mxu0 %v1734
    %v1805 = vpop.f32.mrf.mxu0
    %v1806 = vadd.f32 0.0, %v1805
    %v1807 = vpop.f32.mrf.mxu0
    %1808 = vmatprep.mubr.f32.mxu0 0.0
    %1809 = vmatmul.mubr.f32.gmra.mxu0 %v1737
    %v1810 = vpop.f32.mrf.mxu0
    %v1811 = vadd.f32 0.0, %v1810
    %v1812 = vpop.f32.mrf.mxu0
    %1813 = vdwg.mxu0
    %v1815 = vsel %vm1563, %v1645, 0
    %v1818 = vsel %vm1563, %v1647, 0
    %1820 = vmatprep.subr.mxu0 0.0
    %1821 = vmatpush1.msra.mxu0 0.0
    %1822 = vmatprep.subr.mxu0 0.0
    %1823 = vmatpush1.msra.mxu0 0.0
    %1824 = vmatprep.subr.mxu0 0.0
    %1825 = vmatpush1.msra.mxu0 0.0
    %1826 = vmatprep.subr.mxu0 0.0
    %1827 = vmatpush1.msra.mxu0 0.0
    %1828 = vmatprep.subr.mxu0 0.0
    %1829 = vmatpush1.msra.mxu0 0.0
    %1830 = vmatprep.subr.mxu0 0.0
    %1831 = vmatpush1.msra.mxu0 0.0
    %1832 = vmatprep.subr.mxu0 0.0
    %1833 = vmatpush1.msra.mxu0 0.0
    %1834 = vmatprep.subr.mxu0 0.0
    %1835 = vmatpush1.msra.mxu0 0.0
    %1836 = vmatprep.subr.mxu0 0.0
    %1837 = vmatpush1.msra.mxu0 0.0
    %1838 = vmatprep.subr.mxu0 0.0
    %1839 = vmatpush1.msra.mxu0 0.0
    %1840 = vmatprep.subr.mxu0 0.0
    %1841 = vmatpush1.msra.mxu0 0.0
    %1842 = vmatprep.subr.mxu0 0.0
    %1843 = vmatpush1.msra.mxu0 0.0
    %1844 = vmatprep.subr.mxu0 0.0
    %1845 = vmatpush1.msra.mxu0 0.0
    %1846 = vmatprep.subr.mxu0 0.0
    %1847 = vmatpush1.msra.mxu0 0.0
    %1848 = vmatprep.subr.mxu0 0.0
    %1849 = vmatpush1.msra.mxu0 %v1118
    %1850 = vmatprep.subr.mxu0 0.0
    %1851 = vmatpush1.msra.mxu0 %v1113
    %1852 = vmatprep.subr.mxu0 0.0
    %1853 = vmatpush2.msra.mxu0 0.0
    %1854 = vmatprep.subr.mxu0 0.0
    %1855 = vmatpush2.msra.mxu0 0.0
    %1856 = vmatprep.subr.mxu0 0.0
    %1857 = vmatpush2.msra.mxu0 0.0
    %1858 = vmatprep.subr.mxu0 0.0
    %1859 = vmatpush2.msra.mxu0 0.0
    %1860 = vmatprep.subr.mxu0 0.0
    %1861 = vmatpush2.msra.mxu0 0.0
    %1862 = vmatprep.subr.mxu0 0.0
    %1863 = vmatpush2.msra.mxu0 0.0
    %1864 = vmatprep.subr.mxu0 0.0
    %1865 = vmatpush2.msra.mxu0 0.0
    %1866 = vmatprep.subr.mxu0 0.0
    %1867 = vmatpush2.msra.mxu0 0.0
    %1868 = vmatprep.subr.mxu0 0.0
    %1869 = vmatpush2.msra.mxu0 0.0
    %1870 = vmatprep.subr.mxu0 0.0
    %1871 = vmatpush2.msra.mxu0 0.0
    %1872 = vmatprep.subr.mxu0 0.0
    %1873 = vmatpush2.msra.mxu0 0.0
    %1874 = vmatprep.subr.mxu0 0.0
    %1875 = vmatpush2.msra.mxu0 0.0
    %1876 = vmatprep.subr.mxu0 0.0
    %1877 = vmatpush2.msra.mxu0 0.0
    %1878 = vmatprep.subr.mxu0 0.0
    %1879 = vmatpush2.msra.mxu0 0.0
    %1880 = vmatprep.subr.mxu0 0.0
    %1881 = vmatpush2.msra.mxu0 0.0
    %1882 = vmatprep.subr.mxu0 0.0
    %1883 = vmatpush2.msra.mxu0 0.0
    %1884 = vmatprep.mubr.f32.mxu0 0.0
    %1885 = vmatmul.mubr.f32.gmra.mxu0 %v1815
    %v1886 = vpop.f32.mrf.mxu0
    %v1887 = vadd.f32 0.0, %v1886
    %v1888 = vpop.f32.mrf.mxu0
    %1889 = vmatprep.mubr.f32.mxu0 0.0
    %1890 = vmatmul.mubr.f32.gmra.mxu0 %v1818
    %v1891 = vpop.f32.mrf.mxu0
    %v1892 = vadd.f32 0.0, %v1891
    %v1893 = vpop.f32.mrf.mxu0
    %1894 = vdwg.mxu0
    %v1896 = vsel %vm1563, %v1649, 0
    %v1899 = vsel %vm1563, %v1651, 0
    %1901 = vmatprep.subr.mxu0 0.0
    %1902 = vmatpush1.msra.mxu0 0.0
    %1903 = vmatprep.subr.mxu0 0.0
    %1904 = vmatpush1.msra.mxu0 0.0
    %1905 = vmatprep.subr.mxu0 0.0
    %1906 = vmatpush1.msra.mxu0 0.0
    %1907 = vmatprep.subr.mxu0 0.0
    %1908 = vmatpush1.msra.mxu0 0.0
    %1909 = vmatprep.subr.mxu0 0.0
    %1910 = vmatpush1.msra.mxu0 0.0
    %1911 = vmatprep.subr.mxu0 0.0
    %1912 = vmatpush1.msra.mxu0 0.0
    %1913 = vmatprep.subr.mxu0 0.0
    %1914 = vmatpush1.msra.mxu0 0.0
    %1915 = vmatprep.subr.mxu0 0.0
    %1916 = vmatpush1.msra.mxu0 0.0
    %1917 = vmatprep.subr.mxu0 0.0
    %1918 = vmatpush1.msra.mxu0 0.0
    %1919 = vmatprep.subr.mxu0 0.0
    %1920 = vmatpush1.msra.mxu0 0.0
    %1921 = vmatprep.subr.mxu0 0.0
    %1922 = vmatpush1.msra.mxu0 0.0
    %1923 = vmatprep.subr.mxu0 0.0
    %1924 = vmatpush1.msra.mxu0 0.0
    %1925 = vmatprep.subr.mxu0 0.0
    %1926 = vmatpush1.msra.mxu0 0.0
    %1927 = vmatprep.subr.mxu0 0.0
    %1928 = vmatpush1.msra.mxu0 0.0
    %1929 = vmatprep.subr.mxu0 0.0
    %1930 = vmatpush1.msra.mxu0 %v1196
    %1931 = vmatprep.subr.mxu0 0.0
    %1932 = vmatpush1.msra.mxu0 %v1191
    %1933 = vmatprep.subr.mxu0 0.0
    %1934 = vmatpush2.msra.mxu0 0.0
    %1935 = vmatprep.subr.mxu0 0.0
    %1936 = vmatpush2.msra.mxu0 0.0
    %1937 = vmatprep.subr.mxu0 0.0
    %1938 = vmatpush2.msra.mxu0 0.0
    %1939 = vmatprep.subr.mxu0 0.0
    %1940 = vmatpush2.msra.mxu0 0.0
    %1941 = vmatprep.subr.mxu0 0.0
    %1942 = vmatpush2.msra.mxu0 0.0
    %1943 = vmatprep.subr.mxu0 0.0
    %1944 = vmatpush2.msra.mxu0 0.0
    %1945 = vmatprep.subr.mxu0 0.0
    %1946 = vmatpush2.msra.mxu0 0.0
    %1947 = vmatprep.subr.mxu0 0.0
    %1948 = vmatpush2.msra.mxu0 0.0
    %1949 = vmatprep.subr.mxu0 0.0
    %1950 = vmatpush2.msra.mxu0 0.0
    %1951 = vmatprep.subr.mxu0 0.0
    %1952 = vmatpush2.msra.mxu0 0.0
    %1953 = vmatprep.subr.mxu0 0.0
    %1954 = vmatpush2.msra.mxu0 0.0
    %1955 = vmatprep.subr.mxu0 0.0
    %1956 = vmatpush2.msra.mxu0 0.0
    %1957 = vmatprep.subr.mxu0 0.0
    %1958 = vmatpush2.msra.mxu0 0.0
    %1959 = vmatprep.subr.mxu0 0.0
    %1960 = vmatpush2.msra.mxu0 0.0
    %1961 = vmatprep.subr.mxu0 0.0
    %1962 = vmatpush2.msra.mxu0 0.0
    %1963 = vmatprep.subr.mxu0 0.0
    %1964 = vmatpush2.msra.mxu0 0.0
    %1965 = vmatprep.mubr.f32.mxu0 0.0
    %1966 = vmatmul.mubr.f32.gmra.mxu0 %v1896
    %v1967 = vpop.f32.mrf.mxu0
    %v1968 = vadd.f32 0.0, %v1967
    %v1969 = vpop.f32.mrf.mxu0
    %1970 = vmatprep.mubr.f32.mxu0 0.0
    %1971 = vmatmul.mubr.f32.gmra.mxu0 %v1899
    %v1972 = vpop.f32.mrf.mxu0
    %v1973 = vadd.f32 0.0, %v1972
    %v1974 = vpop.f32.mrf.mxu0
    %1975 = vdwg.mxu0
    %v1976 = vld [vmem:[%s2 + $0x158] sm:$0xff]
    %v1977 = vld [vmem:[%s2 + $0x160] sm:$0xff]
    %v1978 = vld [vmem:[%s2 + $0x168] sm:$0xff]
    %v1979 = vld [vmem:[%s2 + $0x170] sm:$0xff]
    %v1981 = vsel %vm22, %v1725, 0
    %v1984 = vsel %vm22, %v1730, 0
    %1986 = vmatprep.subr.mxu0 0.0
    %1987 = vmatpush1.msra.mxu0 0.0
    %1988 = vmatprep.subr.mxu0 0.0
    %1989 = vmatpush1.msra.mxu0 0.0
    %1990 = vmatprep.subr.mxu0 0.0
    %1991 = vmatpush1.msra.mxu0 0.0
    %1992 = vmatprep.subr.mxu0 0.0
    %1993 = vmatpush1.msra.mxu0 0.0
    %1994 = vmatprep.subr.mxu0 0.0
    %1995 = vmatpush1.msra.mxu0 0.0
    %1996 = vmatprep.subr.mxu0 0.0
    %1997 = vmatpush1.msra.mxu0 0.0
    %1998 = vmatprep.subr.mxu0 0.0
    %1999 = vmatpush1.msra.mxu0 0.0
    %2000 = vmatprep.subr.mxu0 0.0
    %2001 = vmatpush1.msra.mxu0 0.0
    %2002 = vmatprep.subr.mxu0 0.0
    %2003 = vmatpush1.msra.mxu0 0.0
    %2004 = vmatprep.subr.mxu0 0.0
    %2005 = vmatpush1.msra.mxu0 0.0
    %2006 = vmatprep.subr.mxu0 0.0
    %2007 = vmatpush1.msra.mxu0 0.0
    %2008 = vmatprep.subr.mxu0 0.0
    %2009 = vmatpush1.msra.mxu0 0.0
    %2010 = vmatprep.subr.mxu0 0.0
    %2011 = vmatpush1.msra.mxu0 0.0
    %2012 = vmatprep.subr.mxu0 0.0
    %2013 = vmatpush1.msra.mxu0 0.0
    %2014 = vmatprep.subr.mxu0 0.0
    %2015 = vmatpush1.msra.mxu0 0.0
    %2016 = vmatprep.subr.mxu0 0.0
    %2017 = vmatpush1.msra.mxu0 %v1976
    %2018 = vmatprep.subr.mxu0 0.0
    %2019 = vmatpush2.msra.mxu0 0.0
    %2020 = vmatprep.subr.mxu0 0.0
    %2021 = vmatpush2.msra.mxu0 0.0
    %2022 = vmatprep.subr.mxu0 0.0
    %2023 = vmatpush2.msra.mxu0 0.0
    %2024 = vmatprep.subr.mxu0 0.0
    %2025 = vmatpush2.msra.mxu0 0.0
    %2026 = vmatprep.subr.mxu0 0.0
    %2027 = vmatpush2.msra.mxu0 0.0
    %2028 = vmatprep.subr.mxu0 0.0
    %2029 = vmatpush2.msra.mxu0 0.0
    %2030 = vmatprep.subr.mxu0 0.0
    %2031 = vmatpush2.msra.mxu0 0.0
    %2032 = vmatprep.subr.mxu0 0.0
    %2033 = vmatpush2.msra.mxu0 0.0
    %2034 = vmatprep.subr.mxu0 0.0
    %2035 = vmatpush2.msra.mxu0 0.0
    %2036 = vmatprep.subr.mxu0 0.0
    %2037 = vmatpush2.msra.mxu0 0.0
    %2038 = vmatprep.subr.mxu0 0.0
    %2039 = vmatpush2.msra.mxu0 0.0
    %2040 = vmatprep.subr.mxu0 0.0
    %2041 = vmatpush2.msra.mxu0 0.0
    %2042 = vmatprep.subr.mxu0 0.0
    %2043 = vmatpush2.msra.mxu0 0.0
    %2044 = vmatprep.subr.mxu0 0.0
    %2045 = vmatpush2.msra.mxu0 0.0
    %2046 = vmatprep.subr.mxu0 0.0
    %2047 = vmatpush2.msra.mxu0 0.0
    %2048 = vmatprep.subr.mxu0 0.0
    %2049 = vmatpush2.msra.mxu0 0.0
    %2050 = vmatprep.mubr.f32.mxu0 0.0
    %2051 = vmatmul.mubr.f32.gmra.mxu0 %v1981
    %v2052 = vpop.f32.mrf.mxu0
    %v2053 = vadd.f32 0.0, %v2052
    %v2054 = vpop.f32.mrf.mxu0
    %2055 = vmatprep.mubr.f32.mxu0 0.0
    %2056 = vmatmul.mubr.f32.gmra.mxu0 %v1984
    %v2057 = vpop.f32.mrf.mxu0
    %v2058 = vadd.f32 0.0, %v2057
    %v2059 = vpop.f32.mrf.mxu0
    %2060 = vdwg.mxu0
    %v2062 = vsel %vm22, %v1806, 0
    %v2065 = vsel %vm22, %v1811, 0
    %2067 = vmatprep.subr.mxu0 0.0
    %2068 = vmatpush1.msra.mxu0 0.0
    %2069 = vmatprep.subr.mxu0 0.0
    %2070 = vmatpush1.msra.mxu0 0.0
    %2071 = vmatprep.subr.mxu0 0.0
    %2072 = vmatpush1.msra.mxu0 0.0
    %2073 = vmatprep.subr.mxu0 0.0
    %2074 = vmatpush1.msra.mxu0 0.0
    %2075 = vmatprep.subr.mxu0 0.0
    %2076 = vmatpush1.msra.mxu0 0.0
    %2077 = vmatprep.subr.mxu0 0.0
    %2078 = vmatpush1.msra.mxu0 0.0
    %2079 = vmatprep.subr.mxu0 0.0
    %2080 = vmatpush1.msra.mxu0 0.0
    %2081 = vmatprep.subr.mxu0 0.0
    %2082 = vmatpush1.msra.mxu0 0.0
    %2083 = vmatprep.subr.mxu0 0.0
    %2084 = vmatpush1.msra.mxu0 0.0
    %2085 = vmatprep.subr.mxu0 0.0
    %2086 = vmatpush1.msra.mxu0 0.0
    %2087 = vmatprep.subr.mxu0 0.0
    %2088 = vmatpush1.msra.mxu0 0.0
    %2089 = vmatprep.subr.mxu0 0.0
    %2090 = vmatpush1.msra.mxu0 0.0
    %2091 = vmatprep.subr.mxu0 0.0
    %2092 = vmatpush1.msra.mxu0 0.0
    %2093 = vmatprep.subr.mxu0 0.0
    %2094 = vmatpush1.msra.mxu0 0.0
    %2095 = vmatprep.subr.mxu0 0.0
    %2096 = vmatpush1.msra.mxu0 0.0
    %2097 = vmatprep.subr.mxu0 0.0
    %2098 = vmatpush1.msra.mxu0 %v1977
    %2099 = vmatprep.subr.mxu0 0.0
    %2100 = vmatpush2.msra.mxu0 0.0
    %2101 = vmatprep.subr.mxu0 0.0
    %2102 = vmatpush2.msra.mxu0 0.0
    %2103 = vmatprep.subr.mxu0 0.0
    %2104 = vmatpush2.msra.mxu0 0.0
    %2105 = vmatprep.subr.mxu0 0.0
    %2106 = vmatpush2.msra.mxu0 0.0
    %2107 = vmatprep.subr.mxu0 0.0
    %2108 = vmatpush2.msra.mxu0 0.0
    %2109 = vmatprep.subr.mxu0 0.0
    %2110 = vmatpush2.msra.mxu0 0.0
    %2111 = vmatprep.subr.mxu0 0.0
    %2112 = vmatpush2.msra.mxu0 0.0
    %2113 = vmatprep.subr.mxu0 0.0
    %2114 = vmatpush2.msra.mxu0 0.0
    %2115 = vmatprep.subr.mxu0 0.0
    %2116 = vmatpush2.msra.mxu0 0.0
    %2117 = vmatprep.subr.mxu0 0.0
    %2118 = vmatpush2.msra.mxu0 0.0
    %2119 = vmatprep.subr.mxu0 0.0
    %2120 = vmatpush2.msra.mxu0 0.0
    %2121 = vmatprep.subr.mxu0 0.0
    %2122 = vmatpush2.msra.mxu0 0.0
    %2123 = vmatprep.subr.mxu0 0.0
    %2124 = vmatpush2.msra.mxu0 0.0
    %2125 = vmatprep.subr.mxu0 0.0
    %2126 = vmatpush2.msra.mxu0 0.0
    %2127 = vmatprep.subr.mxu0 0.0
    %2128 = vmatpush2.msra.mxu0 0.0
    %2129 = vmatprep.subr.mxu0 0.0
    %2130 = vmatpush2.msra.mxu0 0.0
    %2131 = vmatprep.mubr.f32.mxu0 0.0
    %2132 = vmatmul.mubr.f32.gmra.mxu0 %v2062
    %v2133 = vpop.f32.mrf.mxu0
    %v2134 = vadd.f32 0.0, %v2133
    %v2135 = vpop.f32.mrf.mxu0
    %2136 = vmatprep.mubr.f32.mxu0 0.0
    %2137 = vmatmul.mubr.f32.gmra.mxu0 %v2065
    %v2138 = vpop.f32.mrf.mxu0
    %v2139 = vadd.f32 0.0, %v2138
    %v2140 = vpop.f32.mrf.mxu0
    %2141 = vdwg.mxu0
    %v2143 = vsel %vm22, %v1887, 0
    %v2146 = vsel %vm22, %v1892, 0
    %2148 = vmatprep.subr.mxu0 0.0
    %2149 = vmatpush1.msra.mxu0 0.0
    %2150 = vmatprep.subr.mxu0 0.0
    %2151 = vmatpush1.msra.mxu0 0.0
    %2152 = vmatprep.subr.mxu0 0.0
    %2153 = vmatpush1.msra.mxu0 0.0
    %2154 = vmatprep.subr.mxu0 0.0
    %2155 = vmatpush1.msra.mxu0 0.0
    %2156 = vmatprep.subr.mxu0 0.0
    %2157 = vmatpush1.msra.mxu0 0.0
    %2158 = vmatprep.subr.mxu0 0.0
    %2159 = vmatpush1.msra.mxu0 0.0
    %2160 = vmatprep.subr.mxu0 0.0
    %2161 = vmatpush1.msra.mxu0 0.0
    %2162 = vmatprep.subr.mxu0 0.0
    %2163 = vmatpush1.msra.mxu0 0.0
    %2164 = vmatprep.subr.mxu0 0.0
    %2165 = vmatpush1.msra.mxu0 0.0
    %2166 = vmatprep.subr.mxu0 0.0
    %2167 = vmatpush1.msra.mxu0 0.0
    %2168 = vmatprep.subr.mxu0 0.0
    %2169 = vmatpush1.msra.mxu0 0.0
    %2170 = vmatprep.subr.mxu0 0.0
    %2171 = vmatpush1.msra.mxu0 0.0
    %2172 = vmatprep.subr.mxu0 0.0
    %2173 = vmatpush1.msra.mxu0 0.0
    %2174 = vmatprep.subr.mxu0 0.0
    %2175 = vmatpush1.msra.mxu0 0.0
    %2176 = vmatprep.subr.mxu0 0.0
    %2177 = vmatpush1.msra.mxu0 0.0
    %2178 = vmatprep.subr.mxu0 0.0
    %2179 = vmatpush1.msra.mxu0 %v1978
    %2180 = vmatprep.subr.mxu0 0.0
    %2181 = vmatpush2.msra.mxu0 0.0
    %2182 = vmatprep.subr.mxu0 0.0
    %2183 = vmatpush2.msra.mxu0 0.0
    %2184 = vmatprep.subr.mxu0 0.0
    %2185 = vmatpush2.msra.mxu0 0.0
    %2186 = vmatprep.subr.mxu0 0.0
    %2187 = vmatpush2.msra.mxu0 0.0
    %2188 = vmatprep.subr.mxu0 0.0
    %2189 = vmatpush2.msra.mxu0 0.0
    %2190 = vmatprep.subr.mxu0 0.0
    %2191 = vmatpush2.msra.mxu0 0.0
    %2192 = vmatprep.subr.mxu0 0.0
    %2193 = vmatpush2.msra.mxu0 0.0
    %2194 = vmatprep.subr.mxu0 0.0
    %2195 = vmatpush2.msra.mxu0 0.0
    %2196 = vmatprep.subr.mxu0 0.0
    %2197 = vmatpush2.msra.mxu0 0.0
    %2198 = vmatprep.subr.mxu0 0.0
    %2199 = vmatpush2.msra.mxu0 0.0
    %2200 = vmatprep.subr.mxu0 0.0
    %2201 = vmatpush2.msra.mxu0 0.0
    %2202 = vmatprep.subr.mxu0 0.0
    %2203 = vmatpush2.msra.mxu0 0.0
    %2204 = vmatprep.subr.mxu0 0.0
    %2205 = vmatpush2.msra.mxu0 0.0
    %2206 = vmatprep.subr.mxu0 0.0
    %2207 = vmatpush2.msra.mxu0 0.0
    %2208 = vmatprep.subr.mxu0 0.0
    %2209 = vmatpush2.msra.mxu0 0.0
    %2210 = vmatprep.subr.mxu0 0.0
    %2211 = vmatpush2.msra.mxu0 0.0
    %2212 = vmatprep.mubr.f32.mxu0 0.0
    %2213 = vmatmul.mubr.f32.gmra.mxu0 %v2143
    %v2214 = vpop.f32.mrf.mxu0
    %v2215 = vadd.f32 0.0, %v2214
    %v2216 = vpop.f32.mrf.mxu0
    %2217 = vmatprep.mubr.f32.mxu0 0.0
    %2218 = vmatmul.mubr.f32.gmra.mxu0 %v2146
    %v2219 = vpop.f32.mrf.mxu0
    %v2220 = vadd.f32 0.0, %v2219
    %v2221 = vpop.f32.mrf.mxu0
    %2222 = vdwg.mxu0
    %v2224 = vsel %vm22, %v1968, 0
    %v2227 = vsel %vm22, %v1973, 0
    %2229 = vmatprep.subr.mxu0 0.0
    %2230 = vmatpush1.msra.mxu0 0.0
    %2231 = vmatprep.subr.mxu0 0.0
    %2232 = vmatpush1.msra.mxu0 0.0
    %2233 = vmatprep.subr.mxu0 0.0
    %2234 = vmatpush1.msra.mxu0 0.0
    %2235 = vmatprep.subr.mxu0 0.0
    %2236 = vmatpush1.msra.mxu0 0.0
    %2237 = vmatprep.subr.mxu0 0.0
    %2238 = vmatpush1.msra.mxu0 0.0
    %2239 = vmatprep.subr.mxu0 0.0
    %2240 = vmatpush1.msra.mxu0 0.0
    %2241 = vmatprep.subr.mxu0 0.0
    %2242 = vmatpush1.msra.mxu0 0.0
    %2243 = vmatprep.subr.mxu0 0.0
    %2244 = vmatpush1.msra.mxu0 0.0
    %2245 = vmatprep.subr.mxu0 0.0
    %2246 = vmatpush1.msra.mxu0 0.0
    %2247 = vmatprep.subr.mxu0 0.0
    %2248 = vmatpush1.msra.mxu0 0.0
    %2249 = vmatprep.subr.mxu0 0.0
    %2250 = vmatpush1.msra.mxu0 0.0
    %2251 = vmatprep.subr.mxu0 0.0
    %2252 = vmatpush1.msra.mxu0 0.0
    %2253 = vmatprep.subr.mxu0 0.0
    %2254 = vmatpush1.msra.mxu0 0.0
    %2255 = vmatprep.subr.mxu0 0.0
    %2256 = vmatpush1.msra.mxu0 0.0
    %2257 = vmatprep.subr.mxu0 0.0
    %2258 = vmatpush1.msra.mxu0 0.0
    %2259 = vmatprep.subr.mxu0 0.0
    %2260 = vmatpush1.msra.mxu0 %v1979
    %2261 = vmatprep.subr.mxu0 0.0
    %2262 = vmatpush2.msra.mxu0 0.0
    %2263 = vmatprep.subr.mxu0 0.0
    %2264 = vmatpush2.msra.mxu0 0.0
    %2265 = vmatprep.subr.mxu0 0.0
    %2266 = vmatpush2.msra.mxu0 0.0
    %2267 = vmatprep.subr.mxu0 0.0
    %2268 = vmatpush2.msra.mxu0 0.0
    %2269 = vmatprep.subr.mxu0 0.0
    %2270 = vmatpush2.msra.mxu0 0.0
    %2271 = vmatprep.subr.mxu0 0.0
    %2272 = vmatpush2.msra.mxu0 0.0
    %2273 = vmatprep.subr.mxu0 0.0
    %2274 = vmatpush2.msra.mxu0 0.0
    %2275 = vmatprep.subr.mxu0 0.0
    %2276 = vmatpush2.msra.mxu0 0.0
    %2277 = vmatprep.subr.mxu0 0.0
    %2278 = vmatpush2.msra.mxu0 0.0
    %2279 = vmatprep.subr.mxu0 0.0
    %2280 = vmatpush2.msra.mxu0 0.0
    %2281 = vmatprep.subr.mxu0 0.0
    %2282 = vmatpush2.msra.mxu0 0.0
    %2283 = vmatprep.subr.mxu0 0.0
    %2284 = vmatpush2.msra.mxu0 0.0
    %2285 = vmatprep.subr.mxu0 0.0
    %2286 = vmatpush2.msra.mxu0 0.0
    %2287 = vmatprep.subr.mxu0 0.0
    %2288 = vmatpush2.msra.mxu0 0.0
    %2289 = vmatprep.subr.mxu0 0.0
    %2290 = vmatpush2.msra.mxu0 0.0
    %2291 = vmatprep.subr.mxu0 0.0
    %2292 = vmatpush2.msra.mxu0 0.0
    %2293 = vmatprep.mubr.f32.mxu0 0.0
    %2294 = vmatmul.mubr.f32.gmra.mxu0 %v2224
    %v2295 = vpop.f32.mrf.mxu0
    %v2296 = vadd.f32 0.0, %v2295
    %v2297 = vpop.f32.mrf.mxu0
    %2298 = vmatprep.mubr.f32.mxu0 0.0
    %2299 = vmatmul.mubr.f32.gmra.mxu0 %v2227
    %v2300 = vpop.f32.mrf.mxu0
    %v2301 = vadd.f32 0.0, %v2300
    %v2302 = vpop.f32.mrf.mxu0
    %2303 = vdwg.mxu0
    %v2304 = vsel %vm256, %v2053, 0.0
    %v2305 = vsel %vm256, %v2134, 0.0
    %v2306 = vadd.f32 %v2304, %v2305
    %v2307 = vsel %vm256, %v2215, 0.0
    %v2308 = vadd.f32 %v2306, %v2307
    %v2309 = vsel %vm256, %v2296, 0.0
    %v2310 = vadd.f32 %v2308, %v2309
    %v2311 = vsel %vm256, %v2058, 0.0
    %v2312 = vsel %vm256, %v2139, 0.0
    %v2313 = vadd.f32 %v2311, %v2312
    %v2314 = vsel %vm256, %v2220, 0.0
    %v2315 = vadd.f32 %v2313, %v2314
    %v2316 = vsel %vm256, %v2301, 0.0
    %v2317 = vadd.f32 %v2315, %v2316
    %v2318 = vld [vmem:[%s2 + $0x178] sm:$0x1]
    %v2319 = vlaneseq
    %v2320 = vshrl.u32 %v2319, 7
    %v2321 = vsub.s32 0, %v2320
    %v2322 = vrot.slane %v2318, %v2321
    %v2323 = vadd.f32 %v2310, %v2322
    %v2324 = vadd.f32 %v2317, %v2322
    %v2325 = vadd.f32 %v216, %v2323
    %v2326 = vadd.f32 %v217, %v2324
    %v2327 = vld [vmem:[%s2 + $0x180] sm:$0x1]
    %v2328 = vld [vmem:[%s2 + $0x188] sm:$0x1]
    %v2329 = vsel %vm256, %v2325, 0.0
    %2330 = vadd.xlane.f32.xlu0 %v2329
    %v2331 = vpop.xlane.xlu0 %2330
    %v2332 = vsel %vm256, %v2326, 0.0
    %2333 = vadd.xlane.f32.xlu0 %v2332
    %v2334 = vpop.xlane.xlu0 %2333
    %v2335 = vrcp.pop 32.0
    %v2336 = vmul.f32 %v2331, %v2335
    %v2337 = vmul.f32 %v2334, %v2335
    %v2338 = vsub.f32 %v2325, %v2336
    %v2339 = vsub.f32 %v2326, %v2337
    %v2340 = vmul.f32 %v2338, %v2338
    %v2341 = vmul.f32 %v2339, %v2339
    %v2342 = vsel %vm256, %v2340, 0.0
    %2343 = vadd.xlane.f32.xlu0 %v2342
    %v2344 = vpop.xlane.xlu0 %2343
    %v2345 = vsel %vm256, %v2341, 0.0
    %2346 = vadd.xlane.f32.xlu0 %v2345
    %v2347 = vpop.xlane.xlu0 %2346
    %v2348 = vmul.f32 %v2344, %v2335
    %v2349 = vmul.f32 %v2347, %v2335
    %v2350 = vadd.f32 %v2348, 1e-05
    %v2351 = vadd.f32 %v2349, 1e-05
    %v2352 = vrsqrt.pop %v2350
    %v2353 = vrsqrt.pop %v2351
    %v2354 = vmul.f32 %v2338, %v2352
    %v2355 = vmul.f32 %v2339, %v2353
    %v2356 = vlaneseq
    %v2357 = vshrl.u32 %v2356, 7
    %v2358 = vsub.s32 0, %v2357
    %v2359 = vrot.slane %v2327, %v2358
    %v2360 = vmul.f32 %v2354, %v2359
    %v2361 = vmul.f32 %v2355, %v2359
    %v2362 = vlaneseq
    %v2363 = vshrl.u32 %v2362, 7
    %v2364 = vsub.s32 0, %v2363
    %v2365 = vrot.slane %v2328, %v2364
    %v2366 = vadd.f32 %v2360, %v2365
    %v2367 = vadd.f32 %v2361, %v2365
    %v2368 = vld [vmem:[%s2 + $0x190] sm:$0xff]
    %v2369 = vld [vmem:[%s2 + $0x198] sm:$0xff]
    %v2370 = vld [vmem:[%s2 + $0x1a0] sm:$0xff]
    %v2371 = vld [vmem:[%s2 + $0x1a8] sm:$0xff]
    %v2372 = vld [vmem:[%s2 + $0x1b0] sm:$0x1]
    %v2373 = vlaneseq
    %v2374 = vshrl.u32 %v2373, 7
    %v2375 = vsub.s32 0, %v2374
    %v2376 = vrot.slane %v2372, %v2375
    %v2378 = vsel %vm256, %v2366, 0
    %v2381 = vsel %vm256, %v2367, 0
    %2383 = vmatprep.subr.mxu0 0.0
    %2384 = vmatpush1.msra.mxu0 0.0
    %2385 = vmatprep.subr.mxu0 0.0
    %2386 = vmatpush1.msra.mxu0 0.0
    %2387 = vmatprep.subr.mxu0 0.0
    %2388 = vmatpush1.msra.mxu0 0.0
    %2389 = vmatprep.subr.mxu0 0.0
    %2390 = vmatpush1.msra.mxu0 0.0
    %2391 = vmatprep.subr.mxu0 0.0
    %2392 = vmatpush1.msra.mxu0 0.0
    %2393 = vmatprep.subr.mxu0 0.0
    %2394 = vmatpush1.msra.mxu0 0.0
    %2395 = vmatprep.subr.mxu0 0.0
    %2396 = vmatpush1.msra.mxu0 0.0
    %2397 = vmatprep.subr.mxu0 0.0
    %2398 = vmatpush1.msra.mxu0 0.0
    %2399 = vmatprep.subr.mxu0 0.0
    %2400 = vmatpush1.msra.mxu0 0.0
    %2401 = vmatprep.subr.mxu0 0.0
    %2402 = vmatpush1.msra.mxu0 0.0
    %2403 = vmatprep.subr.mxu0 0.0
    %2404 = vmatpush1.msra.mxu0 0.0
    %2405 = vmatprep.subr.mxu0 0.0
    %2406 = vmatpush1.msra.mxu0 0.0
    %2407 = vmatprep.subr.mxu0 0.0
    %2408 = vmatpush1.msra.mxu0 %v2371
    %2409 = vmatprep.subr.mxu0 0.0
    %2410 = vmatpush1.msra.mxu0 %v2370
    %2411 = vmatprep.subr.mxu0 0.0
    %2412 = vmatpush1.msra.mxu0 %v2369
    %2413 = vmatprep.subr.mxu0 0.0
    %2414 = vmatpush1.msra.mxu0 %v2368
    %2415 = vmatprep.subr.mxu0 0.0
    %2416 = vmatpush2.msra.mxu0 0.0
    %2417 = vmatprep.subr.mxu0 0.0
    %2418 = vmatpush2.msra.mxu0 0.0
    %2419 = vmatprep.subr.mxu0 0.0
    %2420 = vmatpush2.msra.mxu0 0.0
    %2421 = vmatprep.subr.mxu0 0.0
    %2422 = vmatpush2.msra.mxu0 0.0
    %2423 = vmatprep.subr.mxu0 0.0
    %2424 = vmatpush2.msra.mxu0 0.0
    %2425 = vmatprep.subr.mxu0 0.0
    %2426 = vmatpush2.msra.mxu0 0.0
    %2427 = vmatprep.subr.mxu0 0.0
    %2428 = vmatpush2.msra.mxu0 0.0
    %2429 = vmatprep.subr.mxu0 0.0
    %2430 = vmatpush2.msra.mxu0 0.0
    %2431 = vmatprep.subr.mxu0 0.0
    %2432 = vmatpush2.msra.mxu0 0.0
    %2433 = vmatprep.subr.mxu0 0.0
    %2434 = vmatpush2.msra.mxu0 0.0
    %2435 = vmatprep.subr.mxu0 0.0
    %2436 = vmatpush2.msra.mxu0 0.0
    %2437 = vmatprep.subr.mxu0 0.0
    %2438 = vmatpush2.msra.mxu0 0.0
    %2439 = vmatprep.subr.mxu0 0.0
    %2440 = vmatpush2.msra.mxu0 0.0
    %2441 = vmatprep.subr.mxu0 0.0
    %2442 = vmatpush2.msra.mxu0 0.0
    %2443 = vmatprep.subr.mxu0 0.0
    %2444 = vmatpush2.msra.mxu0 0.0
    %2445 = vmatprep.subr.mxu0 0.0
    %2446 = vmatpush2.msra.mxu0 0.0
    %2447 = vmatprep.mubr.f32.mxu0 0.0
    %2448 = vmatmul.mubr.f32.gmra.mxu0 %v2378
    %v2449 = vpop.f32.mrf.mxu0
    %v2450 = vadd.f32 %v2376, %v2449
    %v2451 = vpop.f32.mrf.mxu0
    %2452 = vmatprep.mubr.f32.mxu0 0.0
    %2453 = vmatmul.mubr.f32.gmra.mxu0 %v2381
    %v2454 = vpop.f32.mrf.mxu0
    %v2455 = vadd.f32 %v2376, %v2454
    %v2456 = vpop.f32.mrf.mxu0
    %2457 = vdwg.mxu0
    %v2458 = vmax.f32 %v2450, 0.0
    %v2459 = vmax.f32 %v2455, 0.0
    %v2460 = vld [vmem:[%s2 + $0x1b8] sm:$0xff]
    %v2461 = vld [vmem:[%s2 + $0x1c0] sm:$0xff]
    %v2462 = vld [vmem:[%s2 + $0x1c8] sm:$0xff]
    %v2463 = vld [vmem:[%s2 + $0x1d0] sm:$0xff]
    %v2464 = vld [vmem:[%s2 + $0x1d8] sm:$0xff]
    %v2465 = vld [vmem:[%s2 + $0x1e0] sm:$0xff]
    %v2466 = vld [vmem:[%s2 + $0x1e8] sm:$0xff]
    %v2467 = vld [vmem:[%s2 + $0x1f0] sm:$0xff]
    %v2468 = vld [vmem:[%s2 + $0x1f8] sm:$0x1]
    %v2469 = vlaneseq
    %v2470 = vshrl.u32 %v2469, 7
    %v2471 = vsub.s32 0, %v2470
    %v2472 = vrot.slane %v2468, %v2471
    %vm2473 = vcmask 523264
    %v2475 = vsel %vm2473, %v2458, 0
    %v2478 = vsel %vm2473, %v2459, 0
    %2480 = vmatprep.subr.mxu0 0.0
    %2481 = vmatpush1.msra.mxu0 0.0
    %2482 = vmatprep.subr.mxu0 0.0
    %2483 = vmatpush1.msra.mxu0 0.0
    %2484 = vmatprep.subr.mxu0 0.0
    %2485 = vmatpush1.msra.mxu0 0.0
    %2486 = vmatprep.subr.mxu0 0.0
    %2487 = vmatpush1.msra.mxu0 0.0
    %2488 = vmatprep.subr.mxu0 0.0
    %2489 = vmatpush1.msra.mxu0 0.0
    %2490 = vmatprep.subr.mxu0 0.0
    %2491 = vmatpush1.msra.mxu0 0.0
    %2492 = vmatprep.subr.mxu0 0.0
    %2493 = vmatpush1.msra.mxu0 0.0
    %2494 = vmatprep.subr.mxu0 0.0
    %2495 = vmatpush1.msra.mxu0 0.0
    %2496 = vmatprep.subr.mxu0 0.0
    %2497 = vmatpush1.msra.mxu0 %v2467
    %2498 = vmatprep.subr.mxu0 0.0
    %2499 = vmatpush1.msra.mxu0 %v2466
    %2500 = vmatprep.subr.mxu0 0.0
    %2501 = vmatpush1.msra.mxu0 %v2465
    %2502 = vmatprep.subr.mxu0 0.0
    %2503 = vmatpush1.msra.mxu0 %v2464
    %2504 = vmatprep.subr.mxu0 0.0
    %2505 = vmatpush1.msra.mxu0 %v2463
    %2506 = vmatprep.subr.mxu0 0.0
    %2507 = vmatpush1.msra.mxu0 %v2462
    %2508 = vmatprep.subr.mxu0 0.0
    %2509 = vmatpush1.msra.mxu0 %v2461
    %2510 = vmatprep.subr.mxu0 0.0
    %2511 = vmatpush1.msra.mxu0 %v2460
    %2512 = vmatprep.subr.mxu0 0.0
    %2513 = vmatpush2.msra.mxu0 0.0
    %2514 = vmatprep.subr.mxu0 0.0
    %2515 = vmatpush2.msra.mxu0 0.0
    %2516 = vmatprep.subr.mxu0 0.0
    %2517 = vmatpush2.msra.mxu0 0.0
    %2518 = vmatprep.subr.mxu0 0.0
    %2519 = vmatpush2.msra.mxu0 0.0
    %2520 = vmatprep.subr.mxu0 0.0
    %2521 = vmatpush2.msra.mxu0 0.0
    %2522 = vmatprep.subr.mxu0 0.0
    %2523 = vmatpush2.msra.mxu0 0.0
    %2524 = vmatprep.subr.mxu0 0.0
    %2525 = vmatpush2.msra.mxu0 0.0
    %2526 = vmatprep.subr.mxu0 0.0
    %2527 = vmatpush2.msra.mxu0 0.0
    %2528 = vmatprep.subr.mxu0 0.0
    %2529 = vmatpush2.msra.mxu0 0.0
    %2530 = vmatprep.subr.mxu0 0.0
    %2531 = vmatpush2.msra.mxu0 0.0
    %2532 = vmatprep.subr.mxu0 0.0
    %2533 = vmatpush2.msra.mxu0 0.0
    %2534 = vmatprep.subr.mxu0 0.0
    %2535 = vmatpush2.msra.mxu0 0.0
    %2536 = vmatprep.subr.mxu0 0.0
    %2537 = vmatpush2.msra.mxu0 0.0
    %2538 = vmatprep.subr.mxu0 0.0
    %2539 = vmatpush2.msra.mxu0 0.0
    %2540 = vmatprep.subr.mxu0 0.0
    %2541 = vmatpush2.msra.mxu0 0.0
    %2542 = vmatprep.subr.mxu0 0.0
    %2543 = vmatpush2.msra.mxu0 0.0
    %2544 = vmatprep.mubr.f32.mxu0 0.0
    %2545 = vmatmul.mubr.f32.gmra.mxu0 %v2475
    %v2546 = vpop.f32.mrf.mxu0
    %v2547 = vadd.f32 %v2472, %v2546
    %v2548 = vpop.f32.mrf.mxu0
    %2549 = vmatprep.mubr.f32.mxu0 0.0
    %2550 = vmatmul.mubr.f32.gmra.mxu0 %v2478
    %v2551 = vpop.f32.mrf.mxu0
    %v2552 = vadd.f32 %v2472, %v2551
    %v2553 = vpop.f32.mrf.mxu0
    %2554 = vdwg.mxu0
    %v2555 = vadd.f32 %v2366, %v2547
    %v2556 = vadd.f32 %v2367, %v2552
    %v2557 = vld [vmem:[%s2 + $0x200] sm:$0x1]
    %v2558 = vld [vmem:[%s2 + $0x208] sm:$0x1]
    %v2559 = vsel %vm256, %v2555, 0.0
    %2560 = vadd.xlane.f32.xlu0 %v2559
    %v2561 = vpop.xlane.xlu0 %2560
    %v2562 = vsel %vm256, %v2556, 0.0
    %2563 = vadd.xlane.f32.xlu0 %v2562
    %v2564 = vpop.xlane.xlu0 %2563
    %v2565 = vmul.f32 %v2561, %v2335
    %v2566 = vmul.f32 %v2564, %v2335
    %v2567 = vsub.f32 %v2555, %v2565
    %v2568 = vsub.f32 %v2556, %v2566
    %v2569 = vmul.f32 %v2567, %v2567
    %v2570 = vmul.f32 %v2568, %v2568
    %v2571 = vsel %vm256, %v2569, 0.0
    %2572 = vadd.xlane.f32.xlu0 %v2571
    %v2573 = vpop.xlane.xlu0 %2572
    %v2574 = vsel %vm256, %v2570, 0.0
    %2575 = vadd.xlane.f32.xlu0 %v2574
    %v2576 = vpop.xlane.xlu0 %2575
    %v2577 = vmul.f32 %v2573, %v2335
    %v2578 = vmul.f32 %v2576, %v2335
    %v2579 = vadd.f32 %v2577, 1e-05
    %v2580 = vadd.f32 %v2578, 1e-05
    %v2581 = vrsqrt.pop %v2579
    %v2582 = vrsqrt.pop %v2580
    %v2583 = vmul.f32 %v2567, %v2581
    %v2584 = vmul.f32 %v2568, %v2582
    %v2585 = vlaneseq
    %v2586 = vshrl.u32 %v2585, 7
    %v2587 = vsub.s32 0, %v2586
    %v2588 = vrot.slane %v2557, %v2587
    %v2589 = vmul.f32 %v2583, %v2588
    %v2590 = vmul.f32 %v2584, %v2588
    %v2591 = vlaneseq
    %v2592 = vshrl.u32 %v2591, 7
    %v2593 = vsub.s32 0, %v2592
    %v2594 = vrot.slane %v2558, %v2593
    %v2595 = vadd.f32 %v2589, %v2594
    %v2596 = vadd.f32 %v2590, %v2594
    %v2597 = vld [vmem:[%s2 + $0x210] sm:$0xff]
    %v2598 = vld [vmem:[%s2 + $0x218] sm:$0xff]
    %v2599 = vld [vmem:[%s2 + $0x220] sm:$0xff]
    %v2600 = vld [vmem:[%s2 + $0x228] sm:$0xff]
    %v2601 = vld [vmem:[%s2 + $0x230] sm:$0xff]
    %v2602 = vld [vmem:[%s2 + $0x238] sm:$0xff]
    %v2603 = vld [vmem:[%s2 + $0x240] sm:$0xff]
    %v2604 = vld [vmem:[%s2 + $0x248] sm:$0xff]
    %v2605 = vld [vmem:[%s2 + $0x250] sm:$0xff]
    %v2606 = vld [vmem:[%s2 + $0x258] sm:$0xff]
    %v2607 = vld [vmem:[%s2 + $0x260] sm:$0xff]
    %v2608 = vld [vmem:[%s2 + $0x268] sm:$0xff]
    %v2609 = vld [vmem:[%s2 + $0x270] sm:$0xff]
    %v2610 = vld [vmem:[%s2 + $0x278] sm:$0xff]
    %v2611 = vld [vmem:[%s2 + $0x280] sm:$0xff]
    %v2612 = vld [vmem:[%s2 + $0x288] sm:$0xff]
    %v2613 = vld [vmem:[%s2 + $0x290] sm:$0xff]
    %v2614 = vld [vmem:[%s2 + $0x298] sm:$0xff]
    %v2615 = vld [vmem:[%s2 + $0x2a0] sm:$0xff]
    %v2616 = vld [vmem:[%s2 + $0x2a8] sm:$0xff]
    %v2617 = vld [vmem:[%s2 + $0x2b0] sm:$0xff]
    %v2618 = vld [vmem:[%s2 + $0x2b8] sm:$0xff]
    %v2619 = vld [vmem:[%s2 + $0x2c0] sm:$0xff]
    %v2620 = vld [vmem:[%s2 + $0x2c8] sm:$0xff]
    %v2621 = vld [vmem:[%s2 + $0x2d0] sm:$0xff]
    %v2622 = vld [vmem:[%s2 + $0x2d8] sm:$0xff]
    %v2623 = vld [vmem:[%s2 + $0x2e0] sm:$0xff]
    %v2624 = vld [vmem:[%s2 + $0x2e8] sm:$0xff]
    %v2625 = vld [vmem:[%s2 + $0x2f0] sm:$0xff]
    %v2626 = vld [vmem:[%s2 + $0x2f8] sm:$0xff]
    %v2627 = vld [vmem:[%s2 + $0x300] sm:$0xff]
    %v2628 = vld [vmem:[%s2 + $0x308] sm:$0xff]
    %v2629 = vld [vmem:[%s2 + $0x310] sm:$0xff]
    %v2630 = vld [vmem:[%s2 + $0x318] sm:$0xff]
    %v2631 = vld [vmem:[%s2 + $0x320] sm:$0xff]
    %v2632 = vld [vmem:[%s2 + $0x328] sm:$0xff]
    %v2634 = vsel %vm256, %v2595, 0
    %v2637 = vsel %vm256, %v2596, 0
    %v2640 = vsel %vm256, %v2597, 0
    %2642 = vmatprep.subr.mxu0 0.0
    %2643 = vmatpush1.xpose.msra.mxu0 0.0
    %2644 = vmatprep.subr.mxu0 0.0
    %2645 = vmatpush1.xpose.msra.mxu0 0.0
    %2646 = vmatprep.subr.mxu0 0.0
    %2647 = vmatpush1.xpose.msra.mxu0 0.0
    %2648 = vmatprep.subr.mxu0 0.0
    %2649 = vmatpush1.xpose.msra.mxu0 0.0
    %2650 = vmatprep.subr.mxu0 0.0
    %2651 = vmatpush1.xpose.msra.mxu0 0.0
    %2652 = vmatprep.subr.mxu0 0.0
    %2653 = vmatpush1.xpose.msra.mxu0 0.0
    %2654 = vmatprep.subr.mxu0 0.0
    %2655 = vmatpush1.xpose.msra.mxu0 0.0
    %2656 = vmatprep.subr.mxu0 0.0
    %2657 = vmatpush1.xpose.msra.mxu0 0.0
    %2658 = vmatprep.subr.mxu0 0.0
    %2659 = vmatpush1.xpose.msra.mxu0 0.0
    %2660 = vmatprep.subr.mxu0 0.0
    %2661 = vmatpush1.xpose.msra.mxu0 0.0
    %2662 = vmatprep.subr.mxu0 0.0
    %2663 = vmatpush1.xpose.msra.mxu0 0.0
    %2664 = vmatprep.subr.mxu0 0.0
    %2665 = vmatpush1.xpose.msra.mxu0 0.0
    %2666 = vmatprep.subr.mxu0 0.0
    %2667 = vmatpush1.xpose.msra.mxu0 0.0
    %2668 = vmatprep.subr.mxu0 0.0
    %2669 = vmatpush1.xpose.msra.mxu0 0.0
    %2670 = vmatprep.subr.mxu0 0.0
    %2671 = vmatpush1.xpose.msra.mxu0 0.0
    %2672 = vmatprep.subr.mxu0 0.0
    %2673 = vmatpush1.xpose.msra.mxu0 %v2640
    %2674 = vmatprep.subr.mxu0 0.0
    %2675 = vmatpush2.xpose.msra.mxu0 0.0
    %2676 = vmatprep.subr.mxu0 0.0
    %2677 = vmatpush2.xpose.msra.mxu0 0.0
    %2678 = vmatprep.subr.mxu0 0.0
    %2679 = vmatpush2.xpose.msra.mxu0 0.0
    %2680 = vmatprep.subr.mxu0 0.0
    %2681 = vmatpush2.xpose.msra.mxu0 0.0
    %2682 = vmatprep.subr.mxu0 0.0
    %2683 = vmatpush2.xpose.msra.mxu0 0.0
    %2684 = vmatprep.subr.mxu0 0.0
    %2685 = vmatpush2.xpose.msra.mxu0 0.0
    %2686 = vmatprep.subr.mxu0 0.0
    %2687 = vmatpush2.xpose.msra.mxu0 0.0
    %2688 = vmatprep.subr.mxu0 0.0
    %2689 = vmatpush2.xpose.msra.mxu0 0.0
    %2690 = vmatprep.subr.mxu0 0.0
    %2691 = vmatpush2.xpose.msra.mxu0 0.0
    %2692 = vmatprep.subr.mxu0 0.0
    %2693 = vmatpush2.xpose.msra.mxu0 0.0
    %2694 = vmatprep.subr.mxu0 0.0
    %2695 = vmatpush2.xpose.msra.mxu0 0.0
    %2696 = vmatprep.subr.mxu0 0.0
    %2697 = vmatpush2.xpose.msra.mxu0 0.0
    %2698 = vmatprep.subr.mxu0 0.0
    %2699 = vmatpush2.xpose.msra.mxu0 0.0
    %2700 = vmatprep.subr.mxu0 0.0
    %2701 = vmatpush2.xpose.msra.mxu0 0.0
    %2702 = vmatprep.subr.mxu0 0.0
    %2703 = vmatpush2.xpose.msra.mxu0 0.0
    %2704 = vmatprep.subr.mxu0 0.0
    %2705 = vmatpush2.xpose.msra.mxu0 0.0
    %2706 = vmatprep.mubr.f32.mxu0 0.0
    %2707 = vmatmul.mubr.f32.gmra.mxu0 %v2634
    %v2708 = vpop.f32.mrf.mxu0
    %v2709 = vadd.f32 %v2609, %v2708
    %v2710 = vpop.f32.mrf.mxu0
    %2711 = vmatprep.mubr.f32.mxu0 0.0
    %2712 = vmatmul.mubr.f32.gmra.mxu0 %v2637
    %v2713 = vpop.f32.mrf.mxu0
    %v2714 = vadd.f32 %v2610, %v2713
    %v2715 = vpop.f32.mrf.mxu0
    %2716 = vdwg.mxu0
    %v2718 = vsel %vm256, %v2598, 0
    %2720 = vmatprep.subr.mxu0 0.0
    %2721 = vmatpush1.xpose.msra.mxu0 0.0
    %2722 = vmatprep.subr.mxu0 0.0
    %2723 = vmatpush1.xpose.msra.mxu0 0.0
    %2724 = vmatprep.subr.mxu0 0.0
    %2725 = vmatpush1.xpose.msra.mxu0 0.0
    %2726 = vmatprep.subr.mxu0 0.0
    %2727 = vmatpush1.xpose.msra.mxu0 0.0
    %2728 = vmatprep.subr.mxu0 0.0
    %2729 = vmatpush1.xpose.msra.mxu0 0.0
    %2730 = vmatprep.subr.mxu0 0.0
    %2731 = vmatpush1.xpose.msra.mxu0 0.0
    %2732 = vmatprep.subr.mxu0 0.0
    %2733 = vmatpush1.xpose.msra.mxu0 0.0
    %2734 = vmatprep.subr.mxu0 0.0
    %2735 = vmatpush1.xpose.msra.mxu0 0.0
    %2736 = vmatprep.subr.mxu0 0.0
    %2737 = vmatpush1.xpose.msra.mxu0 0.0
    %2738 = vmatprep.subr.mxu0 0.0
    %2739 = vmatpush1.xpose.msra.mxu0 0.0
    %2740 = vmatprep.subr.mxu0 0.0
    %2741 = vmatpush1.xpose.msra.mxu0 0.0
    %2742 = vmatprep.subr.mxu0 0.0
    %2743 = vmatpush1.xpose.msra.mxu0 0.0
    %2744 = vmatprep.subr.mxu0 0.0
    %2745 = vmatpush1.xpose.msra.mxu0 0.0
    %2746 = vmatprep.subr.mxu0 0.0
    %2747 = vmatpush1.xpose.msra.mxu0 0.0
    %2748 = vmatprep.subr.mxu0 0.0
    %2749 = vmatpush1.xpose.msra.mxu0 0.0
    %2750 = vmatprep.subr.mxu0 0.0
    %2751 = vmatpush1.xpose.msra.mxu0 %v2718
    %2752 = vmatprep.subr.mxu0 0.0
    %2753 = vmatpush2.xpose.msra.mxu0 0.0
    %2754 = vmatprep.subr.mxu0 0.0
    %2755 = vmatpush2.xpose.msra.mxu0 0.0
    %2756 = vmatprep.subr.mxu0 0.0
    %2757 = vmatpush2.xpose.msra.mxu0 0.0
    %2758 = vmatprep.subr.mxu0 0.0
    %2759 = vmatpush2.xpose.msra.mxu0 0.0
    %2760 = vmatprep.subr.mxu0 0.0
    %2761 = vmatpush2.xpose.msra.mxu0 0.0
    %2762 = vmatprep.subr.mxu0 0.0
    %2763 = vmatpush2.xpose.msra.mxu0 0.0
    %2764 = vmatprep.subr.mxu0 0.0
    %2765 = vmatpush2.xpose.msra.mxu0 0.0
    %2766 = vmatprep.subr.mxu0 0.0
    %2767 = vmatpush2.xpose.msra.mxu0 0.0
    %2768 = vmatprep.subr.mxu0 0.0
    %2769 = vmatpush2.xpose.msra.mxu0 0.0
    %2770 = vmatprep.subr.mxu0 0.0
    %2771 = vmatpush2.xpose.msra.mxu0 0.0
    %2772 = vmatprep.subr.mxu0 0.0
    %2773 = vmatpush2.xpose.msra.mxu0 0.0
    %2774 = vmatprep.subr.mxu0 0.0
    %2775 = vmatpush2.xpose.msra.mxu0 0.0
    %2776 = vmatprep.subr.mxu0 0.0
    %2777 = vmatpush2.xpose.msra.mxu0 0.0
    %2778 = vmatprep.subr.mxu0 0.0
    %2779 = vmatpush2.xpose.msra.mxu0 0.0
    %2780 = vmatprep.subr.mxu0 0.0
    %2781 = vmatpush2.xpose.msra.mxu0 0.0
    %2782 = vmatprep.subr.mxu0 0.0
    %2783 = vmatpush2.xpose.msra.mxu0 0.0
    %2784 = vmatprep.mubr.f32.mxu0 0.0
    %2785 = vmatmul.mubr.f32.gmra.mxu0 %v2634
    %v2786 = vpop.f32.mrf.mxu0
    %v2787 = vadd.f32 %v2611, %v2786
    %v2788 = vpop.f32.mrf.mxu0
    %2789 = vmatprep.mubr.f32.mxu0 0.0
    %2790 = vmatmul.mubr.f32.gmra.mxu0 %v2637
    %v2791 = vpop.f32.mrf.mxu0
    %v2792 = vadd.f32 %v2612, %v2791
    %v2793 = vpop.f32.mrf.mxu0
    %2794 = vdwg.mxu0
    %v2796 = vsel %vm256, %v2599, 0
    %2798 = vmatprep.subr.mxu0 0.0
    %2799 = vmatpush1.xpose.msra.mxu0 0.0
    %2800 = vmatprep.subr.mxu0 0.0
    %2801 = vmatpush1.xpose.msra.mxu0 0.0
    %2802 = vmatprep.subr.mxu0 0.0
    %2803 = vmatpush1.xpose.msra.mxu0 0.0
    %2804 = vmatprep.subr.mxu0 0.0
    %2805 = vmatpush1.xpose.msra.mxu0 0.0
    %2806 = vmatprep.subr.mxu0 0.0
    %2807 = vmatpush1.xpose.msra.mxu0 0.0
    %2808 = vmatprep.subr.mxu0 0.0
    %2809 = vmatpush1.xpose.msra.mxu0 0.0
    %2810 = vmatprep.subr.mxu0 0.0
    %2811 = vmatpush1.xpose.msra.mxu0 0.0
    %2812 = vmatprep.subr.mxu0 0.0
    %2813 = vmatpush1.xpose.msra.mxu0 0.0
    %2814 = vmatprep.subr.mxu0 0.0
    %2815 = vmatpush1.xpose.msra.mxu0 0.0
    %2816 = vmatprep.subr.mxu0 0.0
    %2817 = vmatpush1.xpose.msra.mxu0 0.0
    %2818 = vmatprep.subr.mxu0 0.0
    %2819 = vmatpush1.xpose.msra.mxu0 0.0
    %2820 = vmatprep.subr.mxu0 0.0
    %2821 = vmatpush1.xpose.msra.mxu0 0.0
    %2822 = vmatprep.subr.mxu0 0.0
    %2823 = vmatpush1.xpose.msra.mxu0 0.0
    %2824 = vmatprep.subr.mxu0 0.0
    %2825 = vmatpush1.xpose.msra.mxu0 0.0
    %2826 = vmatprep.subr.mxu0 0.0
    %2827 = vmatpush1.xpose.msra.mxu0 0.0
    %2828 = vmatprep.subr.mxu0 0.0
    %2829 = vmatpush1.xpose.msra.mxu0 %v2796
    %2830 = vmatprep.subr.mxu0 0.0
    %2831 = vmatpush2.xpose.msra.mxu0 0.0
    %2832 = vmatprep.subr.mxu0 0.0
    %2833 = vmatpush2.xpose.msra.mxu0 0.0
    %2834 = vmatprep.subr.mxu0 0.0
    %2835 = vmatpush2.xpose.msra.mxu0 0.0
    %2836 = vmatprep.subr.mxu0 0.0
    %2837 = vmatpush2.xpose.msra.mxu0 0.0
    %2838 = vmatprep.subr.mxu0 0.0
    %2839 = vmatpush2.xpose.msra.mxu0 0.0
    %2840 = vmatprep.subr.mxu0 0.0
    %2841 = vmatpush2.xpose.msra.mxu0 0.0
    %2842 = vmatprep.subr.mxu0 0.0
    %2843 = vmatpush2.xpose.msra.mxu0 0.0
    %2844 = vmatprep.subr.mxu0 0.0
    %2845 = vmatpush2.xpose.msra.mxu0 0.0
    %2846 = vmatprep.subr.mxu0 0.0
    %2847 = vmatpush2.xpose.msra.mxu0 0.0
    %2848 = vmatprep.subr.mxu0 0.0
    %2849 = vmatpush2.xpose.msra.mxu0 0.0
    %2850 = vmatprep.subr.mxu0 0.0
    %2851 = vmatpush2.xpose.msra.mxu0 0.0
    %2852 = vmatprep.subr.mxu0 0.0
    %2853 = vmatpush2.xpose.msra.mxu0 0.0
    %2854 = vmatprep.subr.mxu0 0.0
    %2855 = vmatpush2.xpose.msra.mxu0 0.0
    %2856 = vmatprep.subr.mxu0 0.0
    %2857 = vmatpush2.xpose.msra.mxu0 0.0
    %2858 = vmatprep.subr.mxu0 0.0
    %2859 = vmatpush2.xpose.msra.mxu0 0.0
    %2860 = vmatprep.subr.mxu0 0.0
    %2861 = vmatpush2.xpose.msra.mxu0 0.0
    %2862 = vmatprep.mubr.f32.mxu0 0.0
    %2863 = vmatmul.mubr.f32.gmra.mxu0 %v2634
    %v2864 = vpop.f32.mrf.mxu0
    %v2865 = vadd.f32 %v2613, %v2864
    %v2866 = vpop.f32.mrf.mxu0
    %2867 = vmatprep.mubr.f32.mxu0 0.0
    %2868 = vmatmul.mubr.f32.gmra.mxu0 %v2637
    %v2869 = vpop.f32.mrf.mxu0
    %v2870 = vadd.f32 %v2614, %v2869
    %v2871 = vpop.f32.mrf.mxu0
    %2872 = vdwg.mxu0
    %v2874 = vsel %vm256, %v2600, 0
    %2876 = vmatprep.subr.mxu0 0.0
    %2877 = vmatpush1.xpose.msra.mxu0 0.0
    %2878 = vmatprep.subr.mxu0 0.0
    %2879 = vmatpush1.xpose.msra.mxu0 0.0
    %2880 = vmatprep.subr.mxu0 0.0
    %2881 = vmatpush1.xpose.msra.mxu0 0.0
    %2882 = vmatprep.subr.mxu0 0.0
    %2883 = vmatpush1.xpose.msra.mxu0 0.0
    %2884 = vmatprep.subr.mxu0 0.0
    %2885 = vmatpush1.xpose.msra.mxu0 0.0
    %2886 = vmatprep.subr.mxu0 0.0
    %2887 = vmatpush1.xpose.msra.mxu0 0.0
    %2888 = vmatprep.subr.mxu0 0.0
    %2889 = vmatpush1.xpose.msra.mxu0 0.0
    %2890 = vmatprep.subr.mxu0 0.0
    %2891 = vmatpush1.xpose.msra.mxu0 0.0
    %2892 = vmatprep.subr.mxu0 0.0
    %2893 = vmatpush1.xpose.msra.mxu0 0.0
    %2894 = vmatprep.subr.mxu0 0.0
    %2895 = vmatpush1.xpose.msra.mxu0 0.0
    %2896 = vmatprep.subr.mxu0 0.0
    %2897 = vmatpush1.xpose.msra.mxu0 0.0
    %2898 = vmatprep.subr.mxu0 0.0
    %2899 = vmatpush1.xpose.msra.mxu0 0.0
    %2900 = vmatprep.subr.mxu0 0.0
    %2901 = vmatpush1.xpose.msra.mxu0 0.0
    %2902 = vmatprep.subr.mxu0 0.0
    %2903 = vmatpush1.xpose.msra.mxu0 0.0
    %2904 = vmatprep.subr.mxu0 0.0
    %2905 = vmatpush1.xpose.msra.mxu0 0.0
    %2906 = vmatprep.subr.mxu0 0.0
    %2907 = vmatpush1.xpose.msra.mxu0 %v2874
    %2908 = vmatprep.subr.mxu0 0.0
    %2909 = vmatpush2.xpose.msra.mxu0 0.0
    %2910 = vmatprep.subr.mxu0 0.0
    %2911 = vmatpush2.xpose.msra.mxu0 0.0
    %2912 = vmatprep.subr.mxu0 0.0
    %2913 = vmatpush2.xpose.msra.mxu0 0.0
    %2914 = vmatprep.subr.mxu0 0.0
    %2915 = vmatpush2.xpose.msra.mxu0 0.0
    %2916 = vmatprep.subr.mxu0 0.0
    %2917 = vmatpush2.xpose.msra.mxu0 0.0
    %2918 = vmatprep.subr.mxu0 0.0
    %2919 = vmatpush2.xpose.msra.mxu0 0.0
    %2920 = vmatprep.subr.mxu0 0.0
    %2921 = vmatpush2.xpose.msra.mxu0 0.0
    %2922 = vmatprep.subr.mxu0 0.0
    %2923 = vmatpush2.xpose.msra.mxu0 0.0
    %2924 = vmatprep.subr.mxu0 0.0
    %2925 = vmatpush2.xpose.msra.mxu0 0.0
    %2926 = vmatprep.subr.mxu0 0.0
    %2927 = vmatpush2.xpose.msra.mxu0 0.0
    %2928 = vmatprep.subr.mxu0 0.0
    %2929 = vmatpush2.xpose.msra.mxu0 0.0
    %2930 = vmatprep.subr.mxu0 0.0
    %2931 = vmatpush2.xpose.msra.mxu0 0.0
    %2932 = vmatprep.subr.mxu0 0.0
    %2933 = vmatpush2.xpose.msra.mxu0 0.0
    %2934 = vmatprep.subr.mxu0 0.0
    %2935 = vmatpush2.xpose.msra.mxu0 0.0
    %2936 = vmatprep.subr.mxu0 0.0
    %2937 = vmatpush2.xpose.msra.mxu0 0.0
    %2938 = vmatprep.subr.mxu0 0.0
    %2939 = vmatpush2.xpose.msra.mxu0 0.0
    %2940 = vmatprep.mubr.f32.mxu0 0.0
    %2941 = vmatmul.mubr.f32.gmra.mxu0 %v2634
    %v2942 = vpop.f32.mrf.mxu0
    %v2943 = vadd.f32 %v2615, %v2942
    %v2944 = vpop.f32.mrf.mxu0
    %2945 = vmatprep.mubr.f32.mxu0 0.0
    %2946 = vmatmul.mubr.f32.gmra.mxu0 %v2637
    %v2947 = vpop.f32.mrf.mxu0
    %v2948 = vadd.f32 %v2616, %v2947
    %v2949 = vpop.f32.mrf.mxu0
    %2950 = vdwg.mxu0
    %v2952 = vsel %vm256, %v2601, 0
    %2954 = vmatprep.subr.mxu0 0.0
    %2955 = vmatpush1.xpose.msra.mxu0 0.0
    %2956 = vmatprep.subr.mxu0 0.0
    %2957 = vmatpush1.xpose.msra.mxu0 0.0
    %2958 = vmatprep.subr.mxu0 0.0
    %2959 = vmatpush1.xpose.msra.mxu0 0.0
    %2960 = vmatprep.subr.mxu0 0.0
    %2961 = vmatpush1.xpose.msra.mxu0 0.0
    %2962 = vmatprep.subr.mxu0 0.0
    %2963 = vmatpush1.xpose.msra.mxu0 0.0
    %2964 = vmatprep.subr.mxu0 0.0
    %2965 = vmatpush1.xpose.msra.mxu0 0.0
    %2966 = vmatprep.subr.mxu0 0.0
    %2967 = vmatpush1.xpose.msra.mxu0 0.0
    %2968 = vmatprep.subr.mxu0 0.0
    %2969 = vmatpush1.xpose.msra.mxu0 0.0
    %2970 = vmatprep.subr.mxu0 0.0
    %2971 = vmatpush1.xpose.msra.mxu0 0.0
    %2972 = vmatprep.subr.mxu0 0.0
    %2973 = vmatpush1.xpose.msra.mxu0 0.0
    %2974 = vmatprep.subr.mxu0 0.0
    %2975 = vmatpush1.xpose.msra.mxu0 0.0
    %2976 = vmatprep.subr.mxu0 0.0
    %2977 = vmatpush1.xpose.msra.mxu0 0.0
    %2978 = vmatprep.subr.mxu0 0.0
    %2979 = vmatpush1.xpose.msra.mxu0 0.0
    %2980 = vmatprep.subr.mxu0 0.0
    %2981 = vmatpush1.xpose.msra.mxu0 0.0
    %2982 = vmatprep.subr.mxu0 0.0
    %2983 = vmatpush1.xpose.msra.mxu0 0.0
    %2984 = vmatprep.subr.mxu0 0.0
    %2985 = vmatpush1.xpose.msra.mxu0 %v2952
    %2986 = vmatprep.subr.mxu0 0.0
    %2987 = vmatpush2.xpose.msra.mxu0 0.0
    %2988 = vmatprep.subr.mxu0 0.0
    %2989 = vmatpush2.xpose.msra.mxu0 0.0
    %2990 = vmatprep.subr.mxu0 0.0
    %2991 = vmatpush2.xpose.msra.mxu0 0.0
    %2992 = vmatprep.subr.mxu0 0.0
    %2993 = vmatpush2.xpose.msra.mxu0 0.0
    %2994 = vmatprep.subr.mxu0 0.0
    %2995 = vmatpush2.xpose.msra.mxu0 0.0
    %2996 = vmatprep.subr.mxu0 0.0
    %2997 = vmatpush2.xpose.msra.mxu0 0.0
    %2998 = vmatprep.subr.mxu0 0.0
    %2999 = vmatpush2.xpose.msra.mxu0 0.0
    %3000 = vmatprep.subr.mxu0 0.0
    %3001 = vmatpush2.xpose.msra.mxu0 0.0
    %3002 = vmatprep.subr.mxu0 0.0
    %3003 = vmatpush2.xpose.msra.mxu0 0.0
    %3004 = vmatprep.subr.mxu0 0.0
    %3005 = vmatpush2.xpose.msra.mxu0 0.0
    %3006 = vmatprep.subr.mxu0 0.0
    %3007 = vmatpush2.xpose.msra.mxu0 0.0
    %3008 = vmatprep.subr.mxu0 0.0
    %3009 = vmatpush2.xpose.msra.mxu0 0.0
    %3010 = vmatprep.subr.mxu0 0.0
    %3011 = vmatpush2.xpose.msra.mxu0 0.0
    %3012 = vmatprep.subr.mxu0 0.0
    %3013 = vmatpush2.xpose.msra.mxu0 0.0
    %3014 = vmatprep.subr.mxu0 0.0
    %3015 = vmatpush2.xpose.msra.mxu0 0.0
    %3016 = vmatprep.subr.mxu0 0.0
    %3017 = vmatpush2.xpose.msra.mxu0 0.0
    %3018 = vmatprep.mubr.f32.mxu0 0.0
    %3019 = vmatmul.mubr.f32.gmra.mxu0 %v2634
    %v3020 = vpop.f32.mrf.mxu0
    %v3021 = vadd.f32 %v2617, %v3020
    %v3022 = vpop.f32.mrf.mxu0
    %3023 = vmatprep.mubr.f32.mxu0 0.0
    %3024 = vmatmul.mubr.f32.gmra.mxu0 %v2637
    %v3025 = vpop.f32.mrf.mxu0
    %v3026 = vadd.f32 %v2618, %v3025
    %v3027 = vpop.f32.mrf.mxu0
    %3028 = vdwg.mxu0
    %v3030 = vsel %vm256, %v2602, 0
    %3032 = vmatprep.subr.mxu0 0.0
    %3033 = vmatpush1.xpose.msra.mxu0 0.0
    %3034 = vmatprep.subr.mxu0 0.0
    %3035 = vmatpush1.xpose.msra.mxu0 0.0
    %3036 = vmatprep.subr.mxu0 0.0
    %3037 = vmatpush1.xpose.msra.mxu0 0.0
    %3038 = vmatprep.subr.mxu0 0.0
    %3039 = vmatpush1.xpose.msra.mxu0 0.0
    %3040 = vmatprep.subr.mxu0 0.0
    %3041 = vmatpush1.xpose.msra.mxu0 0.0
    %3042 = vmatprep.subr.mxu0 0.0
    %3043 = vmatpush1.xpose.msra.mxu0 0.0
    %3044 = vmatprep.subr.mxu0 0.0
    %3045 = vmatpush1.xpose.msra.mxu0 0.0
    %3046 = vmatprep.subr.mxu0 0.0
    %3047 = vmatpush1.xpose.msra.mxu0 0.0
    %3048 = vmatprep.subr.mxu0 0.0
    %3049 = vmatpush1.xpose.msra.mxu0 0.0
    %3050 = vmatprep.subr.mxu0 0.0
    %3051 = vmatpush1.xpose.msra.mxu0 0.0
    %3052 = vmatprep.subr.mxu0 0.0
    %3053 = vmatpush1.xpose.msra.mxu0 0.0
    %3054 = vmatprep.subr.mxu0 0.0
    %3055 = vmatpush1.xpose.msra.mxu0 0.0
    %3056 = vmatprep.subr.mxu0 0.0
    %3057 = vmatpush1.xpose.msra.mxu0 0.0
    %3058 = vmatprep.subr.mxu0 0.0
    %3059 = vmatpush1.xpose.msra.mxu0 0.0
    %3060 = vmatprep.subr.mxu0 0.0
    %3061 = vmatpush1.xpose.msra.mxu0 0.0
    %3062 = vmatprep.subr.mxu0 0.0
    %3063 = vmatpush1.xpose.msra.mxu0 %v3030
    %3064 = vmatprep.subr.mxu0 0.0
    %3065 = vmatpush2.xpose.msra.mxu0 0.0
    %3066 = vmatprep.subr.mxu0 0.0
    %3067 = vmatpush2.xpose.msra.mxu0 0.0
    %3068 = vmatprep.subr.mxu0 0.0
    %3069 = vmatpush2.xpose.msra.mxu0 0.0
    %3070 = vmatprep.subr.mxu0 0.0
    %3071 = vmatpush2.xpose.msra.mxu0 0.0
    %3072 = vmatprep.subr.mxu0 0.0
    %3073 = vmatpush2.xpose.msra.mxu0 0.0
    %3074 = vmatprep.subr.mxu0 0.0
    %3075 = vmatpush2.xpose.msra.mxu0 0.0
    %3076 = vmatprep.subr.mxu0 0.0
    %3077 = vmatpush2.xpose.msra.mxu0 0.0
    %3078 = vmatprep.subr.mxu0 0.0
    %3079 = vmatpush2.xpose.msra.mxu0 0.0
    %3080 = vmatprep.subr.mxu0 0.0
    %3081 = vmatpush2.xpose.msra.mxu0 0.0
    %3082 = vmatprep.subr.mxu0 0.0
    %3083 = vmatpush2.xpose.msra.mxu0 0.0
    %3084 = vmatprep.subr.mxu0 0.0
    %3085 = vmatpush2.xpose.msra.mxu0 0.0
    %3086 = vmatprep.subr.mxu0 0.0
    %3087 = vmatpush2.xpose.msra.mxu0 0.0
    %3088 = vmatprep.subr.mxu0 0.0
    %3089 = vmatpush2.xpose.msra.mxu0 0.0
    %3090 = vmatprep.subr.mxu0 0.0
    %3091 = vmatpush2.xpose.msra.mxu0 0.0
    %3092 = vmatprep.subr.mxu0 0.0
    %3093 = vmatpush2.xpose.msra.mxu0 0.0
    %3094 = vmatprep.subr.mxu0 0.0
    %3095 = vmatpush2.xpose.msra.mxu0 0.0
    %3096 = vmatprep.mubr.f32.mxu0 0.0
    %3097 = vmatmul.mubr.f32.gmra.mxu0 %v2634
    %v3098 = vpop.f32.mrf.mxu0
    %v3099 = vadd.f32 %v2619, %v3098
    %v3100 = vpop.f32.mrf.mxu0
    %3101 = vmatprep.mubr.f32.mxu0 0.0
    %3102 = vmatmul.mubr.f32.gmra.mxu0 %v2637
    %v3103 = vpop.f32.mrf.mxu0
    %v3104 = vadd.f32 %v2620, %v3103
    %v3105 = vpop.f32.mrf.mxu0
    %3106 = vdwg.mxu0
    %v3108 = vsel %vm256, %v2603, 0
    %3110 = vmatprep.subr.mxu0 0.0
    %3111 = vmatpush1.xpose.msra.mxu0 0.0
    %3112 = vmatprep.subr.mxu0 0.0
    %3113 = vmatpush1.xpose.msra.mxu0 0.0
    %3114 = vmatprep.subr.mxu0 0.0
    %3115 = vmatpush1.xpose.msra.mxu0 0.0
    %3116 = vmatprep.subr.mxu0 0.0
    %3117 = vmatpush1.xpose.msra.mxu0 0.0
    %3118 = vmatprep.subr.mxu0 0.0
    %3119 = vmatpush1.xpose.msra.mxu0 0.0
    %3120 = vmatprep.subr.mxu0 0.0
    %3121 = vmatpush1.xpose.msra.mxu0 0.0
    %3122 = vmatprep.subr.mxu0 0.0
    %3123 = vmatpush1.xpose.msra.mxu0 0.0
    %3124 = vmatprep.subr.mxu0 0.0
    %3125 = vmatpush1.xpose.msra.mxu0 0.0
    %3126 = vmatprep.subr.mxu0 0.0
    %3127 = vmatpush1.xpose.msra.mxu0 0.0
    %3128 = vmatprep.subr.mxu0 0.0
    %3129 = vmatpush1.xpose.msra.mxu0 0.0
    %3130 = vmatprep.subr.mxu0 0.0
    %3131 = vmatpush1.xpose.msra.mxu0 0.0
    %3132 = vmatprep.subr.mxu0 0.0
    %3133 = vmatpush1.xpose.msra.mxu0 0.0
    %3134 = vmatprep.subr.mxu0 0.0
    %3135 = vmatpush1.xpose.msra.mxu0 0.0
    %3136 = vmatprep.subr.mxu0 0.0
    %3137 = vmatpush1.xpose.msra.mxu0 0.0
    %3138 = vmatprep.subr.mxu0 0.0
    %3139 = vmatpush1.xpose.msra.mxu0 0.0
    %3140 = vmatprep.subr.mxu0 0.0
    %3141 = vmatpush1.xpose.msra.mxu0 %v3108
    %3142 = vmatprep.subr.mxu0 0.0
    %3143 = vmatpush2.xpose.msra.mxu0 0.0
    %3144 = vmatprep.subr.mxu0 0.0
    %3145 = vmatpush2.xpose.msra.mxu0 0.0
    %3146 = vmatprep.subr.mxu0 0.0
    %3147 = vmatpush2.xpose.msra.mxu0 0.0
    %3148 = vmatprep.subr.mxu0 0.0
    %3149 = vmatpush2.xpose.msra.mxu0 0.0
    %3150 = vmatprep.subr.mxu0 0.0
    %3151 = vmatpush2.xpose.msra.mxu0 0.0
    %3152 = vmatprep.subr.mxu0 0.0
    %3153 = vmatpush2.xpose.msra.mxu0 0.0
    %3154 = vmatprep.subr.mxu0 0.0
    %3155 = vmatpush2.xpose.msra.mxu0 0.0
    %3156 = vmatprep.subr.mxu0 0.0
    %3157 = vmatpush2.xpose.msra.mxu0 0.0
    %3158 = vmatprep.subr.mxu0 0.0
    %3159 = vmatpush2.xpose.msra.mxu0 0.0
    %3160 = vmatprep.subr.mxu0 0.0
    %3161 = vmatpush2.xpose.msra.mxu0 0.0
    %3162 = vmatprep.subr.mxu0 0.0
    %3163 = vmatpush2.xpose.msra.mxu0 0.0
    %3164 = vmatprep.subr.mxu0 0.0
    %3165 = vmatpush2.xpose.msra.mxu0 0.0
    %3166 = vmatprep.subr.mxu0 0.0
    %3167 = vmatpush2.xpose.msra.mxu0 0.0
    %3168 = vmatprep.subr.mxu0 0.0
    %3169 = vmatpush2.xpose.msra.mxu0 0.0
    %3170 = vmatprep.subr.mxu0 0.0
    %3171 = vmatpush2.xpose.msra.mxu0 0.0
    %3172 = vmatprep.subr.mxu0 0.0
    %3173 = vmatpush2.xpose.msra.mxu0 0.0
    %3174 = vmatprep.mubr.f32.mxu0 0.0
    %3175 = vmatmul.mubr.f32.gmra.mxu0 %v2634
    %v3176 = vpop.f32.mrf.mxu0
    %v3177 = vadd.f32 %v2621, %v3176
    %v3178 = vpop.f32.mrf.mxu0
    %3179 = vmatprep.mubr.f32.mxu0 0.0
    %3180 = vmatmul.mubr.f32.gmra.mxu0 %v2637
    %v3181 = vpop.f32.mrf.mxu0
    %v3182 = vadd.f32 %v2622, %v3181
    %v3183 = vpop.f32.mrf.mxu0
    %3184 = vdwg.mxu0
    %v3186 = vsel %vm256, %v2604, 0
    %3188 = vmatprep.subr.mxu0 0.0
    %3189 = vmatpush1.xpose.msra.mxu0 0.0
    %3190 = vmatprep.subr.mxu0 0.0
    %3191 = vmatpush1.xpose.msra.mxu0 0.0
    %3192 = vmatprep.subr.mxu0 0.0
    %3193 = vmatpush1.xpose.msra.mxu0 0.0
    %3194 = vmatprep.subr.mxu0 0.0
    %3195 = vmatpush1.xpose.msra.mxu0 0.0
    %3196 = vmatprep.subr.mxu0 0.0
    %3197 = vmatpush1.xpose.msra.mxu0 0.0
    %3198 = vmatprep.subr.mxu0 0.0
    %3199 = vmatpush1.xpose.msra.mxu0 0.0
    %3200 = vmatprep.subr.mxu0 0.0
    %3201 = vmatpush1.xpose.msra.mxu0 0.0
    %3202 = vmatprep.subr.mxu0 0.0
    %3203 = vmatpush1.xpose.msra.mxu0 0.0
    %3204 = vmatprep.subr.mxu0 0.0
    %3205 = vmatpush1.xpose.msra.mxu0 0.0
    %3206 = vmatprep.subr.mxu0 0.0
    %3207 = vmatpush1.xpose.msra.mxu0 0.0
    %3208 = vmatprep.subr.mxu0 0.0
    %3209 = vmatpush1.xpose.msra.mxu0 0.0
    %3210 = vmatprep.subr.mxu0 0.0
    %3211 = vmatpush1.xpose.msra.mxu0 0.0
    %3212 = vmatprep.subr.mxu0 0.0
    %3213 = vmatpush1.xpose.msra.mxu0 0.0
    %3214 = vmatprep.subr.mxu0 0.0
    %3215 = vmatpush1.xpose.msra.mxu0 0.0
    %3216 = vmatprep.subr.mxu0 0.0
    %3217 = vmatpush1.xpose.msra.mxu0 0.0
    %3218 = vmatprep.subr.mxu0 0.0
    %3219 = vmatpush1.xpose.msra.mxu0 %v3186
    %3220 = vmatprep.subr.mxu0 0.0
    %3221 = vmatpush2.xpose.msra.mxu0 0.0
    %3222 = vmatprep.subr.mxu0 0.0
    %3223 = vmatpush2.xpose.msra.mxu0 0.0
    %3224 = vmatprep.subr.mxu0 0.0
    %3225 = vmatpush2.xpose.msra.mxu0 0.0
    %3226 = vmatprep.subr.mxu0 0.0
    %3227 = vmatpush2.xpose.msra.mxu0 0.0
    %3228 = vmatprep.subr.mxu0 0.0
    %3229 = vmatpush2.xpose.msra.mxu0 0.0
    %3230 = vmatprep.subr.mxu0 0.0
    %3231 = vmatpush2.xpose.msra.mxu0 0.0
    %3232 = vmatprep.subr.mxu0 0.0
    %3233 = vmatpush2.xpose.msra.mxu0 0.0
    %3234 = vmatprep.subr.mxu0 0.0
    %3235 = vmatpush2.xpose.msra.mxu0 0.0
    %3236 = vmatprep.subr.mxu0 0.0
    %3237 = vmatpush2.xpose.msra.mxu0 0.0
    %3238 = vmatprep.subr.mxu0 0.0
    %3239 = vmatpush2.xpose.msra.mxu0 0.0
    %3240 = vmatprep.subr.mxu0 0.0
    %3241 = vmatpush2.xpose.msra.mxu0 0.0
    %3242 = vmatprep.subr.mxu0 0.0
    %3243 = vmatpush2.xpose.msra.mxu0 0.0
    %3244 = vmatprep.subr.mxu0 0.0
    %3245 = vmatpush2.xpose.msra.mxu0 0.0
    %3246 = vmatprep.subr.mxu0 0.0
    %3247 = vmatpush2.xpose.msra.mxu0 0.0
    %3248 = vmatprep.subr.mxu0 0.0
    %3249 = vmatpush2.xpose.msra.mxu0 0.0
    %3250 = vmatprep.subr.mxu0 0.0
    %3251 = vmatpush2.xpose.msra.mxu0 0.0
    %3252 = vmatprep.mubr.f32.mxu0 0.0
    %3253 = vmatmul.mubr.f32.gmra.mxu0 %v2634
    %v3254 = vpop.f32.mrf.mxu0
    %v3255 = vadd.f32 %v2623, %v3254
    %v3256 = vpop.f32.mrf.mxu0
    %3257 = vmatprep.mubr.f32.mxu0 0.0
    %3258 = vmatmul.mubr.f32.gmra.mxu0 %v2637
    %v3259 = vpop.f32.mrf.mxu0
    %v3260 = vadd.f32 %v2624, %v3259
    %v3261 = vpop.f32.mrf.mxu0
    %3262 = vdwg.mxu0
    %v3264 = vsel %vm256, %v2605, 0
    %3266 = vmatprep.subr.mxu0 0.0
    %3267 = vmatpush1.xpose.msra.mxu0 0.0
    %3268 = vmatprep.subr.mxu0 0.0
    %3269 = vmatpush1.xpose.msra.mxu0 0.0
    %3270 = vmatprep.subr.mxu0 0.0
    %3271 = vmatpush1.xpose.msra.mxu0 0.0
    %3272 = vmatprep.subr.mxu0 0.0
    %3273 = vmatpush1.xpose.msra.mxu0 0.0
    %3274 = vmatprep.subr.mxu0 0.0
    %3275 = vmatpush1.xpose.msra.mxu0 0.0
    %3276 = vmatprep.subr.mxu0 0.0
    %3277 = vmatpush1.xpose.msra.mxu0 0.0
    %3278 = vmatprep.subr.mxu0 0.0
    %3279 = vmatpush1.xpose.msra.mxu0 0.0
    %3280 = vmatprep.subr.mxu0 0.0
    %3281 = vmatpush1.xpose.msra.mxu0 0.0
    %3282 = vmatprep.subr.mxu0 0.0
    %3283 = vmatpush1.xpose.msra.mxu0 0.0
    %3284 = vmatprep.subr.mxu0 0.0
    %3285 = vmatpush1.xpose.msra.mxu0 0.0
    %3286 = vmatprep.subr.mxu0 0.0
    %3287 = vmatpush1.xpose.msra.mxu0 0.0
    %3288 = vmatprep.subr.mxu0 0.0
    %3289 = vmatpush1.xpose.msra.mxu0 0.0
    %3290 = vmatprep.subr.mxu0 0.0
    %3291 = vmatpush1.xpose.msra.mxu0 0.0
    %3292 = vmatprep.subr.mxu0 0.0
    %3293 = vmatpush1.xpose.msra.mxu0 0.0
    %3294 = vmatprep.subr.mxu0 0.0
    %3295 = vmatpush1.xpose.msra.mxu0 0.0
    %3296 = vmatprep.subr.mxu0 0.0
    %3297 = vmatpush1.xpose.msra.mxu0 %v3264
    %3298 = vmatprep.subr.mxu0 0.0
    %3299 = vmatpush2.xpose.msra.mxu0 0.0
    %3300 = vmatprep.subr.mxu0 0.0
    %3301 = vmatpush2.xpose.msra.mxu0 0.0
    %3302 = vmatprep.subr.mxu0 0.0
    %3303 = vmatpush2.xpose.msra.mxu0 0.0
    %3304 = vmatprep.subr.mxu0 0.0
    %3305 = vmatpush2.xpose.msra.mxu0 0.0
    %3306 = vmatprep.subr.mxu0 0.0
    %3307 = vmatpush2.xpose.msra.mxu0 0.0
    %3308 = vmatprep.subr.mxu0 0.0
    %3309 = vmatpush2.xpose.msra.mxu0 0.0
    %3310 = vmatprep.subr.mxu0 0.0
    %3311 = vmatpush2.xpose.msra.mxu0 0.0
    %3312 = vmatprep.subr.mxu0 0.0
    %3313 = vmatpush2.xpose.msra.mxu0 0.0
    %3314 = vmatprep.subr.mxu0 0.0
    %3315 = vmatpush2.xpose.msra.mxu0 0.0
    %3316 = vmatprep.subr.mxu0 0.0
    %3317 = vmatpush2.xpose.msra.mxu0 0.0
    %3318 = vmatprep.subr.mxu0 0.0
    %3319 = vmatpush2.xpose.msra.mxu0 0.0
    %3320 = vmatprep.subr.mxu0 0.0
    %3321 = vmatpush2.xpose.msra.mxu0 0.0
    %3322 = vmatprep.subr.mxu0 0.0
    %3323 = vmatpush2.xpose.msra.mxu0 0.0
    %3324 = vmatprep.subr.mxu0 0.0
    %3325 = vmatpush2.xpose.msra.mxu0 0.0
    %3326 = vmatprep.subr.mxu0 0.0
    %3327 = vmatpush2.xpose.msra.mxu0 0.0
    %3328 = vmatprep.subr.mxu0 0.0
    %3329 = vmatpush2.xpose.msra.mxu0 0.0
    %3330 = vmatprep.mubr.f32.mxu0 0.0
    %3331 = vmatmul.mubr.f32.gmra.mxu0 %v2634
    %v3332 = vpop.f32.mrf.mxu0
    %v3333 = vadd.f32 %v2625, %v3332
    %v3334 = vpop.f32.mrf.mxu0
    %3335 = vmatprep.mubr.f32.mxu0 0.0
    %3336 = vmatmul.mubr.f32.gmra.mxu0 %v2637
    %v3337 = vpop.f32.mrf.mxu0
    %v3338 = vadd.f32 %v2626, %v3337
    %v3339 = vpop.f32.mrf.mxu0
    %3340 = vdwg.mxu0
    %v3342 = vsel %vm256, %v2606, 0
    %3344 = vmatprep.subr.mxu0 0.0
    %3345 = vmatpush1.xpose.msra.mxu0 0.0
    %3346 = vmatprep.subr.mxu0 0.0
    %3347 = vmatpush1.xpose.msra.mxu0 0.0
    %3348 = vmatprep.subr.mxu0 0.0
    %3349 = vmatpush1.xpose.msra.mxu0 0.0
    %3350 = vmatprep.subr.mxu0 0.0
    %3351 = vmatpush1.xpose.msra.mxu0 0.0
    %3352 = vmatprep.subr.mxu0 0.0
    %3353 = vmatpush1.xpose.msra.mxu0 0.0
    %3354 = vmatprep.subr.mxu0 0.0
    %3355 = vmatpush1.xpose.msra.mxu0 0.0
    %3356 = vmatprep.subr.mxu0 0.0
    %3357 = vmatpush1.xpose.msra.mxu0 0.0
    %3358 = vmatprep.subr.mxu0 0.0
    %3359 = vmatpush1.xpose.msra.mxu0 0.0
    %3360 = vmatprep.subr.mxu0 0.0
    %3361 = vmatpush1.xpose.msra.mxu0 0.0
    %3362 = vmatprep.subr.mxu0 0.0
    %3363 = vmatpush1.xpose.msra.mxu0 0.0
    %3364 = vmatprep.subr.mxu0 0.0
    %3365 = vmatpush1.xpose.msra.mxu0 0.0
    %3366 = vmatprep.subr.mxu0 0.0
    %3367 = vmatpush1.xpose.msra.mxu0 0.0
    %3368 = vmatprep.subr.mxu0 0.0
    %3369 = vmatpush1.xpose.msra.mxu0 0.0
    %3370 = vmatprep.subr.mxu0 0.0
    %3371 = vmatpush1.xpose.msra.mxu0 0.0
    %3372 = vmatprep.subr.mxu0 0.0
    %3373 = vmatpush1.xpose.msra.mxu0 0.0
    %3374 = vmatprep.subr.mxu0 0.0
    %3375 = vmatpush1.xpose.msra.mxu0 %v3342
    %3376 = vmatprep.subr.mxu0 0.0
    %3377 = vmatpush2.xpose.msra.mxu0 0.0
    %3378 = vmatprep.subr.mxu0 0.0
    %3379 = vmatpush2.xpose.msra.mxu0 0.0
    %3380 = vmatprep.subr.mxu0 0.0
    %3381 = vmatpush2.xpose.msra.mxu0 0.0
    %3382 = vmatprep.subr.mxu0 0.0
    %3383 = vmatpush2.xpose.msra.mxu0 0.0
    %3384 = vmatprep.subr.mxu0 0.0
    %3385 = vmatpush2.xpose.msra.mxu0 0.0
    %3386 = vmatprep.subr.mxu0 0.0
    %3387 = vmatpush2.xpose.msra.mxu0 0.0
    %3388 = vmatprep.subr.mxu0 0.0
    %3389 = vmatpush2.xpose.msra.mxu0 0.0
    %3390 = vmatprep.subr.mxu0 0.0
    %3391 = vmatpush2.xpose.msra.mxu0 0.0
    %3392 = vmatprep.subr.mxu0 0.0
    %3393 = vmatpush2.xpose.msra.mxu0 0.0
    %3394 = vmatprep.subr.mxu0 0.0
    %3395 = vmatpush2.xpose.msra.mxu0 0.0
    %3396 = vmatprep.subr.mxu0 0.0
    %3397 = vmatpush2.xpose.msra.mxu0 0.0
    %3398 = vmatprep.subr.mxu0 0.0
    %3399 = vmatpush2.xpose.msra.mxu0 0.0
    %3400 = vmatprep.subr.mxu0 0.0
    %3401 = vmatpush2.xpose.msra.mxu0 0.0
    %3402 = vmatprep.subr.mxu0 0.0
    %3403 = vmatpush2.xpose.msra.mxu0 0.0
    %3404 = vmatprep.subr.mxu0 0.0
    %3405 = vmatpush2.xpose.msra.mxu0 0.0
    %3406 = vmatprep.subr.mxu0 0.0
    %3407 = vmatpush2.xpose.msra.mxu0 0.0
    %3408 = vmatprep.mubr.f32.mxu0 0.0
    %3409 = vmatmul.mubr.f32.gmra.mxu0 %v2634
    %v3410 = vpop.f32.mrf.mxu0
    %v3411 = vadd.f32 %v2627, %v3410
    %v3412 = vpop.f32.mrf.mxu0
    %3413 = vmatprep.mubr.f32.mxu0 0.0
    %3414 = vmatmul.mubr.f32.gmra.mxu0 %v2637
    %v3415 = vpop.f32.mrf.mxu0
    %v3416 = vadd.f32 %v2628, %v3415
    %v3417 = vpop.f32.mrf.mxu0
    %3418 = vdwg.mxu0
    %v3420 = vsel %vm256, %v2607, 0
    %3422 = vmatprep.subr.mxu0 0.0
    %3423 = vmatpush1.xpose.msra.mxu0 0.0
    %3424 = vmatprep.subr.mxu0 0.0
    %3425 = vmatpush1.xpose.msra.mxu0 0.0
    %3426 = vmatprep.subr.mxu0 0.0
    %3427 = vmatpush1.xpose.msra.mxu0 0.0
    %3428 = vmatprep.subr.mxu0 0.0
    %3429 = vmatpush1.xpose.msra.mxu0 0.0
    %3430 = vmatprep.subr.mxu0 0.0
    %3431 = vmatpush1.xpose.msra.mxu0 0.0
    %3432 = vmatprep.subr.mxu0 0.0
    %3433 = vmatpush1.xpose.msra.mxu0 0.0
    %3434 = vmatprep.subr.mxu0 0.0
    %3435 = vmatpush1.xpose.msra.mxu0 0.0
    %3436 = vmatprep.subr.mxu0 0.0
    %3437 = vmatpush1.xpose.msra.mxu0 0.0
    %3438 = vmatprep.subr.mxu0 0.0
    %3439 = vmatpush1.xpose.msra.mxu0 0.0
    %3440 = vmatprep.subr.mxu0 0.0
    %3441 = vmatpush1.xpose.msra.mxu0 0.0
    %3442 = vmatprep.subr.mxu0 0.0
    %3443 = vmatpush1.xpose.msra.mxu0 0.0
    %3444 = vmatprep.subr.mxu0 0.0
    %3445 = vmatpush1.xpose.msra.mxu0 0.0
    %3446 = vmatprep.subr.mxu0 0.0
    %3447 = vmatpush1.xpose.msra.mxu0 0.0
    %3448 = vmatprep.subr.mxu0 0.0
    %3449 = vmatpush1.xpose.msra.mxu0 0.0
    %3450 = vmatprep.subr.mxu0 0.0
    %3451 = vmatpush1.xpose.msra.mxu0 0.0
    %3452 = vmatprep.subr.mxu0 0.0
    %3453 = vmatpush1.xpose.msra.mxu0 %v3420
    %3454 = vmatprep.subr.mxu0 0.0
    %3455 = vmatpush2.xpose.msra.mxu0 0.0
    %3456 = vmatprep.subr.mxu0 0.0
    %3457 = vmatpush2.xpose.msra.mxu0 0.0
    %3458 = vmatprep.subr.mxu0 0.0
    %3459 = vmatpush2.xpose.msra.mxu0 0.0
    %3460 = vmatprep.subr.mxu0 0.0
    %3461 = vmatpush2.xpose.msra.mxu0 0.0
    %3462 = vmatprep.subr.mxu0 0.0
    %3463 = vmatpush2.xpose.msra.mxu0 0.0
    %3464 = vmatprep.subr.mxu0 0.0
    %3465 = vmatpush2.xpose.msra.mxu0 0.0
    %3466 = vmatprep.subr.mxu0 0.0
    %3467 = vmatpush2.xpose.msra.mxu0 0.0
    %3468 = vmatprep.subr.mxu0 0.0
    %3469 = vmatpush2.xpose.msra.mxu0 0.0
    %3470 = vmatprep.subr.mxu0 0.0
    %3471 = vmatpush2.xpose.msra.mxu0 0.0
    %3472 = vmatprep.subr.mxu0 0.0
    %3473 = vmatpush2.xpose.msra.mxu0 0.0
    %3474 = vmatprep.subr.mxu0 0.0
    %3475 = vmatpush2.xpose.msra.mxu0 0.0
    %3476 = vmatprep.subr.mxu0 0.0
    %3477 = vmatpush2.xpose.msra.mxu0 0.0
    %3478 = vmatprep.subr.mxu0 0.0
    %3479 = vmatpush2.xpose.msra.mxu0 0.0
    %3480 = vmatprep.subr.mxu0 0.0
    %3481 = vmatpush2.xpose.msra.mxu0 0.0
    %3482 = vmatprep.subr.mxu0 0.0
    %3483 = vmatpush2.xpose.msra.mxu0 0.0
    %3484 = vmatprep.subr.mxu0 0.0
    %3485 = vmatpush2.xpose.msra.mxu0 0.0
    %3486 = vmatprep.mubr.f32.mxu0 0.0
    %3487 = vmatmul.mubr.f32.gmra.mxu0 %v2634
    %v3488 = vpop.f32.mrf.mxu0
    %v3489 = vadd.f32 %v2629, %v3488
    %v3490 = vpop.f32.mrf.mxu0
    %3491 = vmatprep.mubr.f32.mxu0 0.0
    %3492 = vmatmul.mubr.f32.gmra.mxu0 %v2637
    %v3493 = vpop.f32.mrf.mxu0
    %v3494 = vadd.f32 %v2630, %v3493
    %v3495 = vpop.f32.mrf.mxu0
    %3496 = vdwg.mxu0
    %v3498 = vsel %vm256, %v2608, 0
    %3500 = vmatprep.subr.mxu0 0.0
    %3501 = vmatpush1.xpose.msra.mxu0 0.0
    %3502 = vmatprep.subr.mxu0 0.0
    %3503 = vmatpush1.xpose.msra.mxu0 0.0
    %3504 = vmatprep.subr.mxu0 0.0
    %3505 = vmatpush1.xpose.msra.mxu0 0.0
    %3506 = vmatprep.subr.mxu0 0.0
    %3507 = vmatpush1.xpose.msra.mxu0 0.0
    %3508 = vmatprep.subr.mxu0 0.0
    %3509 = vmatpush1.xpose.msra.mxu0 0.0
    %3510 = vmatprep.subr.mxu0 0.0
    %3511 = vmatpush1.xpose.msra.mxu0 0.0
    %3512 = vmatprep.subr.mxu0 0.0
    %3513 = vmatpush1.xpose.msra.mxu0 0.0
    %3514 = vmatprep.subr.mxu0 0.0
    %3515 = vmatpush1.xpose.msra.mxu0 0.0
    %3516 = vmatprep.subr.mxu0 0.0
    %3517 = vmatpush1.xpose.msra.mxu0 0.0
    %3518 = vmatprep.subr.mxu0 0.0
    %3519 = vmatpush1.xpose.msra.mxu0 0.0
    %3520 = vmatprep.subr.mxu0 0.0
    %3521 = vmatpush1.xpose.msra.mxu0 0.0
    %3522 = vmatprep.subr.mxu0 0.0
    %3523 = vmatpush1.xpose.msra.mxu0 0.0
    %3524 = vmatprep.subr.mxu0 0.0
    %3525 = vmatpush1.xpose.msra.mxu0 0.0
    %3526 = vmatprep.subr.mxu0 0.0
    %3527 = vmatpush1.xpose.msra.mxu0 0.0
    %3528 = vmatprep.subr.mxu0 0.0
    %3529 = vmatpush1.xpose.msra.mxu0 0.0
    %3530 = vmatprep.subr.mxu0 0.0
    %3531 = vmatpush1.xpose.msra.mxu0 %v3498
    %3532 = vmatprep.subr.mxu0 0.0
    %3533 = vmatpush2.xpose.msra.mxu0 0.0
    %3534 = vmatprep.subr.mxu0 0.0
    %3535 = vmatpush2.xpose.msra.mxu0 0.0
    %3536 = vmatprep.subr.mxu0 0.0
    %3537 = vmatpush2.xpose.msra.mxu0 0.0
    %3538 = vmatprep.subr.mxu0 0.0
    %3539 = vmatpush2.xpose.msra.mxu0 0.0
    %3540 = vmatprep.subr.mxu0 0.0
    %3541 = vmatpush2.xpose.msra.mxu0 0.0
    %3542 = vmatprep.subr.mxu0 0.0
    %3543 = vmatpush2.xpose.msra.mxu0 0.0
    %3544 = vmatprep.subr.mxu0 0.0
    %3545 = vmatpush2.xpose.msra.mxu0 0.0
    %3546 = vmatprep.subr.mxu0 0.0
    %3547 = vmatpush2.xpose.msra.mxu0 0.0
    %3548 = vmatprep.subr.mxu0 0.0
    %3549 = vmatpush2.xpose.msra.mxu0 0.0
    %3550 = vmatprep.subr.mxu0 0.0
    %3551 = vmatpush2.xpose.msra.mxu0 0.0
    %3552 = vmatprep.subr.mxu0 0.0
    %3553 = vmatpush2.xpose.msra.mxu0 0.0
    %3554 = vmatprep.subr.mxu0 0.0
    %3555 = vmatpush2.xpose.msra.mxu0 0.0
    %3556 = vmatprep.subr.mxu0 0.0
    %3557 = vmatpush2.xpose.msra.mxu0 0.0
    %3558 = vmatprep.subr.mxu0 0.0
    %3559 = vmatpush2.xpose.msra.mxu0 0.0
    %3560 = vmatprep.subr.mxu0 0.0
    %3561 = vmatpush2.xpose.msra.mxu0 0.0
    %3562 = vmatprep.subr.mxu0 0.0
    %3563 = vmatpush2.xpose.msra.mxu0 0.0
    %3564 = vmatprep.mubr.f32.mxu0 0.0
    %3565 = vmatmul.mubr.f32.gmra.mxu0 %v2634
    %v3566 = vpop.f32.mrf.mxu0
    %v3567 = vadd.f32 %v2631, %v3566
    %v3568 = vpop.f32.mrf.mxu0
    %3569 = vmatprep.mubr.f32.mxu0 0.0
    %3570 = vmatmul.mubr.f32.gmra.mxu0 %v2637
    %v3571 = vpop.f32.mrf.mxu0
    %v3572 = vadd.f32 %v2632, %v3571
    %v3573 = vpop.f32.mrf.mxu0
    %3574 = vdwg.mxu0
    %v3576 = vsel %vm22, %v2709, 0
    %v3579 = vsel %vm22, %v2714, 0
    %v3582 = vsel %vm22, %v3021, 0
    %v3585 = vsel %vm22, %v3026, 0
    %3587 = vmatprep.subr.mxu0 0.0
    %3588 = vmatpush1.xpose.msra.mxu0 0.0
    %3589 = vmatprep.subr.mxu0 0.0
    %3590 = vmatpush1.xpose.msra.mxu0 0.0
    %3591 = vmatprep.subr.mxu0 0.0
    %3592 = vmatpush1.xpose.msra.mxu0 0.0
    %3593 = vmatprep.subr.mxu0 0.0
    %3594 = vmatpush1.xpose.msra.mxu0 0.0
    %3595 = vmatprep.subr.mxu0 0.0
    %3596 = vmatpush1.xpose.msra.mxu0 0.0
    %3597 = vmatprep.subr.mxu0 0.0
    %3598 = vmatpush1.xpose.msra.mxu0 0.0
    %3599 = vmatprep.subr.mxu0 0.0
    %3600 = vmatpush1.xpose.msra.mxu0 0.0
    %3601 = vmatprep.subr.mxu0 0.0
    %3602 = vmatpush1.xpose.msra.mxu0 0.0
    %3603 = vmatprep.subr.mxu0 0.0
    %3604 = vmatpush1.xpose.msra.mxu0 0.0
    %3605 = vmatprep.subr.mxu0 0.0
    %3606 = vmatpush1.xpose.msra.mxu0 0.0
    %3607 = vmatprep.subr.mxu0 0.0
    %3608 = vmatpush1.xpose.msra.mxu0 0.0
    %3609 = vmatprep.subr.mxu0 0.0
    %3610 = vmatpush1.xpose.msra.mxu0 0.0
    %3611 = vmatprep.subr.mxu0 0.0
    %3612 = vmatpush1.xpose.msra.mxu0 0.0
    %3613 = vmatprep.subr.mxu0 0.0
    %3614 = vmatpush1.xpose.msra.mxu0 0.0
    %3615 = vmatprep.subr.mxu0 0.0
    %3616 = vmatpush1.xpose.msra.mxu0 %v3585
    %3617 = vmatprep.subr.mxu0 0.0
    %3618 = vmatpush1.xpose.msra.mxu0 %v3582
    %3619 = vmatprep.subr.mxu0 0.0
    %3620 = vmatpush2.xpose.msra.mxu0 0.0
    %3621 = vmatprep.subr.mxu0 0.0
    %3622 = vmatpush2.xpose.msra.mxu0 0.0
    %3623 = vmatprep.subr.mxu0 0.0
    %3624 = vmatpush2.xpose.msra.mxu0 0.0
    %3625 = vmatprep.subr.mxu0 0.0
    %3626 = vmatpush2.xpose.msra.mxu0 0.0
    %3627 = vmatprep.subr.mxu0 0.0
    %3628 = vmatpush2.xpose.msra.mxu0 0.0
    %3629 = vmatprep.subr.mxu0 0.0
    %3630 = vmatpush2.xpose.msra.mxu0 0.0
    %3631 = vmatprep.subr.mxu0 0.0
    %3632 = vmatpush2.xpose.msra.mxu0 0.0
    %3633 = vmatprep.subr.mxu0 0.0
    %3634 = vmatpush2.xpose.msra.mxu0 0.0
    %3635 = vmatprep.subr.mxu0 0.0
    %3636 = vmatpush2.xpose.msra.mxu0 0.0
    %3637 = vmatprep.subr.mxu0 0.0
    %3638 = vmatpush2.xpose.msra.mxu0 0.0
    %3639 = vmatprep.subr.mxu0 0.0
    %3640 = vmatpush2.xpose.msra.mxu0 0.0
    %3641 = vmatprep.subr.mxu0 0.0
    %3642 = vmatpush2.xpose.msra.mxu0 0.0
    %3643 = vmatprep.subr.mxu0 0.0
    %3644 = vmatpush2.xpose.msra.mxu0 0.0
    %3645 = vmatprep.subr.mxu0 0.0
    %3646 = vmatpush2.xpose.msra.mxu0 0.0
    %3647 = vmatprep.subr.mxu0 0.0
    %3648 = vmatpush2.xpose.msra.mxu0 0.0
    %3649 = vmatprep.subr.mxu0 0.0
    %3650 = vmatpush2.xpose.msra.mxu0 0.0
    %3651 = vmatprep.mubr.f32.mxu0 0.0
    %3652 = vmatmul.mubr.f32.gmra.mxu0 %v3576
    %v3653 = vpop.f32.mrf.mxu0
    %v3654 = vadd.f32 0.0, %v3653
    %v3655 = vpop.f32.mrf.mxu0
    %3656 = vmatprep.mubr.f32.mxu0 0.0
    %3657 = vmatmul.mubr.f32.gmra.mxu0 %v3579
    %v3658 = vpop.f32.mrf.mxu0
    %v3659 = vadd.f32 0.0, %v3658
    %v3660 = vpop.f32.mrf.mxu0
    %3661 = vdwg.mxu0
    %v3663 = vsel %vm22, %v2787, 0
    %v3666 = vsel %vm22, %v2792, 0
    %v3669 = vsel %vm22, %v3099, 0
    %v3672 = vsel %vm22, %v3104, 0
    %3674 = vmatprep.subr.mxu0 0.0
    %3675 = vmatpush1.xpose.msra.mxu0 0.0
    %3676 = vmatprep.subr.mxu0 0.0
    %3677 = vmatpush1.xpose.msra.mxu0 0.0
    %3678 = vmatprep.subr.mxu0 0.0
    %3679 = vmatpush1.xpose.msra.mxu0 0.0
    %3680 = vmatprep.subr.mxu0 0.0
    %3681 = vmatpush1.xpose.msra.mxu0 0.0
    %3682 = vmatprep.subr.mxu0 0.0
    %3683 = vmatpush1.xpose.msra.mxu0 0.0
    %3684 = vmatprep.subr.mxu0 0.0
    %3685 = vmatpush1.xpose.msra.mxu0 0.0
    %3686 = vmatprep.subr.mxu0 0.0
    %3687 = vmatpush1.xpose.msra.mxu0 0.0
    %3688 = vmatprep.subr.mxu0 0.0
    %3689 = vmatpush1.xpose.msra.mxu0 0.0
    %3690 = vmatprep.subr.mxu0 0.0
    %3691 = vmatpush1.xpose.msra.mxu0 0.0
    %3692 = vmatprep.subr.mxu0 0.0
    %3693 = vmatpush1.xpose.msra.mxu0 0.0
    %3694 = vmatprep.subr.mxu0 0.0
    %3695 = vmatpush1.xpose.msra.mxu0 0.0
    %3696 = vmatprep.subr.mxu0 0.0
    %3697 = vmatpush1.xpose.msra.mxu0 0.0
    %3698 = vmatprep.subr.mxu0 0.0
    %3699 = vmatpush1.xpose.msra.mxu0 0.0
    %3700 = vmatprep.subr.mxu0 0.0
    %3701 = vmatpush1.xpose.msra.mxu0 0.0
    %3702 = vmatprep.subr.mxu0 0.0
    %3703 = vmatpush1.xpose.msra.mxu0 %v3672
    %3704 = vmatprep.subr.mxu0 0.0
    %3705 = vmatpush1.xpose.msra.mxu0 %v3669
    %3706 = vmatprep.subr.mxu0 0.0
    %3707 = vmatpush2.xpose.msra.mxu0 0.0
    %3708 = vmatprep.subr.mxu0 0.0
    %3709 = vmatpush2.xpose.msra.mxu0 0.0
    %3710 = vmatprep.subr.mxu0 0.0
    %3711 = vmatpush2.xpose.msra.mxu0 0.0
    %3712 = vmatprep.subr.mxu0 0.0
    %3713 = vmatpush2.xpose.msra.mxu0 0.0
    %3714 = vmatprep.subr.mxu0 0.0
    %3715 = vmatpush2.xpose.msra.mxu0 0.0
    %3716 = vmatprep.subr.mxu0 0.0
    %3717 = vmatpush2.xpose.msra.mxu0 0.0
    %3718 = vmatprep.subr.mxu0 0.0
    %3719 = vmatpush2.xpose.msra.mxu0 0.0
    %3720 = vmatprep.subr.mxu0 0.0
    %3721 = vmatpush2.xpose.msra.mxu0 0.0
    %3722 = vmatprep.subr.mxu0 0.0
    %3723 = vmatpush2.xpose.msra.mxu0 0.0
    %3724 = vmatprep.subr.mxu0 0.0
    %3725 = vmatpush2.xpose.msra.mxu0 0.0
    %3726 = vmatprep.subr.mxu0 0.0
    %3727 = vmatpush2.xpose.msra.mxu0 0.0
    %3728 = vmatprep.subr.mxu0 0.0
    %3729 = vmatpush2.xpose.msra.mxu0 0.0
    %3730 = vmatprep.subr.mxu0 0.0
    %3731 = vmatpush2.xpose.msra.mxu0 0.0
    %3732 = vmatprep.subr.mxu0 0.0
    %3733 = vmatpush2.xpose.msra.mxu0 0.0
    %3734 = vmatprep.subr.mxu0 0.0
    %3735 = vmatpush2.xpose.msra.mxu0 0.0
    %3736 = vmatprep.subr.mxu0 0.0
    %3737 = vmatpush2.xpose.msra.mxu0 0.0
    %3738 = vmatprep.mubr.f32.mxu0 0.0
    %3739 = vmatmul.mubr.f32.gmra.mxu0 %v3663
    %v3740 = vpop.f32.mrf.mxu0
    %v3741 = vadd.f32 0.0, %v3740
    %v3742 = vpop.f32.mrf.mxu0
    %3743 = vmatprep.mubr.f32.mxu0 0.0
    %3744 = vmatmul.mubr.f32.gmra.mxu0 %v3666
    %v3745 = vpop.f32.mrf.mxu0
    %v3746 = vadd.f32 0.0, %v3745
    %v3747 = vpop.f32.mrf.mxu0
    %3748 = vdwg.mxu0
    %v3750 = vsel %vm22, %v2865, 0
    %v3753 = vsel %vm22, %v2870, 0
    %v3756 = vsel %vm22, %v3177, 0
    %v3759 = vsel %vm22, %v3182, 0
    %3761 = vmatprep.subr.mxu0 0.0
    %3762 = vmatpush1.xpose.msra.mxu0 0.0
    %3763 = vmatprep.subr.mxu0 0.0
    %3764 = vmatpush1.xpose.msra.mxu0 0.0
    %3765 = vmatprep.subr.mxu0 0.0
    %3766 = vmatpush1.xpose.msra.mxu0 0.0
    %3767 = vmatprep.subr.mxu0 0.0
    %3768 = vmatpush1.xpose.msra.mxu0 0.0
    %3769 = vmatprep.subr.mxu0 0.0
    %3770 = vmatpush1.xpose.msra.mxu0 0.0
    %3771 = vmatprep.subr.mxu0 0.0
    %3772 = vmatpush1.xpose.msra.mxu0 0.0
    %3773 = vmatprep.subr.mxu0 0.0
    %3774 = vmatpush1.xpose.msra.mxu0 0.0
    %3775 = vmatprep.subr.mxu0 0.0
    %3776 = vmatpush1.xpose.msra.mxu0 0.0
    %3777 = vmatprep.subr.mxu0 0.0
    %3778 = vmatpush1.xpose.msra.mxu0 0.0
    %3779 = vmatprep.subr.mxu0 0.0
    %3780 = vmatpush1.xpose.msra.mxu0 0.0
    %3781 = vmatprep.subr.mxu0 0.0
    %3782 = vmatpush1.xpose.msra.mxu0 0.0
    %3783 = vmatprep.subr.mxu0 0.0
    %3784 = vmatpush1.xpose.msra.mxu0 0.0
    %3785 = vmatprep.subr.mxu0 0.0
    %3786 = vmatpush1.xpose.msra.mxu0 0.0
    %3787 = vmatprep.subr.mxu0 0.0
    %3788 = vmatpush1.xpose.msra.mxu0 0.0
    %3789 = vmatprep.subr.mxu0 0.0
    %3790 = vmatpush1.xpose.msra.mxu0 %v3759
    %3791 = vmatprep.subr.mxu0 0.0
    %3792 = vmatpush1.xpose.msra.mxu0 %v3756
    %3793 = vmatprep.subr.mxu0 0.0
    %3794 = vmatpush2.xpose.msra.mxu0 0.0
    %3795 = vmatprep.subr.mxu0 0.0
    %3796 = vmatpush2.xpose.msra.mxu0 0.0
    %3797 = vmatprep.subr.mxu0 0.0
    %3798 = vmatpush2.xpose.msra.mxu0 0.0
    %3799 = vmatprep.subr.mxu0 0.0
    %3800 = vmatpush2.xpose.msra.mxu0 0.0
    %3801 = vmatprep.subr.mxu0 0.0
    %3802 = vmatpush2.xpose.msra.mxu0 0.0
    %3803 = vmatprep.subr.mxu0 0.0
    %3804 = vmatpush2.xpose.msra.mxu0 0.0
    %3805 = vmatprep.subr.mxu0 0.0
    %3806 = vmatpush2.xpose.msra.mxu0 0.0
    %3807 = vmatprep.subr.mxu0 0.0
    %3808 = vmatpush2.xpose.msra.mxu0 0.0
    %3809 = vmatprep.subr.mxu0 0.0
    %3810 = vmatpush2.xpose.msra.mxu0 0.0
    %3811 = vmatprep.subr.mxu0 0.0
    %3812 = vmatpush2.xpose.msra.mxu0 0.0
    %3813 = vmatprep.subr.mxu0 0.0
    %3814 = vmatpush2.xpose.msra.mxu0 0.0
    %3815 = vmatprep.subr.mxu0 0.0
    %3816 = vmatpush2.xpose.msra.mxu0 0.0
    %3817 = vmatprep.subr.mxu0 0.0
    %3818 = vmatpush2.xpose.msra.mxu0 0.0
    %3819 = vmatprep.subr.mxu0 0.0
    %3820 = vmatpush2.xpose.msra.mxu0 0.0
    %3821 = vmatprep.subr.mxu0 0.0
    %3822 = vmatpush2.xpose.msra.mxu0 0.0
    %3823 = vmatprep.subr.mxu0 0.0
    %3824 = vmatpush2.xpose.msra.mxu0 0.0
    %3825 = vmatprep.mubr.f32.mxu0 0.0
    %3826 = vmatmul.mubr.f32.gmra.mxu0 %v3750
    %v3827 = vpop.f32.mrf.mxu0
    %v3828 = vadd.f32 0.0, %v3827
    %v3829 = vpop.f32.mrf.mxu0
    %3830 = vmatprep.mubr.f32.mxu0 0.0
    %3831 = vmatmul.mubr.f32.gmra.mxu0 %v3753
    %v3832 = vpop.f32.mrf.mxu0
    %v3833 = vadd.f32 0.0, %v3832
    %v3834 = vpop.f32.mrf.mxu0
    %3835 = vdwg.mxu0
    %v3837 = vsel %vm22, %v2943, 0
    %v3840 = vsel %vm22, %v2948, 0
    %v3843 = vsel %vm22, %v3255, 0
    %v3846 = vsel %vm22, %v3260, 0
    %3848 = vmatprep.subr.mxu0 0.0
    %3849 = vmatpush1.xpose.msra.mxu0 0.0
    %3850 = vmatprep.subr.mxu0 0.0
    %3851 = vmatpush1.xpose.msra.mxu0 0.0
    %3852 = vmatprep.subr.mxu0 0.0
    %3853 = vmatpush1.xpose.msra.mxu0 0.0
    %3854 = vmatprep.subr.mxu0 0.0
    %3855 = vmatpush1.xpose.msra.mxu0 0.0
    %3856 = vmatprep.subr.mxu0 0.0
    %3857 = vmatpush1.xpose.msra.mxu0 0.0
    %3858 = vmatprep.subr.mxu0 0.0
    %3859 = vmatpush1.xpose.msra.mxu0 0.0
    %3860 = vmatprep.subr.mxu0 0.0
    %3861 = vmatpush1.xpose.msra.mxu0 0.0
    %3862 = vmatprep.subr.mxu0 0.0
    %3863 = vmatpush1.xpose.msra.mxu0 0.0
    %3864 = vmatprep.subr.mxu0 0.0
    %3865 = vmatpush1.xpose.msra.mxu0 0.0
    %3866 = vmatprep.subr.mxu0 0.0
    %3867 = vmatpush1.xpose.msra.mxu0 0.0
    %3868 = vmatprep.subr.mxu0 0.0
    %3869 = vmatpush1.xpose.msra.mxu0 0.0
    %3870 = vmatprep.subr.mxu0 0.0
    %3871 = vmatpush1.xpose.msra.mxu0 0.0
    %3872 = vmatprep.subr.mxu0 0.0
    %3873 = vmatpush1.xpose.msra.mxu0 0.0
    %3874 = vmatprep.subr.mxu0 0.0
    %3875 = vmatpush1.xpose.msra.mxu0 0.0
    %3876 = vmatprep.subr.mxu0 0.0
    %3877 = vmatpush1.xpose.msra.mxu0 %v3846
    %3878 = vmatprep.subr.mxu0 0.0
    %3879 = vmatpush1.xpose.msra.mxu0 %v3843
    %3880 = vmatprep.subr.mxu0 0.0
    %3881 = vmatpush2.xpose.msra.mxu0 0.0
    %3882 = vmatprep.subr.mxu0 0.0
    %3883 = vmatpush2.xpose.msra.mxu0 0.0
    %3884 = vmatprep.subr.mxu0 0.0
    %3885 = vmatpush2.xpose.msra.mxu0 0.0
    %3886 = vmatprep.subr.mxu0 0.0
    %3887 = vmatpush2.xpose.msra.mxu0 0.0
    %3888 = vmatprep.subr.mxu0 0.0
    %3889 = vmatpush2.xpose.msra.mxu0 0.0
    %3890 = vmatprep.subr.mxu0 0.0
    %3891 = vmatpush2.xpose.msra.mxu0 0.0
    %3892 = vmatprep.subr.mxu0 0.0
    %3893 = vmatpush2.xpose.msra.mxu0 0.0
    %3894 = vmatprep.subr.mxu0 0.0
    %3895 = vmatpush2.xpose.msra.mxu0 0.0
    %3896 = vmatprep.subr.mxu0 0.0
    %3897 = vmatpush2.xpose.msra.mxu0 0.0
    %3898 = vmatprep.subr.mxu0 0.0
    %3899 = vmatpush2.xpose.msra.mxu0 0.0
    %3900 = vmatprep.subr.mxu0 0.0
    %3901 = vmatpush2.xpose.msra.mxu0 0.0
    %3902 = vmatprep.subr.mxu0 0.0
    %3903 = vmatpush2.xpose.msra.mxu0 0.0
    %3904 = vmatprep.subr.mxu0 0.0
    %3905 = vmatpush2.xpose.msra.mxu0 0.0
    %3906 = vmatprep.subr.mxu0 0.0
    %3907 = vmatpush2.xpose.msra.mxu0 0.0
    %3908 = vmatprep.subr.mxu0 0.0
    %3909 = vmatpush2.xpose.msra.mxu0 0.0
    %3910 = vmatprep.subr.mxu0 0.0
    %3911 = vmatpush2.xpose.msra.mxu0 0.0
    %3912 = vmatprep.mubr.f32.mxu0 0.0
    %3913 = vmatmul.mubr.f32.gmra.mxu0 %v3837
    %v3914 = vpop.f32.mrf.mxu0
    %v3915 = vadd.f32 0.0, %v3914
    %v3916 = vpop.f32.mrf.mxu0
    %3917 = vmatprep.mubr.f32.mxu0 0.0
    %3918 = vmatmul.mubr.f32.gmra.mxu0 %v3840
    %v3919 = vpop.f32.mrf.mxu0
    %v3920 = vadd.f32 0.0, %v3919
    %v3921 = vpop.f32.mrf.mxu0
    %3922 = vdwg.mxu0
    %v3923 = vmul.f32 %v3654, 0.35355338
    %v3924 = vmul.f32 %v3659, 0.35355338
    %v3925 = vmul.f32 %v3741, 0.35355338
    %v3926 = vmul.f32 %v3746, 0.35355338
    %v3927 = vmul.f32 %v3828, 0.35355338
    %v3928 = vmul.f32 %v3833, 0.35355338
    %v3929 = vmul.f32 %v3915, 0.35355338
    %v3930 = vmul.f32 %v3920, 0.35355338
    %v3931 = vadd.f32 %v3923, %v218
    %v3932 = vadd.f32 %v3924, %v219
    %v3933 = vadd.f32 %v3925, %v218
    %v3934 = vadd.f32 %v3926, %v219
    %v3935 = vadd.f32 %v3927, %v218
    %v3936 = vadd.f32 %v3928, %v219
    %v3937 = vadd.f32 %v3929, %v218
    %v3938 = vadd.f32 %v3930, %v219
    %v3939 = vsel %vm1563, %v3931, -inf
    %3940 = vmax.xlane.f32.xlu0 %v3939
    %v3941 = vpop.xlane.xlu0 %3940
    %v3942 = vsel %vm1563, %v3932, -inf
    %3943 = vmax.xlane.f32.xlu0 %v3942
    %v3944 = vpop.xlane.xlu0 %3943
    %v3945 = vsel %vm1563, %v3933, -inf
    %3946 = vmax.xlane.f32.xlu0 %v3945
    %v3947 = vpop.xlane.xlu0 %3946
    %v3948 = vsel %vm1563, %v3934, -inf
    %3949 = vmax.xlane.f32.xlu0 %v3948
    %v3950 = vpop.xlane.xlu0 %3949
    %v3951 = vsel %vm1563, %v3935, -inf
    %3952 = vmax.xlane.f32.xlu0 %v3951
    %v3953 = vpop.xlane.xlu0 %3952
    %v3954 = vsel %vm1563, %v3936, -inf
    %3955 = vmax.xlane.f32.xlu0 %v3954
    %v3956 = vpop.xlane.xlu0 %3955
    %v3957 = vsel %vm1563, %v3937, -inf
    %3958 = vmax.xlane.f32.xlu0 %v3957
    %v3959 = vpop.xlane.xlu0 %3958
    %v3960 = vsel %vm1563, %v3938, -inf
    %3961 = vmax.xlane.f32.xlu0 %v3960
    %v3962 = vpop.xlane.xlu0 %3961
    %v3963 = vsub.f32 %v3931, %v3941
    %v3964 = vsub.f32 %v3932, %v3944
    %v3965 = vsub.f32 %v3933, %v3947
    %v3966 = vsub.f32 %v3934, %v3950
    %v3967 = vsub.f32 %v3935, %v3953
    %v3968 = vsub.f32 %v3936, %v3956
    %v3969 = vsub.f32 %v3937, %v3959
    %v3970 = vsub.f32 %v3938, %v3962
    %v3971 = vmul.f32 %v3963, 1.442695
    %v3972 = vpow.pop %v3971
    %v3973 = vmul.f32 %v3964, 1.442695
    %v3974 = vpow.pop %v3973
    %v3975 = vmul.f32 %v3965, 1.442695
    %v3976 = vpow.pop %v3975
    %v3977 = vmul.f32 %v3966, 1.442695
    %v3978 = vpow.pop %v3977
    %v3979 = vmul.f32 %v3967, 1.442695
    %v3980 = vpow.pop %v3979
    %v3981 = vmul.f32 %v3968, 1.442695
    %v3982 = vpow.pop %v3981
    %v3983 = vmul.f32 %v3969, 1.442695
    %v3984 = vpow.pop %v3983
    %v3985 = vmul.f32 %v3970, 1.442695
    %v3986 = vpow.pop %v3985
    %v3987 = vsel %vm1563, %v3972, 0.0
    %3988 = vadd.xlane.f32.xlu0 %v3987
    %v3989 = vpop.xlane.xlu0 %3988
    %v3990 = vsel %vm1563, %v3974, 0.0
    %3991 = vadd.xlane.f32.xlu0 %v3990
    %v3992 = vpop.xlane.xlu0 %3991
    %v3993 = vsel %vm1563, %v3976, 0.0
    %3994 = vadd.xlane.f32.xlu0 %v3993
    %v3995 = vpop.xlane.xlu0 %3994
    %v3996 = vsel %vm1563, %v3978, 0.0
    %3997 = vadd.xlane.f32.xlu0 %v3996
    %v3998 = vpop.xlane.xlu0 %3997
    %v3999 = vsel %vm1563, %v3980, 0.0
    %4000 = vadd.xlane.f32.xlu0 %v3999
    %v4001 = vpop.xlane.xlu0 %4000
    %v4002 = vsel %vm1563, %v3982, 0.0
    %4003 = vadd.xlane.f32.xlu0 %v4002
    %v4004 = vpop.xlane.xlu0 %4003
    %v4005 = vsel %vm1563, %v3984, 0.0
    %4006 = vadd.xlane.f32.xlu0 %v4005
    %v4007 = vpop.xlane.xlu0 %4006
    %v4008 = vsel %vm1563, %v3986, 0.0
    %4009 = vadd.xlane.f32.xlu0 %v4008
    %v4010 = vpop.xlane.xlu0 %4009
    %v4011 = vrcp.pop %v3989
    %v4012 = vmul.f32 %v3972, %v4011
    %v4013 = vrcp.pop %v3992
    %v4014 = vmul.f32 %v3974, %v4013
    %v4015 = vrcp.pop %v3995
    %v4016 = vmul.f32 %v3976, %v4015
    %v4017 = vrcp.pop %v3998
    %v4018 = vmul.f32 %v3978, %v4017
    %v4019 = vrcp.pop %v4001
    %v4020 = vmul.f32 %v3980, %v4019
    %v4021 = vrcp.pop %v4004
    %v4022 = vmul.f32 %v3982, %v4021
    %v4023 = vrcp.pop %v4007
    %v4024 = vmul.f32 %v3984, %v4023
    %v4025 = vrcp.pop %v4010
    %v4026 = vmul.f32 %v3986, %v4025
    %v4028 = vsel %vm1563, %v4012, 0
    %v4031 = vsel %vm1563, %v4014, 0
    %4033 = vmatprep.subr.mxu0 0.0
    %4034 = vmatpush1.msra.mxu0 0.0
    %4035 = vmatprep.subr.mxu0 0.0
    %4036 = vmatpush1.msra.mxu0 0.0
    %4037 = vmatprep.subr.mxu0 0.0
    %4038 = vmatpush1.msra.mxu0 0.0
    %4039 = vmatprep.subr.mxu0 0.0
    %4040 = vmatpush1.msra.mxu0 0.0
    %4041 = vmatprep.subr.mxu0 0.0
    %4042 = vmatpush1.msra.mxu0 0.0
    %4043 = vmatprep.subr.mxu0 0.0
    %4044 = vmatpush1.msra.mxu0 0.0
    %4045 = vmatprep.subr.mxu0 0.0
    %4046 = vmatpush1.msra.mxu0 0.0
    %4047 = vmatprep.subr.mxu0 0.0
    %4048 = vmatpush1.msra.mxu0 0.0
    %4049 = vmatprep.subr.mxu0 0.0
    %4050 = vmatpush1.msra.mxu0 0.0
    %4051 = vmatprep.subr.mxu0 0.0
    %4052 = vmatpush1.msra.mxu0 0.0
    %4053 = vmatprep.subr.mxu0 0.0
    %4054 = vmatpush1.msra.mxu0 0.0
    %4055 = vmatprep.subr.mxu0 0.0
    %4056 = vmatpush1.msra.mxu0 0.0
    %4057 = vmatprep.subr.mxu0 0.0
    %4058 = vmatpush1.msra.mxu0 0.0
    %4059 = vmatprep.subr.mxu0 0.0
    %4060 = vmatpush1.msra.mxu0 0.0
    %4061 = vmatprep.subr.mxu0 0.0
    %4062 = vmatpush1.msra.mxu0 %v3338
    %4063 = vmatprep.subr.mxu0 0.0
    %4064 = vmatpush1.msra.mxu0 %v3333
    %4065 = vmatprep.subr.mxu0 0.0
    %4066 = vmatpush2.msra.mxu0 0.0
    %4067 = vmatprep.subr.mxu0 0.0
    %4068 = vmatpush2.msra.mxu0 0.0
    %4069 = vmatprep.subr.mxu0 0.0
    %4070 = vmatpush2.msra.mxu0 0.0
    %4071 = vmatprep.subr.mxu0 0.0
    %4072 = vmatpush2.msra.mxu0 0.0
    %4073 = vmatprep.subr.mxu0 0.0
    %4074 = vmatpush2.msra.mxu0 0.0
    %4075 = vmatprep.subr.mxu0 0.0
    %4076 = vmatpush2.msra.mxu0 0.0
    %4077 = vmatprep.subr.mxu0 0.0
    %4078 = vmatpush2.msra.mxu0 0.0
    %4079 = vmatprep.subr.mxu0 0.0
    %4080 = vmatpush2.msra.mxu0 0.0
    %4081 = vmatprep.subr.mxu0 0.0
    %4082 = vmatpush2.msra.mxu0 0.0
    %4083 = vmatprep.subr.mxu0 0.0
    %4084 = vmatpush2.msra.mxu0 0.0
    %4085 = vmatprep.subr.mxu0 0.0
    %4086 = vmatpush2.msra.mxu0 0.0
    %4087 = vmatprep.subr.mxu0 0.0
    %4088 = vmatpush2.msra.mxu0 0.0
    %4089 = vmatprep.subr.mxu0 0.0
    %4090 = vmatpush2.msra.mxu0 0.0
    %4091 = vmatprep.subr.mxu0 0.0
    %4092 = vmatpush2.msra.mxu0 0.0
    %4093 = vmatprep.subr.mxu0 0.0
    %4094 = vmatpush2.msra.mxu0 0.0
    %4095 = vmatprep.subr.mxu0 0.0
    %4096 = vmatpush2.msra.mxu0 0.0
    %4097 = vmatprep.mubr.f32.mxu0 0.0
    %4098 = vmatmul.mubr.f32.gmra.mxu0 %v4028
    %v4099 = vpop.f32.mrf.mxu0
    %v4100 = vadd.f32 0.0, %v4099
    %v4101 = vpop.f32.mrf.mxu0
    %4102 = vmatprep.mubr.f32.mxu0 0.0
    %4103 = vmatmul.mubr.f32.gmra.mxu0 %v4031
    %v4104 = vpop.f32.mrf.mxu0
    %v4105 = vadd.f32 0.0, %v4104
    %v4106 = vpop.f32.mrf.mxu0
    %4107 = vdwg.mxu0
    %v4109 = vsel %vm1563, %v4016, 0
    %v4112 = vsel %vm1563, %v4018, 0
    %4114 = vmatprep.subr.mxu0 0.0
    %4115 = vmatpush1.msra.mxu0 0.0
    %4116 = vmatprep.subr.mxu0 0.0
    %4117 = vmatpush1.msra.mxu0 0.0
    %4118 = vmatprep.subr.mxu0 0.0
    %4119 = vmatpush1.msra.mxu0 0.0
    %4120 = vmatprep.subr.mxu0 0.0
    %4121 = vmatpush1.msra.mxu0 0.0
    %4122 = vmatprep.subr.mxu0 0.0
    %4123 = vmatpush1.msra.mxu0 0.0
    %4124 = vmatprep.subr.mxu0 0.0
    %4125 = vmatpush1.msra.mxu0 0.0
    %4126 = vmatprep.subr.mxu0 0.0
    %4127 = vmatpush1.msra.mxu0 0.0
    %4128 = vmatprep.subr.mxu0 0.0
    %4129 = vmatpush1.msra.mxu0 0.0
    %4130 = vmatprep.subr.mxu0 0.0
    %4131 = vmatpush1.msra.mxu0 0.0
    %4132 = vmatprep.subr.mxu0 0.0
    %4133 = vmatpush1.msra.mxu0 0.0
    %4134 = vmatprep.subr.mxu0 0.0
    %4135 = vmatpush1.msra.mxu0 0.0
    %4136 = vmatprep.subr.mxu0 0.0
    %4137 = vmatpush1.msra.mxu0 0.0
    %4138 = vmatprep.subr.mxu0 0.0
    %4139 = vmatpush1.msra.mxu0 0.0
    %4140 = vmatprep.subr.mxu0 0.0
    %4141 = vmatpush1.msra.mxu0 0.0
    %4142 = vmatprep.subr.mxu0 0.0
    %4143 = vmatpush1.msra.mxu0 %v3416
    %4144 = vmatprep.subr.mxu0 0.0
    %4145 = vmatpush1.msra.mxu0 %v3411
    %4146 = vmatprep.subr.mxu0 0.0
    %4147 = vmatpush2.msra.mxu0 0.0
    %4148 = vmatprep.subr.mxu0 0.0
    %4149 = vmatpush2.msra.mxu0 0.0
    %4150 = vmatprep.subr.mxu0 0.0
    %4151 = vmatpush2.msra.mxu0 0.0
    %4152 = vmatprep.subr.mxu0 0.0
    %4153 = vmatpush2.msra.mxu0 0.0
    %4154 = vmatprep.subr.mxu0 0.0
    %4155 = vmatpush2.msra.mxu0 0.0
    %4156 = vmatprep.subr.mxu0 0.0
    %4157 = vmatpush2.msra.mxu0 0.0
    %4158 = vmatprep.subr.mxu0 0.0
    %4159 = vmatpush2.msra.mxu0 0.0
    %4160 = vmatprep.subr.mxu0 0.0
    %4161 = vmatpush2.msra.mxu0 0.0
    %4162 = vmatprep.subr.mxu0 0.0
    %4163 = vmatpush2.msra.mxu0 0.0
    %4164 = vmatprep.subr.mxu0 0.0
    %4165 = vmatpush2.msra.mxu0 0.0
    %4166 = vmatprep.subr.mxu0 0.0
    %4167 = vmatpush2.msra.mxu0 0.0
    %4168 = vmatprep.subr.mxu0 0.0
    %4169 = vmatpush2.msra.mxu0 0.0
    %4170 = vmatprep.subr.mxu0 0.0
    %4171 = vmatpush2.msra.mxu0 0.0
    %4172 = vmatprep.subr.mxu0 0.0
    %4173 = vmatpush2.msra.mxu0 0.0
    %4174 = vmatprep.subr.mxu0 0.0
    %4175 = vmatpush2.msra.mxu0 0.0
    %4176 = vmatprep.subr.mxu0 0.0
    %4177 = vmatpush2.msra.mxu0 0.0
    %4178 = vmatprep.mubr.f32.mxu0 0.0
    %4179 = vmatmul.mubr.f32.gmra.mxu0 %v4109
    %v4180 = vpop.f32.mrf.mxu0
    %v4181 = vadd.f32 0.0, %v4180
    %v4182 = vpop.f32.mrf.mxu0
    %4183 = vmatprep.mubr.f32.mxu0 0.0
    %4184 = vmatmul.mubr.f32.gmra.mxu0 %v4112
    %v4185 = vpop.f32.mrf.mxu0
    %v4186 = vadd.f32 0.0, %v4185
    %v4187 = vpop.f32.mrf.mxu0
    %4188 = vdwg.mxu0
    %v4190 = vsel %vm1563, %v4020, 0
    %v4193 = vsel %vm1563, %v4022, 0
    %4195 = vmatprep.subr.mxu0 0.0
    %4196 = vmatpush1.msra.mxu0 0.0
    %4197 = vmatprep.subr.mxu0 0.0
    %4198 = vmatpush1.msra.mxu0 0.0
    %4199 = vmatprep.subr.mxu0 0.0
    %4200 = vmatpush1.msra.mxu0 0.0
    %4201 = vmatprep.subr.mxu0 0.0
    %4202 = vmatpush1.msra.mxu0 0.0
    %4203 = vmatprep.subr.mxu0 0.0
    %4204 = vmatpush1.msra.mxu0 0.0
    %4205 = vmatprep.subr.mxu0 0.0
    %4206 = vmatpush1.msra.mxu0 0.0
    %4207 = vmatprep.subr.mxu0 0.0
    %4208 = vmatpush1.msra.mxu0 0.0
    %4209 = vmatprep.subr.mxu0 0.0
    %4210 = vmatpush1.msra.mxu0 0.0
    %4211 = vmatprep.subr.mxu0 0.0
    %4212 = vmatpush1.msra.mxu0 0.0
    %4213 = vmatprep.subr.mxu0 0.0
    %4214 = vmatpush1.msra.mxu0 0.0
    %4215 = vmatprep.subr.mxu0 0.0
    %4216 = vmatpush1.msra.mxu0 0.0
    %4217 = vmatprep.subr.mxu0 0.0
    %4218 = vmatpush1.msra.mxu0 0.0
    %4219 = vmatprep.subr.mxu0 0.0
    %4220 = vmatpush1.msra.mxu0 0.0
    %4221 = vmatprep.subr.mxu0 0.0
    %4222 = vmatpush1.msra.mxu0 0.0
    %4223 = vmatprep.subr.mxu0 0.0
    %4224 = vmatpush1.msra.mxu0 %v3494
    %4225 = vmatprep.subr.mxu0 0.0
    %4226 = vmatpush1.msra.mxu0 %v3489
    %4227 = vmatprep.subr.mxu0 0.0
    %4228 = vmatpush2.msra.mxu0 0.0
    %4229 = vmatprep.subr.mxu0 0.0
    %4230 = vmatpush2.msra.mxu0 0.0
    %4231 = vmatprep.subr.mxu0 0.0
    %4232 = vmatpush2.msra.mxu0 0.0
    %4233 = vmatprep.subr.mxu0 0.0
    %4234 = vmatpush2.msra.mxu0 0.0
    %4235 = vmatprep.subr.mxu0 0.0
    %4236 = vmatpush2.msra.mxu0 0.0
    %4237 = vmatprep.subr.mxu0 0.0
    %4238 = vmatpush2.msra.mxu0 0.0
    %4239 = vmatprep.subr.mxu0 0.0
    %4240 = vmatpush2.msra.mxu0 0.0
    %4241 = vmatprep.subr.mxu0 0.0
    %4242 = vmatpush2.msra.mxu0 0.0
    %4243 = vmatprep.subr.mxu0 0.0
    %4244 = vmatpush2.msra.mxu0 0.0
    %4245 = vmatprep.subr.mxu0 0.0
    %4246 = vmatpush2.msra.mxu0 0.0
    %4247 = vmatprep.subr.mxu0 0.0
    %4248 = vmatpush2.msra.mxu0 0.0
    %4249 = vmatprep.subr.mxu0 0.0
    %4250 = vmatpush2.msra.mxu0 0.0
    %4251 = vmatprep.subr.mxu0 0.0
    %4252 = vmatpush2.msra.mxu0 0.0
    %4253 = vmatprep.subr.mxu0 0.0
    %4254 = vmatpush2.msra.mxu0 0.0
    %4255 = vmatprep.subr.mxu0 0.0
    %4256 = vmatpush2.msra.mxu0 0.0
    %4257 = vmatprep.subr.mxu0 0.0
    %4258 = vmatpush2.msra.mxu0 0.0
    %4259 = vmatprep.mubr.f32.mxu0 0.0
    %4260 = vmatmul.mubr.f32.gmra.mxu0 %v4190
    %v4261 = vpop.f32.mrf.mxu0
    %v4262 = vadd.f32 0.0, %v4261
    %v4263 = vpop.f32.mrf.mxu0
    %4264 = vmatprep.mubr.f32.mxu0 0.0
    %4265 = vmatmul.mubr.f32.gmra.mxu0 %v4193
    %v4266 = vpop.f32.mrf.mxu0
    %v4267 = vadd.f32 0.0, %v4266
    %v4268 = vpop.f32.mrf.mxu0
    %4269 = vdwg.mxu0
    %v4271 = vsel %vm1563, %v4024, 0
    %v4274 = vsel %vm1563, %v4026, 0
    %4276 = vmatprep.subr.mxu0 0.0
    %4277 = vmatpush1.msra.mxu0 0.0
    %4278 = vmatprep.subr.mxu0 0.0
    %4279 = vmatpush1.msra.mxu0 0.0
    %4280 = vmatprep.subr.mxu0 0.0
    %4281 = vmatpush1.msra.mxu0 0.0
    %4282 = vmatprep.subr.mxu0 0.0
    %4283 = vmatpush1.msra.mxu0 0.0
    %4284 = vmatprep.subr.mxu0 0.0
    %4285 = vmatpush1.msra.mxu0 0.0
    %4286 = vmatprep.subr.mxu0 0.0
    %4287 = vmatpush1.msra.mxu0 0.0
    %4288 = vmatprep.subr.mxu0 0.0
    %4289 = vmatpush1.msra.mxu0 0.0
    %4290 = vmatprep.subr.mxu0 0.0
    %4291 = vmatpush1.msra.mxu0 0.0
    %4292 = vmatprep.subr.mxu0 0.0
    %4293 = vmatpush1.msra.mxu0 0.0
    %4294 = vmatprep.subr.mxu0 0.0
    %4295 = vmatpush1.msra.mxu0 0.0
    %4296 = vmatprep.subr.mxu0 0.0
    %4297 = vmatpush1.msra.mxu0 0.0
    %4298 = vmatprep.subr.mxu0 0.0
    %4299 = vmatpush1.msra.mxu0 0.0
    %4300 = vmatprep.subr.mxu0 0.0
    %4301 = vmatpush1.msra.mxu0 0.0
    %4302 = vmatprep.subr.mxu0 0.0
    %4303 = vmatpush1.msra.mxu0 0.0
    %4304 = vmatprep.subr.mxu0 0.0
    %4305 = vmatpush1.msra.mxu0 %v3572
    %4306 = vmatprep.subr.mxu0 0.0
    %4307 = vmatpush1.msra.mxu0 %v3567
    %4308 = vmatprep.subr.mxu0 0.0
    %4309 = vmatpush2.msra.mxu0 0.0
    %4310 = vmatprep.subr.mxu0 0.0
    %4311 = vmatpush2.msra.mxu0 0.0
    %4312 = vmatprep.subr.mxu0 0.0
    %4313 = vmatpush2.msra.mxu0 0.0
    %4314 = vmatprep.subr.mxu0 0.0
    %4315 = vmatpush2.msra.mxu0 0.0
    %4316 = vmatprep.subr.mxu0 0.0
    %4317 = vmatpush2.msra.mxu0 0.0
    %4318 = vmatprep.subr.mxu0 0.0
    %4319 = vmatpush2.msra.mxu0 0.0
    %4320 = vmatprep.subr.mxu0 0.0
    %4321 = vmatpush2.msra.mxu0 0.0
    %4322 = vmatprep.subr.mxu0 0.0
    %4323 = vmatpush2.msra.mxu0 0.0
    %4324 = vmatprep.subr.mxu0 0.0
    %4325 = vmatpush2.msra.mxu0 0.0
    %4326 = vmatprep.subr.mxu0 0.0
    %4327 = vmatpush2.msra.mxu0 0.0
    %4328 = vmatprep.subr.mxu0 0.0
    %4329 = vmatpush2.msra.mxu0 0.0
    %4330 = vmatprep.subr.mxu0 0.0
    %4331 = vmatpush2.msra.mxu0 0.0
    %4332 = vmatprep.subr.mxu0 0.0
    %4333 = vmatpush2.msra.mxu0 0.0
    %4334 = vmatprep.subr.mxu0 0.0
    %4335 = vmatpush2.msra.mxu0 0.0
    %4336 = vmatprep.subr.mxu0 0.0
    %4337 = vmatpush2.msra.mxu0 0.0
    %4338 = vmatprep.subr.mxu0 0.0
    %4339 = vmatpush2.msra.mxu0 0.0
    %4340 = vmatprep.mubr.f32.mxu0 0.0
    %4341 = vmatmul.mubr.f32.gmra.mxu0 %v4271
    %v4342 = vpop.f32.mrf.mxu0
    %v4343 = vadd.f32 0.0, %v4342
    %v4344 = vpop.f32.mrf.mxu0
    %4345 = vmatprep.mubr.f32.mxu0 0.0
    %4346 = vmatmul.mubr.f32.gmra.mxu0 %v4274
    %v4347 = vpop.f32.mrf.mxu0
    %v4348 = vadd.f32 0.0, %v4347
    %v4349 = vpop.f32.mrf.mxu0
    %4350 = vdwg.mxu0
    %v4351 = vld [vmem:[%s2 + $0x330] sm:$0xff]
    %v4352 = vld [vmem:[%s2 + $0x338] sm:$0xff]
    %v4353 = vld [vmem:[%s2 + $0x340] sm:$0xff]
    %v4354 = vld [vmem:[%s2 + $0x348] sm:$0xff]
    %v4356 = vsel %vm22, %v4100, 0
    %v4359 = vsel %vm22, %v4105, 0
    %4361 = vmatprep.subr.mxu0 0.0
    %4362 = vmatpush1.msra.mxu0 0.0
    %4363 = vmatprep.subr.mxu0 0.0
    %4364 = vmatpush1.msra.mxu0 0.0
    %4365 = vmatprep.subr.mxu0 0.0
    %4366 = vmatpush1.msra.mxu0 0.0
    %4367 = vmatprep.subr.mxu0 0.0
    %4368 = vmatpush1.msra.mxu0 0.0
    %4369 = vmatprep.subr.mxu0 0.0
    %4370 = vmatpush1.msra.mxu0 0.0
    %4371 = vmatprep.subr.mxu0 0.0
    %4372 = vmatpush1.msra.mxu0 0.0
    %4373 = vmatprep.subr.mxu0 0.0
    %4374 = vmatpush1.msra.mxu0 0.0
    %4375 = vmatprep.subr.mxu0 0.0
    %4376 = vmatpush1.msra.mxu0 0.0
    %4377 = vmatprep.subr.mxu0 0.0
    %4378 = vmatpush1.msra.mxu0 0.0
    %4379 = vmatprep.subr.mxu0 0.0
    %4380 = vmatpush1.msra.mxu0 0.0
    %4381 = vmatprep.subr.mxu0 0.0
    %4382 = vmatpush1.msra.mxu0 0.0
    %4383 = vmatprep.subr.mxu0 0.0
    %4384 = vmatpush1.msra.mxu0 0.0
    %4385 = vmatprep.subr.mxu0 0.0
    %4386 = vmatpush1.msra.mxu0 0.0
    %4387 = vmatprep.subr.mxu0 0.0
    %4388 = vmatpush1.msra.mxu0 0.0
    %4389 = vmatprep.subr.mxu0 0.0
    %4390 = vmatpush1.msra.mxu0 0.0
    %4391 = vmatprep.subr.mxu0 0.0
    %4392 = vmatpush1.msra.mxu0 %v4351
    %4393 = vmatprep.subr.mxu0 0.0
    %4394 = vmatpush2.msra.mxu0 0.0
    %4395 = vmatprep.subr.mxu0 0.0
    %4396 = vmatpush2.msra.mxu0 0.0
    %4397 = vmatprep.subr.mxu0 0.0
    %4398 = vmatpush2.msra.mxu0 0.0
    %4399 = vmatprep.subr.mxu0 0.0
    %4400 = vmatpush2.msra.mxu0 0.0
    %4401 = vmatprep.subr.mxu0 0.0
    %4402 = vmatpush2.msra.mxu0 0.0
    %4403 = vmatprep.subr.mxu0 0.0
    %4404 = vmatpush2.msra.mxu0 0.0
    %4405 = vmatprep.subr.mxu0 0.0
    %4406 = vmatpush2.msra.mxu0 0.0
    %4407 = vmatprep.subr.mxu0 0.0
    %4408 = vmatpush2.msra.mxu0 0.0
    %4409 = vmatprep.subr.mxu0 0.0
    %4410 = vmatpush2.msra.mxu0 0.0
    %4411 = vmatprep.subr.mxu0 0.0
    %4412 = vmatpush2.msra.mxu0 0.0
    %4413 = vmatprep.subr.mxu0 0.0
    %4414 = vmatpush2.msra.mxu0 0.0
    %4415 = vmatprep.subr.mxu0 0.0
    %4416 = vmatpush2.msra.mxu0 0.0
    %4417 = vmatprep.subr.mxu0 0.0
    %4418 = vmatpush2.msra.mxu0 0.0
    %4419 = vmatprep.subr.mxu0 0.0
    %4420 = vmatpush2.msra.mxu0 0.0
    %4421 = vmatprep.subr.mxu0 0.0
    %4422 = vmatpush2.msra.mxu0 0.0
    %4423 = vmatprep.subr.mxu0 0.0
    %4424 = vmatpush2.msra.mxu0 0.0
    %4425 = vmatprep.mubr.f32.mxu0 0.0
    %4426 = vmatmul.mubr.f32.gmra.mxu0 %v4356
    %v4427 = vpop.f32.mrf.mxu0
    %v4428 = vadd.f32 0.0, %v4427
    %v4429 = vpop.f32.mrf.mxu0
    %4430 = vmatprep.mubr.f32.mxu0 0.0
    %4431 = vmatmul.mubr.f32.gmra.mxu0 %v4359
    %v4432 = vpop.f32.mrf.mxu0
    %v4433 = vadd.f32 0.0, %v4432
    %v4434 = vpop.f32.mrf.mxu0
    %4435 = vdwg.mxu0
    %v4437 = vsel %vm22, %v4181, 0
    %v4440 = vsel %vm22, %v4186, 0
    %4442 = vmatprep.subr.mxu0 0.0
    %4443 = vmatpush1.msra.mxu0 0.0
    %4444 = vmatprep.subr.mxu0 0.0
    %4445 = vmatpush1.msra.mxu0 0.0
    %4446 = vmatprep.subr.mxu0 0.0
    %4447 = vmatpush1.msra.mxu0 0.0
    %4448 = vmatprep.subr.mxu0 0.0
    %4449 = vmatpush1.msra.mxu0 0.0
    %4450 = vmatprep.subr.mxu0 0.0
    %4451 = vmatpush1.msra.mxu0 0.0
    %4452 = vmatprep.subr.mxu0 0.0
    %4453 = vmatpush1.msra.mxu0 0.0
    %4454 = vmatprep.subr.mxu0 0.0
    %4455 = vmatpush1.msra.mxu0 0.0
    %4456 = vmatprep.subr.mxu0 0.0
    %4457 = vmatpush1.msra.mxu0 0.0
    %4458 = vmatprep.subr.mxu0 0.0
    %4459 = vmatpush1.msra.mxu0 0.0
    %4460 = vmatprep.subr.mxu0 0.0
    %4461 = vmatpush1.msra.mxu0 0.0
    %4462 = vmatprep.subr.mxu0 0.0
    %4463 = vmatpush1.msra.mxu0 0.0
    %4464 = vmatprep.subr.mxu0 0.0
    %4465 = vmatpush1.msra.mxu0 0.0
    %4466 = vmatprep.subr.mxu0 0.0
    %4467 = vmatpush1.msra.mxu0 0.0
    %4468 = vmatprep.subr.mxu0 0.0
    %4469 = vmatpush1.msra.mxu0 0.0
    %4470 = vmatprep.subr.mxu0 0.0
    %4471 = vmatpush1.msra.mxu0 0.0
    %4472 = vmatprep.subr.mxu0 0.0
    %4473 = vmatpush1.msra.mxu0 %v4352
    %4474 = vmatprep.subr.mxu0 0.0
    %4475 = vmatpush2.msra.mxu0 0.0
    %4476 = vmatprep.subr.mxu0 0.0
    %4477 = vmatpush2.msra.mxu0 0.0
    %4478 = vmatprep.subr.mxu0 0.0
    %4479 = vmatpush2.msra.mxu0 0.0
    %4480 = vmatprep.subr.mxu0 0.0
    %4481 = vmatpush2.msra.mxu0 0.0
    %4482 = vmatprep.subr.mxu0 0.0
    %4483 = vmatpush2.msra.mxu0 0.0
    %4484 = vmatprep.subr.mxu0 0.0
    %4485 = vmatpush2.msra.mxu0 0.0
    %4486 = vmatprep.subr.mxu0 0.0
    %4487 = vmatpush2.msra.mxu0 0.0
    %4488 = vmatprep.subr.mxu0 0.0
    %4489 = vmatpush2.msra.mxu0 0.0
    %4490 = vmatprep.subr.mxu0 0.0
    %4491 = vmatpush2.msra.mxu0 0.0
    %4492 = vmatprep.subr.mxu0 0.0
    %4493 = vmatpush2.msra.mxu0 0.0
    %4494 = vmatprep.subr.mxu0 0.0
    %4495 = vmatpush2.msra.mxu0 0.0
    %4496 = vmatprep.subr.mxu0 0.0
    %4497 = vmatpush2.msra.mxu0 0.0
    %4498 = vmatprep.subr.mxu0 0.0
    %4499 = vmatpush2.msra.mxu0 0.0
    %4500 = vmatprep.subr.mxu0 0.0
    %4501 = vmatpush2.msra.mxu0 0.0
    %4502 = vmatprep.subr.mxu0 0.0
    %4503 = vmatpush2.msra.mxu0 0.0
    %4504 = vmatprep.subr.mxu0 0.0
    %4505 = vmatpush2.msra.mxu0 0.0
    %4506 = vmatprep.mubr.f32.mxu0 0.0
    %4507 = vmatmul.mubr.f32.gmra.mxu0 %v4437
    %v4508 = vpop.f32.mrf.mxu0
    %v4509 = vadd.f32 0.0, %v4508
    %v4510 = vpop.f32.mrf.mxu0
    %4511 = vmatprep.mubr.f32.mxu0 0.0
    %4512 = vmatmul.mubr.f32.gmra.mxu0 %v4440
    %v4513 = vpop.f32.mrf.mxu0
    %v4514 = vadd.f32 0.0, %v4513
    %v4515 = vpop.f32.mrf.mxu0
    %4516 = vdwg.mxu0
    %v4518 = vsel %vm22, %v4262, 0
    %v4521 = vsel %vm22, %v4267, 0
    %4523 = vmatprep.subr.mxu0 0.0
    %4524 = vmatpush1.msra.mxu0 0.0
    %4525 = vmatprep.subr.mxu0 0.0
    %4526 = vmatpush1.msra.mxu0 0.0
    %4527 = vmatprep.subr.mxu0 0.0
    %4528 = vmatpush1.msra.mxu0 0.0
    %4529 = vmatprep.subr.mxu0 0.0
    %4530 = vmatpush1.msra.mxu0 0.0
    %4531 = vmatprep.subr.mxu0 0.0
    %4532 = vmatpush1.msra.mxu0 0.0
    %4533 = vmatprep.subr.mxu0 0.0
    %4534 = vmatpush1.msra.mxu0 0.0
    %4535 = vmatprep.subr.mxu0 0.0
    %4536 = vmatpush1.msra.mxu0 0.0
    %4537 = vmatprep.subr.mxu0 0.0
    %4538 = vmatpush1.msra.mxu0 0.0
    %4539 = vmatprep.subr.mxu0 0.0
    %4540 = vmatpush1.msra.mxu0 0.0
    %4541 = vmatprep.subr.mxu0 0.0
    %4542 = vmatpush1.msra.mxu0 0.0
    %4543 = vmatprep.subr.mxu0 0.0
    %4544 = vmatpush1.msra.mxu0 0.0
    %4545 = vmatprep.subr.mxu0 0.0
    %4546 = vmatpush1.msra.mxu0 0.0
    %4547 = vmatprep.subr.mxu0 0.0
    %4548 = vmatpush1.msra.mxu0 0.0
    %4549 = vmatprep.subr.mxu0 0.0
    %4550 = vmatpush1.msra.mxu0 0.0
    %4551 = vmatprep.subr.mxu0 0.0
    %4552 = vmatpush1.msra.mxu0 0.0
    %4553 = vmatprep.subr.mxu0 0.0
    %4554 = vmatpush1.msra.mxu0 %v4353
    %4555 = vmatprep.subr.mxu0 0.0
    %4556 = vmatpush2.msra.mxu0 0.0
    %4557 = vmatprep.subr.mxu0 0.0
    %4558 = vmatpush2.msra.mxu0 0.0
    %4559 = vmatprep.subr.mxu0 0.0
    %4560 = vmatpush2.msra.mxu0 0.0
    %4561 = vmatprep.subr.mxu0 0.0
    %4562 = vmatpush2.msra.mxu0 0.0
    %4563 = vmatprep.subr.mxu0 0.0
    %4564 = vmatpush2.msra.mxu0 0.0
    %4565 = vmatprep.subr.mxu0 0.0
    %4566 = vmatpush2.msra.mxu0 0.0
    %4567 = vmatprep.subr.mxu0 0.0
    %4568 = vmatpush2.msra.mxu0 0.0
    %4569 = vmatprep.subr.mxu0 0.0
    %4570 = vmatpush2.msra.mxu0 0.0
    %4571 = vmatprep.subr.mxu0 0.0
    %4572 = vmatpush2.msra.mxu0 0.0
    %4573 = vmatprep.subr.mxu0 0.0
    %4574 = vmatpush2.msra.mxu0 0.0
    %4575 = vmatprep.subr.mxu0 0.0
    %4576 = vmatpush2.msra.mxu0 0.0
    %4577 = vmatprep.subr.mxu0 0.0
    %4578 = vmatpush2.msra.mxu0 0.0
    %4579 = vmatprep.subr.mxu0 0.0
    %4580 = vmatpush2.msra.mxu0 0.0
    %4581 = vmatprep.subr.mxu0 0.0
    %4582 = vmatpush2.msra.mxu0 0.0
    %4583 = vmatprep.subr.mxu0 0.0
    %4584 = vmatpush2.msra.mxu0 0.0
    %4585 = vmatprep.subr.mxu0 0.0
    %4586 = vmatpush2.msra.mxu0 0.0
    %4587 = vmatprep.mubr.f32.mxu0 0.0
    %4588 = vmatmul.mubr.f32.gmra.mxu0 %v4518
    %v4589 = vpop.f32.mrf.mxu0
    %v4590 = vadd.f32 0.0, %v4589
    %v4591 = vpop.f32.mrf.mxu0
    %4592 = vmatprep.mubr.f32.mxu0 0.0
    %4593 = vmatmul.mubr.f32.gmra.mxu0 %v4521
    %v4594 = vpop.f32.mrf.mxu0
    %v4595 = vadd.f32 0.0, %v4594
    %v4596 = vpop.f32.mrf.mxu0
    %4597 = vdwg.mxu0
    %v4599 = vsel %vm22, %v4343, 0
    %v4602 = vsel %vm22, %v4348, 0
    %4604 = vmatprep.subr.mxu0 0.0
    %4605 = vmatpush1.msra.mxu0 0.0
    %4606 = vmatprep.subr.mxu0 0.0
    %4607 = vmatpush1.msra.mxu0 0.0
    %4608 = vmatprep.subr.mxu0 0.0
    %4609 = vmatpush1.msra.mxu0 0.0
    %4610 = vmatprep.subr.mxu0 0.0
    %4611 = vmatpush1.msra.mxu0 0.0
    %4612 = vmatprep.subr.mxu0 0.0
    %4613 = vmatpush1.msra.mxu0 0.0
    %4614 = vmatprep.subr.mxu0 0.0
    %4615 = vmatpush1.msra.mxu0 0.0
    %4616 = vmatprep.subr.mxu0 0.0
    %4617 = vmatpush1.msra.mxu0 0.0
    %4618 = vmatprep.subr.mxu0 0.0
    %4619 = vmatpush1.msra.mxu0 0.0
    %4620 = vmatprep.subr.mxu0 0.0
    %4621 = vmatpush1.msra.mxu0 0.0
    %4622 = vmatprep.subr.mxu0 0.0
    %4623 = vmatpush1.msra.mxu0 0.0
    %4624 = vmatprep.subr.mxu0 0.0
    %4625 = vmatpush1.msra.mxu0 0.0
    %4626 = vmatprep.subr.mxu0 0.0
    %4627 = vmatpush1.msra.mxu0 0.0
    %4628 = vmatprep.subr.mxu0 0.0
    %4629 = vmatpush1.msra.mxu0 0.0
    %4630 = vmatprep.subr.mxu0 0.0
    %4631 = vmatpush1.msra.mxu0 0.0
    %4632 = vmatprep.subr.mxu0 0.0
    %4633 = vmatpush1.msra.mxu0 0.0
    %4634 = vmatprep.subr.mxu0 0.0
    %4635 = vmatpush1.msra.mxu0 %v4354
    %4636 = vmatprep.subr.mxu0 0.0
    %4637 = vmatpush2.msra.mxu0 0.0
    %4638 = vmatprep.subr.mxu0 0.0
    %4639 = vmatpush2.msra.mxu0 0.0
    %4640 = vmatprep.subr.mxu0 0.0
    %4641 = vmatpush2.msra.mxu0 0.0
    %4642 = vmatprep.subr.mxu0 0.0
    %4643 = vmatpush2.msra.mxu0 0.0
    %4644 = vmatprep.subr.mxu0 0.0
    %4645 = vmatpush2.msra.mxu0 0.0
    %4646 = vmatprep.subr.mxu0 0.0
    %4647 = vmatpush2.msra.mxu0 0.0
    %4648 = vmatprep.subr.mxu0 0.0
    %4649 = vmatpush2.msra.mxu0 0.0
    %4650 = vmatprep.subr.mxu0 0.0
    %4651 = vmatpush2.msra.mxu0 0.0
    %4652 = vmatprep.subr.mxu0 0.0
    %4653 = vmatpush2.msra.mxu0 0.0
    %4654 = vmatprep.subr.mxu0 0.0
    %4655 = vmatpush2.msra.mxu0 0.0
    %4656 = vmatprep.subr.mxu0 0.0
    %4657 = vmatpush2.msra.mxu0 0.0
    %4658 = vmatprep.subr.mxu0 0.0
    %4659 = vmatpush2.msra.mxu0 0.0
    %4660 = vmatprep.subr.mxu0 0.0
    %4661 = vmatpush2.msra.mxu0 0.0
    %4662 = vmatprep.subr.mxu0 0.0
    %4663 = vmatpush2.msra.mxu0 0.0
    %4664 = vmatprep.subr.mxu0 0.0
    %4665 = vmatpush2.msra.mxu0 0.0
    %4666 = vmatprep.subr.mxu0 0.0
    %4667 = vmatpush2.msra.mxu0 0.0
    %4668 = vmatprep.mubr.f32.mxu0 0.0
    %4669 = vmatmul.mubr.f32.gmra.mxu0 %v4599
    %v4670 = vpop.f32.mrf.mxu0
    %v4671 = vadd.f32 0.0, %v4670
    %v4672 = vpop.f32.mrf.mxu0
    %4673 = vmatprep.mubr.f32.mxu0 0.0
    %4674 = vmatmul.mubr.f32.gmra.mxu0 %v4602
    %v4675 = vpop.f32.mrf.mxu0
    %v4676 = vadd.f32 0.0, %v4675
    %v4677 = vpop.f32.mrf.mxu0
    %4678 = vdwg.mxu0
    %v4679 = vsel %vm256, %v4428, 0.0
    %v4680 = vsel %vm256, %v4509, 0.0
    %v4681 = vadd.f32 %v4679, %v4680
    %v4682 = vsel %vm256, %v4590, 0.0
    %v4683 = vadd.f32 %v4681, %v4682
    %v4684 = vsel %vm256, %v4671, 0.0
    %v4685 = vadd.f32 %v4683, %v4684
    %v4686 = vsel %vm256, %v4433, 0.0
    %v4687 = vsel %vm256, %v4514, 0.0
    %v4688 = vadd.f32 %v4686, %v4687
    %v4689 = vsel %vm256, %v4595, 0.0
    %v4690 = vadd.f32 %v4688, %v4689
    %v4691 = vsel %vm256, %v4676, 0.0
    %v4692 = vadd.f32 %v4690, %v4691
    %v4693 = vld [vmem:[%s2 + $0x350] sm:$0x1]
    %v4694 = vlaneseq
    %v4695 = vshrl.u32 %v4694, 7
    %v4696 = vsub.s32 0, %v4695
    %v4697 = vrot.slane %v4693, %v4696
    %v4698 = vadd.f32 %v4685, %v4697
    %v4699 = vadd.f32 %v4692, %v4697
    %v4700 = vadd.f32 %v2595, %v4698
    %v4701 = vadd.f32 %v2596, %v4699
    %v4702 = vld [vmem:[%s2 + $0x358] sm:$0x1]
    %v4703 = vld [vmem:[%s2 + $0x360] sm:$0x1]
    %v4704 = vsel %vm256, %v4700, 0.0
    %4705 = vadd.xlane.f32.xlu0 %v4704
    %v4706 = vpop.xlane.xlu0 %4705
    %v4707 = vsel %vm256, %v4701, 0.0
    %4708 = vadd.xlane.f32.xlu0 %v4707
    %v4709 = vpop.xlane.xlu0 %4708
    %v4710 = vmul.f32 %v4706, %v2335
    %v4711 = vmul.f32 %v4709, %v2335
    %v4712 = vsub.f32 %v4700, %v4710
    %v4713 = vsub.f32 %v4701, %v4711
    %v4714 = vmul.f32 %v4712, %v4712
    %v4715 = vmul.f32 %v4713, %v4713
    %v4716 = vsel %vm256, %v4714, 0.0
    %4717 = vadd.xlane.f32.xlu0 %v4716
    %v4718 = vpop.xlane.xlu0 %4717
    %v4719 = vsel %vm256, %v4715, 0.0
    %4720 = vadd.xlane.f32.xlu0 %v4719
    %v4721 = vpop.xlane.xlu0 %4720
    %v4722 = vmul.f32 %v4718, %v2335
    %v4723 = vmul.f32 %v4721, %v2335
    %v4724 = vadd.f32 %v4722, 1e-05
    %v4725 = vadd.f32 %v4723, 1e-05
    %v4726 = vrsqrt.pop %v4724
    %v4727 = vrsqrt.pop %v4725
    %v4728 = vmul.f32 %v4712, %v4726
    %v4729 = vmul.f32 %v4713, %v4727
    %v4730 = vlaneseq
    %v4731 = vshrl.u32 %v4730, 7
    %v4732 = vsub.s32 0, %v4731
    %v4733 = vrot.slane %v4702, %v4732
    %v4734 = vmul.f32 %v4728, %v4733
    %v4735 = vmul.f32 %v4729, %v4733
    %v4736 = vlaneseq
    %v4737 = vshrl.u32 %v4736, 7
    %v4738 = vsub.s32 0, %v4737
    %v4739 = vrot.slane %v4703, %v4738
    %v4740 = vadd.f32 %v4734, %v4739
    %v4741 = vadd.f32 %v4735, %v4739
    %v4742 = vld [vmem:[%s2 + $0x368] sm:$0xff]
    %v4743 = vld [vmem:[%s2 + $0x370] sm:$0xff]
    %v4744 = vld [vmem:[%s2 + $0x378] sm:$0xff]
    %v4745 = vld [vmem:[%s2 + $0x380] sm:$0xff]
    %v4746 = vld [vmem:[%s2 + $0x388] sm:$0x1]
    %v4747 = vlaneseq
    %v4748 = vshrl.u32 %v4747, 7
    %v4749 = vsub.s32 0, %v4748
    %v4750 = vrot.slane %v4746, %v4749
    %v4752 = vsel %vm256, %v4740, 0
    %v4755 = vsel %vm256, %v4741, 0
    %4757 = vmatprep.subr.mxu0 0.0
    %4758 = vmatpush1.msra.mxu0 0.0
    %4759 = vmatprep.subr.mxu0 0.0
    %4760 = vmatpush1.msra.mxu0 0.0
    %4761 = vmatprep.subr.mxu0 0.0
    %4762 = vmatpush1.msra.mxu0 0.0
    %4763 = vmatprep.subr.mxu0 0.0
    %4764 = vmatpush1.msra.mxu0 0.0
    %4765 = vmatprep.subr.mxu0 0.0
    %4766 = vmatpush1.msra.mxu0 0.0
    %4767 = vmatprep.subr.mxu0 0.0
    %4768 = vmatpush1.msra.mxu0 0.0
    %4769 = vmatprep.subr.mxu0 0.0
    %4770 = vmatpush1.msra.mxu0 0.0
    %4771 = vmatprep.subr.mxu0 0.0
    %4772 = vmatpush1.msra.mxu0 0.0
    %4773 = vmatprep.subr.mxu0 0.0
    %4774 = vmatpush1.msra.mxu0 0.0
    %4775 = vmatprep.subr.mxu0 0.0
    %4776 = vmatpush1.msra.mxu0 0.0
    %4777 = vmatprep.subr.mxu0 0.0
    %4778 = vmatpush1.msra.mxu0 0.0
    %4779 = vmatprep.subr.mxu0 0.0
    %4780 = vmatpush1.msra.mxu0 0.0
    %4781 = vmatprep.subr.mxu0 0.0
    %4782 = vmatpush1.msra.mxu0 %v4745
    %4783 = vmatprep.subr.mxu0 0.0
    %4784 = vmatpush1.msra.mxu0 %v4744
    %4785 = vmatprep.subr.mxu0 0.0
    %4786 = vmatpush1.msra.mxu0 %v4743
    %4787 = vmatprep.subr.mxu0 0.0
    %4788 = vmatpush1.msra.mxu0 %v4742
    %4789 = vmatprep.subr.mxu0 0.0
    %4790 = vmatpush2.msra.mxu0 0.0
    %4791 = vmatprep.subr.mxu0 0.0
    %4792 = vmatpush2.msra.mxu0 0.0
    %4793 = vmatprep.subr.mxu0 0.0
    %4794 = vmatpush2.msra.mxu0 0.0
    %4795 = vmatprep.subr.mxu0 0.0
    %4796 = vmatpush2.msra.mxu0 0.0
    %4797 = vmatprep.subr.mxu0 0.0
    %4798 = vmatpush2.msra.mxu0 0.0
    %4799 = vmatprep.subr.mxu0 0.0
    %4800 = vmatpush2.msra.mxu0 0.0
    %4801 = vmatprep.subr.mxu0 0.0
    %4802 = vmatpush2.msra.mxu0 0.0
    %4803 = vmatprep.subr.mxu0 0.0
    %4804 = vmatpush2.msra.mxu0 0.0
    %4805 = vmatprep.subr.mxu0 0.0
    %4806 = vmatpush2.msra.mxu0 0.0
    %4807 = vmatprep.subr.mxu0 0.0
    %4808 = vmatpush2.msra.mxu0 0.0
    %4809 = vmatprep.subr.mxu0 0.0
    %4810 = vmatpush2.msra.mxu0 0.0
    %4811 = vmatprep.subr.mxu0 0.0
    %4812 = vmatpush2.msra.mxu0 0.0
    %4813 = vmatprep.subr.mxu0 0.0
    %4814 = vmatpush2.msra.mxu0 0.0
    %4815 = vmatprep.subr.mxu0 0.0
    %4816 = vmatpush2.msra.mxu0 0.0
    %4817 = vmatprep.subr.mxu0 0.0
    %4818 = vmatpush2.msra.mxu0 0.0
    %4819 = vmatprep.subr.mxu0 0.0
    %4820 = vmatpush2.msra.mxu0 0.0
    %4821 = vmatprep.mubr.f32.mxu0 0.0
    %4822 = vmatmul.mubr.f32.gmra.mxu0 %v4752
    %v4823 = vpop.f32.mrf.mxu0
    %v4824 = vadd.f32 %v4750, %v4823
    %v4825 = vpop.f32.mrf.mxu0
    %4826 = vmatprep.mubr.f32.mxu0 0.0
    %4827 = vmatmul.mubr.f32.gmra.mxu0 %v4755
    %v4828 = vpop.f32.mrf.mxu0
    %v4829 = vadd.f32 %v4750, %v4828
    %v4830 = vpop.f32.mrf.mxu0
    %4831 = vdwg.mxu0
    %v4832 = vmax.f32 %v4824, 0.0
    %v4833 = vmax.f32 %v4829, 0.0
    %v4834 = vld [vmem:[%s2 + $0x390] sm:$0xff]
    %v4835 = vld [vmem:[%s2 + $0x398] sm:$0xff]
    %v4836 = vld [vmem:[%s2 + $0x3a0] sm:$0xff]
    %v4837 = vld [vmem:[%s2 + $0x3a8] sm:$0xff]
    %v4838 = vld [vmem:[%s2 + $0x3b0] sm:$0xff]
    %v4839 = vld [vmem:[%s2 + $0x3b8] sm:$0xff]
    %v4840 = vld [vmem:[%s2 + $0x3c0] sm:$0xff]
    %v4841 = vld [vmem:[%s2 + $0x3c8] sm:$0xff]
    %v4842 = vld [vmem:[%s2 + $0x3d0] sm:$0x1]
    %v4843 = vlaneseq
    %v4844 = vshrl.u32 %v4843, 7
    %v4845 = vsub.s32 0, %v4844
    %v4846 = vrot.slane %v4842, %v4845
    %v4848 = vsel %vm2473, %v4832, 0
    %v4851 = vsel %vm2473, %v4833, 0
    %4853 = vmatprep.subr.mxu0 0.0
    %4854 = vmatpush1.msra.mxu0 0.0
    %4855 = vmatprep.subr.mxu0 0.0
    %4856 = vmatpush1.msra.mxu0 0.0
    %4857 = vmatprep.subr.mxu0 0.0
    %4858 = vmatpush1.msra.mxu0 0.0
    %4859 = vmatprep.subr.mxu0 0.0
    %4860 = vmatpush1.msra.mxu0 0.0
    %4861 = vmatprep.subr.mxu0 0.0
    %4862 = vmatpush1.msra.mxu0 0.0
    %4863 = vmatprep.subr.mxu0 0.0
    %4864 = vmatpush1.msra.mxu0 0.0
    %4865 = vmatprep.subr.mxu0 0.0
    %4866 = vmatpush1.msra.mxu0 0.0
    %4867 = vmatprep.subr.mxu0 0.0
    %4868 = vmatpush1.msra.mxu0 0.0
    %4869 = vmatprep.subr.mxu0 0.0
    %4870 = vmatpush1.msra.mxu0 %v4841
    %4871 = vmatprep.subr.mxu0 0.0
    %4872 = vmatpush1.msra.mxu0 %v4840
    %4873 = vmatprep.subr.mxu0 0.0
    %4874 = vmatpush1.msra.mxu0 %v4839
    %4875 = vmatprep.subr.mxu0 0.0
    %4876 = vmatpush1.msra.mxu0 %v4838
    %4877 = vmatprep.subr.mxu0 0.0
    %4878 = vmatpush1.msra.mxu0 %v4837
    %4879 = vmatprep.subr.mxu0 0.0
    %4880 = vmatpush1.msra.mxu0 %v4836
    %4881 = vmatprep.subr.mxu0 0.0
    %4882 = vmatpush1.msra.mxu0 %v4835
    %4883 = vmatprep.subr.mxu0 0.0
    %4884 = vmatpush1.msra.mxu0 %v4834
    %4885 = vmatprep.subr.mxu0 0.0
    %4886 = vmatpush2.msra.mxu0 0.0
    %4887 = vmatprep.subr.mxu0 0.0
    %4888 = vmatpush2.msra.mxu0 0.0
    %4889 = vmatprep.subr.mxu0 0.0
    %4890 = vmatpush2.msra.mxu0 0.0
    %4891 = vmatprep.subr.mxu0 0.0
    %4892 = vmatpush2.msra.mxu0 0.0
    %4893 = vmatprep.subr.mxu0 0.0
    %4894 = vmatpush2.msra.mxu0 0.0
    %4895 = vmatprep.subr.mxu0 0.0
    %4896 = vmatpush2.msra.mxu0 0.0
    %4897 = vmatprep.subr.mxu0 0.0
    %4898 = vmatpush2.msra.mxu0 0.0
    %4899 = vmatprep.subr.mxu0 0.0
    %4900 = vmatpush2.msra.mxu0 0.0
    %4901 = vmatprep.subr.mxu0 0.0
    %4902 = vmatpush2.msra.mxu0 0.0
    %4903 = vmatprep.subr.mxu0 0.0
    %4904 = vmatpush2.msra.mxu0 0.0
    %4905 = vmatprep.subr.mxu0 0.0
    %4906 = vmatpush2.msra.mxu0 0.0
    %4907 = vmatprep.subr.mxu0 0.0
    %4908 = vmatpush2.msra.mxu0 0.0
    %4909 = vmatprep.subr.mxu0 0.0
    %4910 = vmatpush2.msra.mxu0 0.0
    %4911 = vmatprep.subr.mxu0 0.0
    %4912 = vmatpush2.msra.mxu0 0.0
    %4913 = vmatprep.subr.mxu0 0.0
    %4914 = vmatpush2.msra.mxu0 0.0
    %4915 = vmatprep.subr.mxu0 0.0
    %4916 = vmatpush2.msra.mxu0 0.0
    %4917 = vmatprep.mubr.f32.mxu0 0.0
    %4918 = vmatmul.mubr.f32.gmra.mxu0 %v4848
    %v4919 = vpop.f32.mrf.mxu0
    %v4920 = vadd.f32 %v4846, %v4919
    %v4921 = vpop.f32.mrf.mxu0
    %4922 = vmatprep.mubr.f32.mxu0 0.0
    %4923 = vmatmul.mubr.f32.gmra.mxu0 %v4851
    %v4924 = vpop.f32.mrf.mxu0
    %v4925 = vadd.f32 %v4846, %v4924
    %v4926 = vpop.f32.mrf.mxu0
    %4927 = vdwg.mxu0
    %v4928 = vadd.f32 %v4740, %v4920
    %v4929 = vadd.f32 %v4741, %v4925
    %v4930 = vld [vmem:[%s2 + $0x3d8] sm:$0x1]
    %v4931 = vld [vmem:[%s2 + $0x3e0] sm:$0x1]
    %v4932 = vsel %vm256, %v4928, 0.0
    %4933 = vadd.xlane.f32.xlu0 %v4932
    %v4934 = vpop.xlane.xlu0 %4933
    %v4935 = vsel %vm256, %v4929, 0.0
    %4936 = vadd.xlane.f32.xlu0 %v4935
    %v4937 = vpop.xlane.xlu0 %4936
    %v4938 = vmul.f32 %v4934, %v2335
    %v4939 = vmul.f32 %v4937, %v2335
    %v4940 = vsub.f32 %v4928, %v4938
    %v4941 = vsub.f32 %v4929, %v4939
    %v4942 = vmul.f32 %v4940, %v4940
    %v4943 = vmul.f32 %v4941, %v4941
    %v4944 = vsel %vm256, %v4942, 0.0
    %4945 = vadd.xlane.f32.xlu0 %v4944
    %v4946 = vpop.xlane.xlu0 %4945
    %v4947 = vsel %vm256, %v4943, 0.0
    %4948 = vadd.xlane.f32.xlu0 %v4947
    %v4949 = vpop.xlane.xlu0 %4948
    %v4950 = vmul.f32 %v4946, %v2335
    %v4951 = vmul.f32 %v4949, %v2335
    %v4952 = vadd.f32 %v4950, 1e-05
    %v4953 = vadd.f32 %v4951, 1e-05
    %v4954 = vrsqrt.pop %v4952
    %v4955 = vrsqrt.pop %v4953
    %v4956 = vmul.f32 %v4940, %v4954
    %v4957 = vmul.f32 %v4941, %v4955
    %v4958 = vlaneseq
    %v4959 = vshrl.u32 %v4958, 7
    %v4960 = vsub.s32 0, %v4959
    %v4961 = vrot.slane %v4930, %v4960
    %v4962 = vmul.f32 %v4956, %v4961
    %v4963 = vmul.f32 %v4957, %v4961
    %v4964 = vlaneseq
    %v4965 = vshrl.u32 %v4964, 7
    %v4966 = vsub.s32 0, %v4965
    %v4967 = vrot.slane %v4931, %v4966
    %v4968 = vadd.f32 %v4962, %v4967
    %v4969 = vadd.f32 %v4963, %v4967
    %4970 = vst.msk [vmem:[#allocation2] sm:$0xff] %vm256, %v4968
    %4971 = vst.msk [vmem:[#allocation2 + $0x8] sm:$0xff] %vm256, %v4969
    // Predicated region
    $region14: #{transformer_encoder.1} parent=1 // pred_check
      _
    $region15: #{transformer_encoder.1} parent=1 // pred_check_branch
      %4973 = sbr.rel (0) target = $region17
    $region16: #{transformer_encoder.1} parent=1 // pred_region
      %s4975 = ssub.s32 256, 256
      %4976 = vsyncadd [#allocation3], %s4975
      %s4977 = sshll.u32 [#allocation2], 4
      %s4978 = int_to_ptr.vmem [resolvable:$true] %s4977
      %4983 = dma.vmem_to_hbm [thread:$0]  %s4978, 256, %s3, [#allocation3], 128, 128, 8
    $region17: #{transformer_encoder.1} parent=1 // pred_fallthru
      _
    // Predicated region
    $region18: #{transformer_encoder.1} parent=1 // pred_check
      _
    $region19: #{transformer_encoder.1} parent=1 // pred_check_branch
      %4985 = sbr.rel (0) target = $region21
    $region20: #{transformer_encoder.1} parent=1 // pred_region
      %4986 = dma.done [#allocation3], 256
    $region21: #{transformer_encoder.1} parent=1 // pred_fallthru
      _
    %4987 = vsyncpa [#allocation3], 1

</llo_original>
